<compile_context>
chip_gen: v6e
topology: v6e:2x2x1
jax: 0.10.0
libtpu: 0.0.40
codegen_flags: <defaults>
</compile_context>

<pallas_src>
import functools

import jax
import jax.numpy as jnp
from jax.experimental import pallas as pl
from jax.experimental.pallas import tpu as pltpu

LN_EPS = 1e-5


def _gelu_exact(x):
    # torch.nn.GELU default (approximate='none'): 0.5*x*(1+erf(x/sqrt(2)))
    return 0.5 * x * (1.0 + jax.lax.erf(x * (2.0 ** -0.5)))


def _layernorm(z, w, b):
    mu = jnp.mean(z, axis=-1, keepdims=True)
    var = jnp.mean((z - mu) ** 2, axis=-1, keepdims=True)
    return (z - mu) * jax.lax.rsqrt(var + LN_EPS) * w + b


# --------------------------- embedding kernel ---------------------------
# Fuses: patch-embedding matmul (== conv3d with kernel=stride=patch),
# EHR projection, token concat, and positional-embedding add.

def _embed_kernel(patches_ref, clin_ref, wp_ref, bp_ref, we_ref, be_ref,
                  pos_ref, o_ref):
    # patches_ref: (1, P, K)   clin_ref: (1, 1, NC)   o_ref: (1, S, H)
    pe = jnp.dot(patches_ref[0], wp_ref[...],
                 preferred_element_type=jnp.float32) + bp_ref[...]   # (P, H)
    ehr = jnp.dot(clin_ref[0], we_ref[...],
                  preferred_element_type=jnp.float32) + be_ref[...]  # (1, H)
    # Direct sub-slice stores instead of a sublane-axis concatenate.
    o_ref[0, 0:1, :] = ehr + pos_ref[0, 0:1, :]
    o_ref[0, 1:, :] = pe + pos_ref[0, 1:, :]


def embed(patches, clin, w_patch, b_patch, w_ehr, b_ehr, pos_emb):
    B, P, K = patches.shape
    H = w_patch.shape[1]
    S = pos_emb.shape[1]
    NC = clin.shape[-1]
    clin3 = clin.reshape(B, 1, NC)
    return pl.pallas_call(
        _embed_kernel,
        out_shape=jax.ShapeDtypeStruct((B, S, H), jnp.float32),
        grid=(B,),
        in_specs=[
            pl.BlockSpec((1, P, K), lambda b: (b, 0, 0)),
            pl.BlockSpec((1, 1, NC), lambda b: (b, 0, 0)),
            pl.BlockSpec((K, H), lambda b: (0, 0)),
            pl.BlockSpec((1, H), lambda b: (0, 0)),
            pl.BlockSpec((NC, H), lambda b: (0, 0)),
            pl.BlockSpec((1, H), lambda b: (0, 0)),
            pl.BlockSpec((1, S, H), lambda b: (0, 0, 0)),
        ],
        out_specs=pl.BlockSpec((1, S, H), lambda b: (b, 0, 0)),
        compiler_params=pltpu.CompilerParams(
            dimension_semantics=("parallel",)),
    )(patches, clin3, w_patch, b_patch, w_ehr, b_ehr, pos_emb)


# ----------------------- fused transformer stack -----------------------
# grid = (L, B): layer outer (weights fetched once per layer), batch inner.
# Running activations carried in a (B, S, H) VMEM scratch across layers.

def _vit_layers_kernel(num_heads,
                       x_ref, ln1w_ref, ln1b_ref, wqkv_ref, wo_ref, bo_ref,
                       ln2w_ref, ln2b_ref, w1_ref, b1_ref, w2_ref, b2_ref,
                       lnfw_ref, lnfb_ref,
                       out_ref, hid_ref, xacc_ref, ctx_ref):
    layer = pl.program_id(0)
    b = pl.program_id(1)
    n_layers = pl.num_programs(0)

    @pl.when(layer == 0)
    def _():
        xacc_ref[b] = x_ref[b]            # load embedded tokens for this batch

    x = xacc_ref[b]                       # (S, H) float32
    S, H = x.shape
    NH = num_heads
    HD = H // NH
    scale = HD ** -0.5

    # --- multi-head self-attention (pre-norm, MONAI SABlock, qkv_bias=False)
    h1 = _layernorm(x, ln1w_ref[0], ln1b_ref[0])                     # (S, H)
    # Single lane-dense QKV matmul: bf16 weights x bf16 acts -> f32 acc.
    # Columns of wqkv are (qkv, head, head_dim) fastest-last (MONAI layout),
    # so q/k/v and per-head sub-blocks are plain static lane slices.
    qkv = jnp.dot(h1.astype(jnp.bfloat16), wqkv_ref[0],
                  preferred_element_type=jnp.float32)                # (S, 3H)
    q = qkv[:, 0:H]
    k = qkv[:, H:2 * H]
    v = qkv[:, 2 * H:3 * H]

    for h in range(NH):                    # static unrolled head loop
        lo = h * HD
        q_h = q[:, lo:lo + HD]
        k_h = k[:, lo:lo + HD]
        v_h = v[:, lo:lo + HD]
        # q_h @ k_h^T via NT dot_general (no explicit transpose copy)
        s_h = jax.lax.dot_general(q_h, k_h, (((1,), (1,)), ((), ())),
                                  preferred_element_type=jnp.float32) * scale
        m = jnp.max(s_h, axis=-1, keepdims=True)
        e = jnp.exp(s_h - m)                                           # EUP
        p = e * pl.reciprocal(jnp.sum(e, axis=-1, keepdims=True),
                              approx=False)                            # exact
        # assemble head contexts into a lane-dense (S, H) buffer
        ctx_ref[:, lo:lo + HD] = jnp.dot(p, v_h,
                                         preferred_element_type=jnp.float32)

    # Fused head-concat + output projection: one matmul with K = H.
    attn = jnp.dot(ctx_ref[...].astype(jnp.bfloat16), wo_ref[0],
                   preferred_element_type=jnp.float32)               # (S, H)
    x = x + attn + bo_ref[0]

    # --- MLP (pre-norm, exact-erf GELU) ---
    h2 = _layernorm(x, ln2w_ref[0], ln2b_ref[0])
    mlp = jnp.dot(h2.astype(jnp.bfloat16), w1_ref[0],
                  preferred_element_type=jnp.float32) + b1_ref[0]
    mlp = _gelu_exact(mlp)
    mlp = jnp.dot(mlp.astype(jnp.bfloat16), w2_ref[0],
                  preferred_element_type=jnp.float32) + b2_ref[0]
    x = x + mlp

    xacc_ref[b] = x
    hid_ref[0, 0] = x                      # per-layer hidden state

    @pl.when(layer == n_layers - 1)
    def _():                               # final LayerNorm folded in
        out_ref[b] = _layernorm(x, lnfw_ref[0], lnfb_ref[0])


# ------------------------------ model glue ------------------------------

def init_params(key, *, in_channels, patch_size, n_tokens, n_clin_var,
                hidden, mlp_dim, num_layers):
    patch_dim = in_channels * patch_size ** 3
    ks = jax.random.split(key, 4)
    lk = jax.random.split(ks[3], 4)

    def nrm(k, shape, std=0.02):
        return jax.random.normal(k, shape, jnp.float32) * std

    L, H, M = num_layers, hidden, mlp_dim
    return {
        # conv3d weight (hidden, C, p, p, p) stored flattened (C*p^3, hidden)
        # in (C, pd, ph, pw) order — must match the patch-extraction transpose.
        'w_patch': nrm(ks[0], (patch_dim, H)),
        'b_patch': jnp.zeros((1, H), jnp.float32),
        'w_ehr': nrm(ks[1], (n_clin_var, H)),
        'b_ehr': jnp.zeros((1, H), jnp.float32),
        'pos_emb': nrm(ks[2], (1, n_tokens, H)),
        'ln_f_w': jnp.ones((1, 1, H), jnp.float32),
        'ln_f_b': jnp.zeros((1, 1, H), jnp.float32),
        # per-layer weights, stacked along a leading layer axis
        'ln1_w': jnp.ones((L, 1, H), jnp.float32),
        'ln1_b': jnp.zeros((L, 1, H), jnp.float32),
        'w_qkv': nrm(lk[0], (L, H, 3 * H)),   # cols=(qkv, head, hd); qkv_bias=False
        'w_o': nrm(lk[1], (L, H, H)),         # rows = (head, hd) = concat-head order
        'b_o': jnp.zeros((L, 1, H), jnp.float32),
        'ln2_w': jnp.ones((L, 1, H), jnp.float32),
        'ln2_b': jnp.zeros((L, 1, H), jnp.float32),
        'w1': nrm(lk[2], (L, H, M)),
        'b1': jnp.zeros((L, 1, M), jnp.float32),
        'w2': nrm(lk[3], (L, M, H)),
        'b2': jnp.zeros((L, 1, H), jnp.float32),
    }


def vit_forward(params, img, clin_var, *, patch_size, num_heads):
    """img: (B, C, D, H, W) NCDHW; clin_var: (B, n_clin_var).
    Returns (normed_x, [hidden_state per layer]) — classification=False,
    dropout_rate=0.0 (dropout is identity)."""
    B, C, D, Hh, W = img.shape
    p = patch_size
    nd, nh, nw = D // p, Hh // p, W // p
    n_patches = nd * nh * nw
    hidden = params['w_patch'].shape[1]
    L = params['w_qkv'].shape[0]
    S = n_patches + 1
    mlp_dim = params['w1'].shape[2]

    # patch extraction == conv3d(kernel=stride=patch), flattened (C,pd,ph,pw)
    xp = img.reshape(B, C, nd, p, nh, p, nw, p)
    xp = xp.transpose(0, 2, 4, 6, 1, 3, 5, 7)
    xp = xp.reshape(B, n_patches, C * p * p * p)

    x = embed(xp, clin_var, params['w_patch'], params['b_patch'],
              params['w_ehr'], params['b_ehr'], params['pos_emb'])

    # bf16 streaming of the big per-layer matmul weights (halves weight DMA,
    # native MXU bf16 rate).  Accumulation stays f32; LN/softmax/GELU in f32.
    w_qkv = params['w_qkv'].astype(jnp.bfloat16)
    w_o = params['w_o'].astype(jnp.bfloat16)
    w1 = params['w1'].astype(jnp.bfloat16)
    w2 = params['w2'].astype(jnp.bfloat16)

    # Explicit VMEM budget: double-buffered bf16 layer weights + resident
    # activations (x block, xacc scratch, out block) + headroom; clamped to
    # [32 MiB, 64 MiB] so the same setting is safe on v5e/v6e (128 MiB) and
    # v7x (64 MiB).
    layer_w_bytes = 2 * (hidden * 3 * hidden + hidden * hidden
                         + 2 * hidden * mlp_dim)            # bf16 bytes/layer
    act_bytes = 4 * B * S * hidden                           # f32 (B,S,H)
    est = 2 * layer_w_bytes + 3 * act_bytes + 16 * S * hidden + (8 << 20)
    vmem_limit = int(min(max(est, 32 << 20), 64 << 20))

    kern = functools.partial(_vit_layers_kernel, num_heads)
    out, hidden_states = pl.pallas_call(
        kern,
        out_shape=(jax.ShapeDtypeStruct((B, S, hidden), jnp.float32),
                   jax.ShapeDtypeStruct((L, B, S, hidden), jnp.float32)),
        grid=(L, B),   # layer OUTER: each layer's weights are DMA'd once.
        in_specs=[
            pl.BlockSpec((B, S, hidden), lambda l, b: (0, 0, 0)),           # x (resident)
            pl.BlockSpec((1, 1, hidden), lambda l, b: (l, 0, 0)),           # ln1_w
            pl.BlockSpec((1, 1, hidden), lambda l, b: (l, 0, 0)),           # ln1_b
            pl.BlockSpec((1, hidden, 3 * hidden), lambda l, b: (l, 0, 0)),  # w_qkv
            pl.BlockSpec((1, hidden, hidden), lambda l, b: (l, 0, 0)),      # w_o
            pl.BlockSpec((1, 1, hidden), lambda l, b: (l, 0, 0)),           # b_o
            pl.BlockSpec((1, 1, hidden), lambda l, b: (l, 0, 0)),           # ln2_w
            pl.BlockSpec((1, 1, hidden), lambda l, b: (l, 0, 0)),           # ln2_b
            pl.BlockSpec((1, hidden, mlp_dim), lambda l, b: (l, 0, 0)),     # w1
            pl.BlockSpec((1, 1, mlp_dim), lambda l, b: (l, 0, 0)),          # b1
            pl.BlockSpec((1, mlp_dim, hidden), lambda l, b: (l, 0, 0)),     # w2
            pl.BlockSpec((1, 1, hidden), lambda l, b: (l, 0, 0)),           # b2
            pl.BlockSpec((1, 1, hidden), lambda l, b: (0, 0, 0)),           # ln_f_w
            pl.BlockSpec((1, 1, hidden), lambda l, b: (0, 0, 0)),           # ln_f_b
        ],
        out_specs=(
            # resident accumulator block -> single HBM writeback at the end
            pl.BlockSpec((B, S, hidden), lambda l, b: (0, 0, 0)),
            pl.BlockSpec((1, 1, S, hidden), lambda l, b: (l, b, 0, 0)),
        ),
        scratch_shapes=[pltpu.VMEM((B, S, hidden), jnp.float32),  # x carry
                        pltpu.VMEM((S, hidden), jnp.float32)],    # ctx concat
        compiler_params=pltpu.CompilerParams(
            dimension_semantics=("arbitrary", "arbitrary"),
            vmem_limit_bytes=vmem_limit),
    )(x, params['ln1_w'], params['ln1_b'], w_qkv, w_o, params['b_o'],
      params['ln2_w'], params['ln2_b'], w1, params['b1'],
      w2, params['b2'], params['ln_f_w'], params['ln_f_b'])

    return out, [hidden_states[l] for l in range(L)]


# --------------------------------- main ---------------------------------

if __name__ == "__main__":
    B, C, IMG, P = 2, 4, 16, 8          # 3D image 16^3, patch 8^3 -> 8 patches
    HIDDEN, MLP_DIM, NUM_LAYERS, NUM_HEADS = 32, 64, 2, 4
    N_CLIN_VAR = 27
    N_TOKENS = (IMG // P) ** 3 + 1      # 9 (clin token + 8 patch tokens)

    key = jax.random.PRNGKey(0)
    k_img, k_clin, k_par = jax.random.split(key, 3)
    img = jax.random.normal(k_img, (B, C, IMG, IMG, IMG), jnp.float32)
    clin = jax.random.normal(k_clin, (B, N_CLIN_VAR), jnp.float32)

    params = init_params(k_par, in_channels=C, patch_size=P,
                         n_tokens=N_TOKENS, n_clin_var=N_CLIN_VAR,
                         hidden=HIDDEN, mlp_dim=MLP_DIM, num_layers=NUM_LAYERS)

    fwd = jax.jit(functools.partial(vit_forward, patch_size=P,
                                    num_heads=NUM_HEADS))
    out, hidden_states = fwd(params, img, clin)
    out = jax.block_until_ready(out)
    for h in hidden_states:
        jax.block_until_ready(h)

    assert out.shape == (B, N_TOKENS, HIDDEN)
    assert len(hidden_states) == NUM_LAYERS
    assert all(h.shape == (B, N_TOKENS, HIDDEN) for h in hidden_states)
    print("KERNEL_OK")
</pallas_src>

<mosaic_0001>
module attributes {stable_mosaic.version = 11 : i64} {
  func.func @_embed_kernel(%arg0: i32, %arg1: memref<1x8x2048xf32, #tpu.memory_space<vmem>>, %arg2: memref<1x1x27xf32, #tpu.memory_space<vmem>>, %arg3: memref<2048x32xf32, #tpu.memory_space<vmem>>, %arg4: memref<1x32xf32, #tpu.memory_space<vmem>>, %arg5: memref<27x32xf32, #tpu.memory_space<vmem>>, %arg6: memref<1x32xf32, #tpu.memory_space<vmem>>, %arg7: memref<1x9x32xf32, #tpu.memory_space<vmem>>, %arg8: memref<1x9x32xf32, #tpu.memory_space<vmem>>) attributes {dimension_semantics = [#tpu.dimension_semantics<parallel>], iteration_bounds = array<i64: 2>, scalar_prefetch = 0 : i64, scratch_operands = 0 : i64, tpu.core_type = #tpu.core_type<tc>, window_params = [{transform_indices = @transform_0, window_bounds = array<i64: 1, 8, 2048>}, {transform_indices = @transform_1, window_bounds = array<i64: 1, 1, 27>}, {pipeline_mode = #tpu.pipeline_mode<synchronous>, transform_indices = @transform_2, window_bounds = array<i64: 2048, 32>}, {pipeline_mode = #tpu.pipeline_mode<synchronous>, transform_indices = @transform_3, window_bounds = array<i64: 1, 32>}, {pipeline_mode = #tpu.pipeline_mode<synchronous>, transform_indices = @transform_4, window_bounds = array<i64: 27, 32>}, {pipeline_mode = #tpu.pipeline_mode<synchronous>, transform_indices = @transform_5, window_bounds = array<i64: 1, 32>}, {pipeline_mode = #tpu.pipeline_mode<synchronous>, transform_indices = @transform_6, window_bounds = array<i64: 1, 9, 32>}, {transform_indices = @transform_7, window_bounds = array<i64: 1, 9, 32>}]} {
    %c0 = arith.constant 0 : index
    %c0_0 = arith.constant 0 : index
    %c0_1 = arith.constant 0 : index
    %0 = vector.load %arg1[%c0, %c0_0, %c0_1] : memref<1x8x2048xf32, #tpu.memory_space<vmem>>, vector<1x8x2048xf32>
    %1 = vector.shape_cast %0 : vector<1x8x2048xf32> to vector<8x2048xf32>
    %c0_2 = arith.constant 0 : index
    %c0_3 = arith.constant 0 : index
    %2 = vector.load %arg3[%c0_2, %c0_3] : memref<2048x32xf32, #tpu.memory_space<vmem>>, vector<2048x32xf32>
    %cst = arith.constant dense<0.000000e+00> : vector<8x32xf32>
    %3 = tpu.matmul %1, %2, %cst {dimension_numbers = #tpu.dot_dimension_numbers<[1], [0], [0], [1], [0, 0, 1, 1], [], []>} : vector<8x2048xf32>, vector<2048x32xf32>, vector<8x32xf32> -> vector<8x32xf32>
    %c0_4 = arith.constant 0 : index
    %c0_5 = arith.constant 0 : index
    %4 = vector.load %arg4[%c0_4, %c0_5] : memref<1x32xf32, #tpu.memory_space<vmem>>, vector<1x32xf32>
    %5 = vector.broadcast %4 : vector<1x32xf32> to vector<8x32xf32>
    %6 = arith.addf %3, %5 : vector<8x32xf32>
    %c0_6 = arith.constant 0 : index
    %c0_7 = arith.constant 0 : index
    %c0_8 = arith.constant 0 : index
    %7 = vector.load %arg2[%c0_6, %c0_7, %c0_8] : memref<1x1x27xf32, #tpu.memory_space<vmem>>, vector<1x1x27xf32>
    %8 = vector.shape_cast %7 : vector<1x1x27xf32> to vector<1x27xf32>
    %c0_9 = arith.constant 0 : index
    %c0_10 = arith.constant 0 : index
    %9 = vector.load %arg5[%c0_9, %c0_10] : memref<27x32xf32, #tpu.memory_space<vmem>>, vector<27x32xf32>
    %cst_11 = arith.constant dense<0.000000e+00> : vector<1x32xf32>
    %10 = tpu.matmul %8, %9, %cst_11 {dimension_numbers = #tpu.dot_dimension_numbers<[1], [0], [0], [1], [0, 0, 1, 1], [], []>} : vector<1x27xf32>, vector<27x32xf32>, vector<1x32xf32> -> vector<1x32xf32>
    %c0_12 = arith.constant 0 : index
    %c0_13 = arith.constant 0 : index
    %11 = vector.load %arg6[%c0_12, %c0_13] : memref<1x32xf32, #tpu.memory_space<vmem>>, vector<1x32xf32>
    %12 = arith.addf %10, %11 : vector<1x32xf32>
    %c0_14 = arith.constant 0 : index
    %c0_15 = arith.constant 0 : index
    %c0_16 = arith.constant 0 : index
    %13 = vector.load %arg7[%c0_14, %c0_15, %c0_16] : memref<1x9x32xf32, #tpu.memory_space<vmem>>, vector<1x1x32xf32>
    %14 = vector.shape_cast %13 : vector<1x1x32xf32> to vector<1x32xf32>
    %15 = arith.addf %12, %14 : vector<1x32xf32>
    %c0_17 = arith.constant 0 : index
    %c0_18 = arith.constant 0 : index
    %c0_19 = arith.constant 0 : index
    %16 = vector.load %arg8[%c0_17, %c0_18, %c0_19] : memref<1x9x32xf32, #tpu.memory_space<vmem>>, vector<1x1x32xf32>
    %17 = vector.shape_cast %16 : vector<1x1x32xf32> to vector<1x32xf32>
    %18 = vector.shape_cast %15 : vector<1x32xf32> to vector<1x1x32xf32>
    tpu.vector_store %arg8[%c0_17, %c0_18, %c0_19], %18 {strides = array<i32>} : memref<1x9x32xf32, #tpu.memory_space<vmem>>, vector<1x1x32xf32>,
    %c0_20 = arith.constant 0 : index
    %c1 = arith.constant 1 : index
    %c0_21 = arith.constant 0 : index
    %19 = vector.load %arg7[%c0_20, %c1, %c0_21] : memref<1x9x32xf32, #tpu.memory_space<vmem>>, vector<1x8x32xf32>
    %20 = vector.shape_cast %19 : vector<1x8x32xf32> to vector<8x32xf32>
    %21 = arith.addf %6, %20 : vector<8x32xf32>
    %c0_22 = arith.constant 0 : index
    %c1_23 = arith.constant 1 : index
    %c0_24 = arith.constant 0 : index
    %22 = vector.load %arg8[%c0_22, %c1_23, %c0_24] : memref<1x9x32xf32, #tpu.memory_space<vmem>>, vector<1x8x32xf32>
    %23 = vector.shape_cast %22 : vector<1x8x32xf32> to vector<8x32xf32>
    %24 = vector.shape_cast %21 : vector<8x32xf32> to vector<1x8x32xf32>
    tpu.vector_store %arg8[%c0_22, %c1_23, %c0_24], %24 {strides = array<i32>} : memref<1x9x32xf32, #tpu.memory_space<vmem>>, vector<1x8x32xf32>,
    return
  }
  func.func @transform_0(%arg0: i32) -> (i32, i32, i32) {
    %c0_i32 = arith.constant 0 : i32
    %c0_i32_0 = arith.constant 0 : i32
    %c0_i32_1 = arith.constant 0 : i32
    return %arg0, %c0_i32, %c0_i32_0 : i32, i32, i32
  }
  func.func @transform_1(%arg0: i32) -> (i32, i32, i32) {
    %c0_i32 = arith.constant 0 : i32
    %c0_i32_0 = arith.constant 0 : i32
    %c0_i32_1 = arith.constant 0 : i32
    return %arg0, %c0_i32, %c0_i32_0 : i32, i32, i32
  }
  func.func @transform_2(%arg0: i32) -> (i32, i32) {
    %c0_i32 = arith.constant 0 : i32
    %c0_i32_0 = arith.constant 0 : i32
    %c0_i32_1 = arith.constant 0 : i32
    return %c0_i32, %c0_i32_0 : i32, i32
  }
  func.func @transform_3(%arg0: i32) -> (i32, i32) {
    %c0_i32 = arith.constant 0 : i32
    %c0_i32_0 = arith.constant 0 : i32
    %c0_i32_1 = arith.constant 0 : i32
    return %c0_i32, %c0_i32_0 : i32, i32
  }
  func.func @transform_4(%arg0: i32) -> (i32, i32) {
    %c0_i32 = arith.constant 0 : i32
    %c0_i32_0 = arith.constant 0 : i32
    %c0_i32_1 = arith.constant 0 : i32
    return %c0_i32, %c0_i32_0 : i32, i32
  }
  func.func @transform_5(%arg0: i32) -> (i32, i32) {
    %c0_i32 = arith.constant 0 : i32
    %c0_i32_0 = arith.constant 0 : i32
    %c0_i32_1 = arith.constant 0 : i32
    return %c0_i32, %c0_i32_0 : i32, i32
  }
  func.func @transform_6(%arg0: i32) -> (i32, i32, i32) {
    %c0_i32 = arith.constant 0 : i32
    %c0_i32_0 = arith.constant 0 : i32
    %c0_i32_1 = arith.constant 0 : i32
    %c0_i32_2 = arith.constant 0 : i32
    return %c0_i32, %c0_i32_0, %c0_i32_1 : i32, i32, i32
  }
  func.func @transform_7(%arg0: i32) -> (i32, i32, i32) {
    %c0_i32 = arith.constant 0 : i32
    %c0_i32_0 = arith.constant 0 : i32
    %c0_i32_1 = arith.constant 0 : i32
    return %arg0, %c0_i32, %c0_i32_0 : i32, i32, i32
  }
}

module attributes {stable_mosaic.version = 11 : i64} {
  func.func @_vit_layers_kernel(%arg0: i32, %arg1: i32, %arg2: memref<2x9x32xf32, #tpu.memory_space<vmem>>, %arg3: memref<1x1x32xf32, #tpu.memory_space<vmem>>, %arg4: memref<1x1x32xf32, #tpu.memory_space<vmem>>, %arg5: memref<1x32x96xbf16, #tpu.memory_space<vmem>>, %arg6: memref<1x32x32xbf16, #tpu.memory_space<vmem>>, %arg7: memref<1x1x32xf32, #tpu.memory_space<vmem>>, %arg8: memref<1x1x32xf32, #tpu.memory_space<vmem>>, %arg9: memref<1x1x32xf32, #tpu.memory_space<vmem>>, %arg10: memref<1x32x64xbf16, #tpu.memory_space<vmem>>, %arg11: memref<1x1x64xf32, #tpu.memory_space<vmem>>, %arg12: memref<1x64x32xbf16, #tpu.memory_space<vmem>>, %arg13: memref<1x1x32xf32, #tpu.memory_space<vmem>>, %arg14: memref<1x1x32xf32, #tpu.memory_space<vmem>>, %arg15: memref<1x1x32xf32, #tpu.memory_space<vmem>>, %arg16: memref<2x9x32xf32, #tpu.memory_space<vmem>>, %arg17: memref<1x1x9x32xf32, #tpu.memory_space<vmem>>, %arg18: memref<2x9x32xf32, #tpu.memory_space<vmem>>, %arg19: memref<9x32xf32, #tpu.memory_space<vmem>>) attributes {dimension_semantics = [#tpu.dimension_semantics<arbitrary>, #tpu.dimension_semantics<arbitrary>], iteration_bounds = array<i64: 2, 2>, scalar_prefetch = 0 : i64, scratch_operands = 2 : i64, tpu.core_type = #tpu.core_type<tc>, window_params = [{pipeline_mode = #tpu.pipeline_mode<synchronous>, transform_indices = @transform_0, window_bounds = array<i64: 2, 9, 32>}, {transform_indices = @transform_1, window_bounds = array<i64: 1, 1, 32>}, {transform_indices = @transform_2, window_bounds = array<i64: 1, 1, 32>}, {transform_indices = @transform_3, window_bounds = array<i64: 1, 32, 96>}, {transform_indices = @transform_4, window_bounds = array<i64: 1, 32, 32>}, {transform_indices = @transform_5, window_bounds = array<i64: 1, 1, 32>}, {transform_indices = @transform_6, window_bounds = array<i64: 1, 1, 32>}, {transform_indices = @transform_7, window_bounds = array<i64: 1, 1, 32>}, {transform_indices = @transform_8, window_bounds = array<i64: 1, 32, 64>}, {transform_indices = @transform_9, window_bounds = array<i64: 1, 1, 64>}, {transform_indices = @transform_10, window_bounds = array<i64: 1, 64, 32>}, {transform_indices = @transform_11, window_bounds = array<i64: 1, 1, 32>}, {pipeline_mode = #tpu.pipeline_mode<synchronous>, transform_indices = @transform_12, window_bounds = array<i64: 1, 1, 32>}, {pipeline_mode = #tpu.pipeline_mode<synchronous>, transform_indices = @transform_13, window_bounds = array<i64: 1, 1, 32>}, {pipeline_mode = #tpu.pipeline_mode<synchronous>, transform_indices = @transform_14, window_bounds = array<i64: 2, 9, 32>}, {transform_indices = @transform_15, window_bounds = array<i64: 1, 1, 9, 32>}]} {
    %c0_i32 = arith.constant 0 : i32
    %0 = arith.cmpi eq, %arg0, %c0_i32 : i32
    %1 = arith.extui %0 : i1 to i32
    %c0_i32_0 = arith.constant 0 : i32
    %2 = arith.cmpi ne, %1, %c0_i32_0 : i32
    scf.if %2 {
      %182 = arith.index_cast %arg1 : i32 to index
      %c0_85 = arith.constant 0 : index
      %c0_86 = arith.constant 0 : index
      %183 = vector.load %arg2[%182, %c0_85, %c0_86] : memref<2x9x32xf32, #tpu.memory_space<vmem>>, vector<1x9x32xf32>
      %184 = vector.shape_cast %183 : vector<1x9x32xf32> to vector<9x32xf32>
      %185 = arith.index_cast %arg1 : i32 to index
      %c0_87 = arith.constant 0 : index
      %c0_88 = arith.constant 0 : index
      %186 = vector.load %arg18[%185, %c0_87, %c0_88] : memref<2x9x32xf32, #tpu.memory_space<vmem>>, vector<1x9x32xf32>
      %187 = vector.shape_cast %186 : vector<1x9x32xf32> to vector<9x32xf32>
      %188 = vector.shape_cast %184 : vector<9x32xf32> to vector<1x9x32xf32>
      tpu.vector_store %arg18[%185, %c0_87, %c0_88], %188 {strides = array<i32>} : memref<2x9x32xf32, #tpu.memory_space<vmem>>, vector<1x9x32xf32>,
    } else {
    }
    %3 = arith.index_cast %arg1 : i32 to index
    %c0 = arith.constant 0 : index
    %c0_1 = arith.constant 0 : index
    %4 = vector.load %arg18[%3, %c0, %c0_1] : memref<2x9x32xf32, #tpu.memory_space<vmem>>, vector<1x9x32xf32>
    %5 = vector.shape_cast %4 : vector<1x9x32xf32> to vector<9x32xf32>
    %c0_2 = arith.constant 0 : index
    %c0_3 = arith.constant 0 : index
    %c0_4 = arith.constant 0 : index
    %6 = vector.load %arg3[%c0_2, %c0_3, %c0_4] : memref<1x1x32xf32, #tpu.memory_space<vmem>>, vector<1x1x32xf32>
    %7 = vector.shape_cast %6 : vector<1x1x32xf32> to vector<1x32xf32>
    %c0_5 = arith.constant 0 : index
    %c0_6 = arith.constant 0 : index
    %c0_7 = arith.constant 0 : index
    %8 = vector.load %arg4[%c0_5, %c0_6, %c0_7] : memref<1x1x32xf32, #tpu.memory_space<vmem>>, vector<1x1x32xf32>
    %9 = vector.shape_cast %8 : vector<1x1x32xf32> to vector<1x32xf32>
    %cst = arith.constant dense<0.000000e+00> : vector<9xf32>
    %10 = vector.multi_reduction <add>, %5, %cst [1] : vector<9x32xf32> to vector<9xf32>
    %11 = vector.shape_cast %10 : vector<9xf32> to vector<9x1xf32>
    %cst_8 = arith.constant 3.200000e+01 : f32
    %12 = vector.broadcast %cst_8 : f32 to vector<9x1xf32>
    %13 = arith.divf %11, %12 : vector<9x1xf32>
    %14 = vector.broadcast %13 : vector<9x1xf32> to vector<9x32xf32>
    %15 = arith.subf %5, %14 : vector<9x32xf32>
    %16 = arith.mulf %15, %15 : vector<9x32xf32>
    %cst_9 = arith.constant dense<0.000000e+00> : vector<9xf32>
    %17 = vector.multi_reduction <add>, %16, %cst_9 [1] : vector<9x32xf32> to vector<9xf32>
    %18 = vector.shape_cast %17 : vector<9xf32> to vector<9x1xf32>
    %cst_10 = arith.constant 3.200000e+01 : f32
    %19 = vector.broadcast %cst_10 : f32 to vector<9x1xf32>
    %20 = arith.divf %18, %19 : vector<9x1xf32>
    %21 = vector.broadcast %13 : vector<9x1xf32> to vector<9x32xf32>
    %22 = arith.subf %5, %21 : vector<9x32xf32>
    %cst_11 = arith.constant 9.99999974E-6 : f32
    %23 = vector.broadcast %cst_11 : f32 to vector<9x1xf32>
    %24 = arith.addf %20, %23 : vector<9x1xf32>
    %25 = math.rsqrt %24 : vector<9x1xf32>
    %26 = vector.broadcast %25 : vector<9x1xf32> to vector<9x32xf32>
    %27 = arith.mulf %22, %26 : vector<9x32xf32>
    %28 = vector.broadcast %7 : vector<1x32xf32> to vector<9x32xf32>
    %29 = arith.mulf %27, %28 : vector<9x32xf32>
    %30 = vector.broadcast %9 : vector<1x32xf32> to vector<9x32xf32>
    %31 = arith.addf %29, %30 : vector<9x32xf32>
    %32 = arith.truncf %31 : vector<9x32xf32> to vector<9x32xbf16>
    %c0_12 = arith.constant 0 : index
    %c0_13 = arith.constant 0 : index
    %c0_14 = arith.constant 0 : index
    %33 = vector.load %arg5[%c0_12, %c0_13, %c0_14] : memref<1x32x96xbf16, #tpu.memory_space<vmem>>, vector<1x32x96xbf16>
    %34 = vector.shape_cast %33 : vector<1x32x96xbf16> to vector<32x96xbf16>
    %cst_15 = arith.constant dense<0.000000e+00> : vector<9x96xf32>
    %35 = tpu.matmul %32, %34, %cst_15 {dimension_numbers = #tpu.dot_dimension_numbers<[1], [0], [0], [1], [0, 0, 1, 1], [], []>} : vector<9x32xbf16>, vector<32x96xbf16>, vector<9x96xf32> -> vector<9x96xf32>
    %36 = vector.extract_strided_slice %35 {offsets = [0, 0], sizes = [9, 32], strides = [1, 1]} : vector<9x96xf32> to vector<9x32xf32>
    %37 = vector.extract_strided_slice %35 {offsets = [0, 32], sizes = [9, 32], strides = [1, 1]} : vector<9x96xf32> to vector<9x32xf32>
    %38 = vector.extract_strided_slice %35 {offsets = [0, 64], sizes = [9, 32], strides = [1, 1]} : vector<9x96xf32> to vector<9x32xf32>
    %39 = vector.extract_strided_slice %36 {offsets = [0, 0], sizes = [9, 8], strides = [1, 1]} : vector<9x32xf32> to vector<9x8xf32>
    %40 = vector.extract_strided_slice %37 {offsets = [0, 0], sizes = [9, 8], strides = [1, 1]} : vector<9x32xf32> to vector<9x8xf32>
    %41 = vector.extract_strided_slice %38 {offsets = [0, 0], sizes = [9, 8], strides = [1, 1]} : vector<9x32xf32> to vector<9x8xf32>
    %cst_16 = arith.constant dense<0.000000e+00> : vector<9x9xf32>
    %42 = tpu.matmul %39, %40, %cst_16 {dimension_numbers = #tpu.dot_dimension_numbers<[1], [1], [0], [0], [0, 0, 1, 0], [], []>} : vector<9x8xf32>, vector<9x8xf32>, vector<9x9xf32> -> vector<9x9xf32>
    %cst_17 = arith.constant 0.353553385 : f32
    %43 = vector.broadcast %cst_17 : f32 to vector<9x9xf32>
    %44 = arith.mulf %42, %43 : vector<9x9xf32>
    %cst_18 = arith.constant dense<0xFF800000> : vector<9xf32>
    %45 = vector.multi_reduction <maximumf>, %44, %cst_18 [1] : vector<9x9xf32> to vector<9xf32>
    %46 = vector.shape_cast %45 : vector<9xf32> to vector<9x1xf32>
    %47 = vector.broadcast %46 : vector<9x1xf32> to vector<9x9xf32>
    %48 = arith.subf %44, %47 : vector<9x9xf32>
    %49 = math.exp %48 : vector<9x9xf32>
    %cst_19 = arith.constant dense<0.000000e+00> : vector<9xf32>
    %50 = vector.multi_reduction <add>, %49, %cst_19 [1] : vector<9x9xf32> to vector<9xf32>
    %51 = vector.shape_cast %50 : vector<9xf32> to vector<9x1xf32>
    %52 = tpu.reciprocal %51 : vector<9x1xf32> -> vector<9x1xf32>
    %53 = vector.broadcast %52 : vector<9x1xf32> to vector<9x9xf32>
    %54 = arith.mulf %49, %53 : vector<9x9xf32>
    %cst_20 = arith.constant dense<0.000000e+00> : vector<9x8xf32>
    %55 = tpu.matmul %54, %41, %cst_20 {dimension_numbers = #tpu.dot_dimension_numbers<[1], [0], [0], [1], [0, 0, 1, 1], [], []>} : vector<9x9xf32>, vector<9x8xf32>, vector<9x8xf32> -> vector<9x8xf32>
    %c0_21 = arith.constant 0 : index
    %c0_22 = arith.constant 0 : index
    %56 = vector.load %arg19[%c0_21, %c0_22] : memref<9x32xf32, #tpu.memory_space<vmem>>, vector<9x8xf32>
    tpu.vector_store %arg19[%c0_21, %c0_22], %55 {strides = array<i32>} : memref<9x32xf32, #tpu.memory_space<vmem>>, vector<9x8xf32>,
    %57 = vector.extract_strided_slice %36 {offsets = [0, 8], sizes = [9, 8], strides = [1, 1]} : vector<9x32xf32> to vector<9x8xf32>
    %58 = vector.extract_strided_slice %37 {offsets = [0, 8], sizes = [9, 8], strides = [1, 1]} : vector<9x32xf32> to vector<9x8xf32>
    %59 = vector.extract_strided_slice %38 {offsets = [0, 8], sizes = [9, 8], strides = [1, 1]} : vector<9x32xf32> to vector<9x8xf32>
    %cst_23 = arith.constant dense<0.000000e+00> : vector<9x9xf32>
    %60 = tpu.matmul %57, %58, %cst_23 {dimension_numbers = #tpu.dot_dimension_numbers<[1], [1], [0], [0], [0, 0, 1, 0], [], []>} : vector<9x8xf32>, vector<9x8xf32>, vector<9x9xf32> -> vector<9x9xf32>
    %cst_24 = arith.constant 0.353553385 : f32
    %61 = vector.broadcast %cst_24 : f32 to vector<9x9xf32>
    %62 = arith.mulf %60, %61 : vector<9x9xf32>
    %cst_25 = arith.constant dense<0xFF800000> : vector<9xf32>
    %63 = vector.multi_reduction <maximumf>, %62, %cst_25 [1] : vector<9x9xf32> to vector<9xf32>
    %64 = vector.shape_cast %63 : vector<9xf32> to vector<9x1xf32>
    %65 = vector.broadcast %64 : vector<9x1xf32> to vector<9x9xf32>
    %66 = arith.subf %62, %65 : vector<9x9xf32>
    %67 = math.exp %66 : vector<9x9xf32>
    %cst_26 = arith.constant dense<0.000000e+00> : vector<9xf32>
    %68 = vector.multi_reduction <add>, %67, %cst_26 [1] : vector<9x9xf32> to vector<9xf32>
    %69 = vector.shape_cast %68 : vector<9xf32> to vector<9x1xf32>
    %70 = tpu.reciprocal %69 : vector<9x1xf32> -> vector<9x1xf32>
    %71 = vector.broadcast %70 : vector<9x1xf32> to vector<9x9xf32>
    %72 = arith.mulf %67, %71 : vector<9x9xf32>
    %cst_27 = arith.constant dense<0.000000e+00> : vector<9x8xf32>
    %73 = tpu.matmul %72, %59, %cst_27 {dimension_numbers = #tpu.dot_dimension_numbers<[1], [0], [0], [1], [0, 0, 1, 1], [], []>} : vector<9x9xf32>, vector<9x8xf32>, vector<9x8xf32> -> vector<9x8xf32>
    %c0_28 = arith.constant 0 : index
    %c8 = arith.constant 8 : index
    %74 = vector.load %arg19[%c0_28, %c8] : memref<9x32xf32, #tpu.memory_space<vmem>>, vector<9x8xf32>
    tpu.vector_store %arg19[%c0_28, %c8], %73 {strides = array<i32>} : memref<9x32xf32, #tpu.memory_space<vmem>>, vector<9x8xf32>,
    %75 = vector.extract_strided_slice %36 {offsets = [0, 16], sizes = [9, 8], strides = [1, 1]} : vector<9x32xf32> to vector<9x8xf32>
    %76 = vector.extract_strided_slice %37 {offsets = [0, 16], sizes = [9, 8], strides = [1, 1]} : vector<9x32xf32> to vector<9x8xf32>
    %77 = vector.extract_strided_slice %38 {offsets = [0, 16], sizes = [9, 8], strides = [1, 1]} : vector<9x32xf32> to vector<9x8xf32>
    %cst_29 = arith.constant dense<0.000000e+00> : vector<9x9xf32>
    %78 = tpu.matmul %75, %76, %cst_29 {dimension_numbers = #tpu.dot_dimension_numbers<[1], [1], [0], [0], [0, 0, 1, 0], [], []>} : vector<9x8xf32>, vector<9x8xf32>, vector<9x9xf32> -> vector<9x9xf32>
    %cst_30 = arith.constant 0.353553385 : f32
    %79 = vector.broadcast %cst_30 : f32 to vector<9x9xf32>
    %80 = arith.mulf %78, %79 : vector<9x9xf32>
    %cst_31 = arith.constant dense<0xFF800000> : vector<9xf32>
    %81 = vector.multi_reduction <maximumf>, %80, %cst_31 [1] : vector<9x9xf32> to vector<9xf32>
    %82 = vector.shape_cast %81 : vector<9xf32> to vector<9x1xf32>
    %83 = vector.broadcast %82 : vector<9x1xf32> to vector<9x9xf32>
    %84 = arith.subf %80, %83 : vector<9x9xf32>
    %85 = math.exp %84 : vector<9x9xf32>
    %cst_32 = arith.constant dense<0.000000e+00> : vector<9xf32>
    %86 = vector.multi_reduction <add>, %85, %cst_32 [1] : vector<9x9xf32> to vector<9xf32>
    %87 = vector.shape_cast %86 : vector<9xf32> to vector<9x1xf32>
    %88 = tpu.reciprocal %87 : vector<9x1xf32> -> vector<9x1xf32>
    %89 = vector.broadcast %88 : vector<9x1xf32> to vector<9x9xf32>
    %90 = arith.mulf %85, %89 : vector<9x9xf32>
    %cst_33 = arith.constant dense<0.000000e+00> : vector<9x8xf32>
    %91 = tpu.matmul %90, %77, %cst_33 {dimension_numbers = #tpu.dot_dimension_numbers<[1], [0], [0], [1], [0, 0, 1, 1], [], []>} : vector<9x9xf32>, vector<9x8xf32>, vector<9x8xf32> -> vector<9x8xf32>
    %c0_34 = arith.constant 0 : index
    %c16 = arith.constant 16 : index
    %92 = vector.load %arg19[%c0_34, %c16] : memref<9x32xf32, #tpu.memory_space<vmem>>, vector<9x8xf32>
    tpu.vector_store %arg19[%c0_34, %c16], %91 {strides = array<i32>} : memref<9x32xf32, #tpu.memory_space<vmem>>, vector<9x8xf32>,
    %93 = vector.extract_strided_slice %36 {offsets = [0, 24], sizes = [9, 8], strides = [1, 1]} : vector<9x32xf32> to vector<9x8xf32>
    %94 = vector.extract_strided_slice %37 {offsets = [0, 24], sizes = [9, 8], strides = [1, 1]} : vector<9x32xf32> to vector<9x8xf32>
    %95 = vector.extract_strided_slice %38 {offsets = [0, 24], sizes = [9, 8], strides = [1, 1]} : vector<9x32xf32> to vector<9x8xf32>
    %cst_35 = arith.constant dense<0.000000e+00> : vector<9x9xf32>
    %96 = tpu.matmul %93, %94, %cst_35 {dimension_numbers = #tpu.dot_dimension_numbers<[1], [1], [0], [0], [0, 0, 1, 0], [], []>} : vector<9x8xf32>, vector<9x8xf32>, vector<9x9xf32> -> vector<9x9xf32>
    %cst_36 = arith.constant 0.353553385 : f32
    %97 = vector.broadcast %cst_36 : f32 to vector<9x9xf32>
    %98 = arith.mulf %96, %97 : vector<9x9xf32>
    %cst_37 = arith.constant dense<0xFF800000> : vector<9xf32>
    %99 = vector.multi_reduction <maximumf>, %98, %cst_37 [1] : vector<9x9xf32> to vector<9xf32>
    %100 = vector.shape_cast %99 : vector<9xf32> to vector<9x1xf32>
    %101 = vector.broadcast %100 : vector<9x1xf32> to vector<9x9xf32>
    %102 = arith.subf %98, %101 : vector<9x9xf32>
    %103 = math.exp %102 : vector<9x9xf32>
    %cst_38 = arith.constant dense<0.000000e+00> : vector<9xf32>
    %104 = vector.multi_reduction <add>, %103, %cst_38 [1] : vector<9x9xf32> to vector<9xf32>
    %105 = vector.shape_cast %104 : vector<9xf32> to vector<9x1xf32>
    %106 = tpu.reciprocal %105 : vector<9x1xf32> -> vector<9x1xf32>
    %107 = vector.broadcast %106 : vector<9x1xf32> to vector<9x9xf32>
    %108 = arith.mulf %103, %107 : vector<9x9xf32>
    %cst_39 = arith.constant dense<0.000000e+00> : vector<9x8xf32>
    %109 = tpu.matmul %108, %95, %cst_39 {dimension_numbers = #tpu.dot_dimension_numbers<[1], [0], [0], [1], [0, 0, 1, 1], [], []>} : vector<9x9xf32>, vector<9x8xf32>, vector<9x8xf32> -> vector<9x8xf32>
    %c0_40 = arith.constant 0 : index
    %c24 = arith.constant 24 : index
    %110 = vector.load %arg19[%c0_40, %c24] : memref<9x32xf32, #tpu.memory_space<vmem>>, vector<9x8xf32>
    tpu.vector_store %arg19[%c0_40, %c24], %109 {strides = array<i32>} : memref<9x32xf32, #tpu.memory_space<vmem>>, vector<9x8xf32>,
    %c0_41 = arith.constant 0 : index
    %c0_42 = arith.constant 0 : index
    %111 = vector.load %arg19[%c0_41, %c0_42] : memref<9x32xf32, #tpu.memory_space<vmem>>, vector<9x32xf32>
    %112 = arith.truncf %111 : vector<9x32xf32> to vector<9x32xbf16>
    %c0_43 = arith.constant 0 : index
    %c0_44 = arith.constant 0 : index
    %c0_45 = arith.constant 0 : index
    %113 = vector.load %arg6[%c0_43, %c0_44, %c0_45] : memref<1x32x32xbf16, #tpu.memory_space<vmem>>, vector<1x32x32xbf16>
    %114 = vector.shape_cast %113 : vector<1x32x32xbf16> to vector<32x32xbf16>
    %cst_46 = arith.constant dense<0.000000e+00> : vector<9x32xf32>
    %115 = tpu.matmul %112, %114, %cst_46 {dimension_numbers = #tpu.dot_dimension_numbers<[1], [0], [0], [1], [0, 0, 1, 1], [], []>} : vector<9x32xbf16>, vector<32x32xbf16>, vector<9x32xf32> -> vector<9x32xf32>
    %116 = arith.addf %5, %115 : vector<9x32xf32>
    %c0_47 = arith.constant 0 : index
    %c0_48 = arith.constant 0 : index
    %c0_49 = arith.constant 0 : index
    %117 = vector.load %arg7[%c0_47, %c0_48, %c0_49] : memref<1x1x32xf32, #tpu.memory_space<vmem>>, vector<1x1x32xf32>
    %118 = vector.shape_cast %117 : vector<1x1x32xf32> to vector<1x32xf32>
    %119 = vector.broadcast %118 : vector<1x32xf32> to vector<9x32xf32>
    %120 = arith.addf %116, %119 : vector<9x32xf32>
    %c0_50 = arith.constant 0 : index
    %c0_51 = arith.constant 0 : index
    %c0_52 = arith.constant 0 : index
    %121 = vector.load %arg8[%c0_50, %c0_51, %c0_52] : memref<1x1x32xf32, #tpu.memory_space<vmem>>, vector<1x1x32xf32>
    %122 = vector.shape_cast %121 : vector<1x1x32xf32> to vector<1x32xf32>
    %c0_53 = arith.constant 0 : index
    %c0_54 = arith.constant 0 : index
    %c0_55 = arith.constant 0 : index
    %123 = vector.load %arg9[%c0_53, %c0_54, %c0_55] : memref<1x1x32xf32, #tpu.memory_space<vmem>>, vector<1x1x32xf32>
    %124 = vector.shape_cast %123 : vector<1x1x32xf32> to vector<1x32xf32>
    %cst_56 = arith.constant dense<0.000000e+00> : vector<9xf32>
    %125 = vector.multi_reduction <add>, %120, %cst_56 [1] : vector<9x32xf32> to vector<9xf32>
    %126 = vector.shape_cast %125 : vector<9xf32> to vector<9x1xf32>
    %cst_57 = arith.constant 3.200000e+01 : f32
    %127 = vector.broadcast %cst_57 : f32 to vector<9x1xf32>
    %128 = arith.divf %126, %127 : vector<9x1xf32>
    %129 = vector.broadcast %128 : vector<9x1xf32> to vector<9x32xf32>
    %130 = arith.subf %120, %129 : vector<9x32xf32>
    %131 = arith.mulf %130, %130 : vector<9x32xf32>
    %cst_58 = arith.constant dense<0.000000e+00> : vector<9xf32>
    %132 = vector.multi_reduction <add>, %131, %cst_58 [1] : vector<9x32xf32> to vector<9xf32>
    %133 = vector.shape_cast %132 : vector<9xf32> to vector<9x1xf32>
    %cst_59 = arith.constant 3.200000e+01 : f32
    %134 = vector.broadcast %cst_59 : f32 to vector<9x1xf32>
    %135 = arith.divf %133, %134 : vector<9x1xf32>
    %136 = vector.broadcast %128 : vector<9x1xf32> to vector<9x32xf32>
    %137 = arith.subf %120, %136 : vector<9x32xf32>
    %cst_60 = arith.constant 9.99999974E-6 : f32
    %138 = vector.broadcast %cst_60 : f32 to vector<9x1xf32>
    %139 = arith.addf %135, %138 : vector<9x1xf32>
    %140 = math.rsqrt %139 : vector<9x1xf32>
    %141 = vector.broadcast %140 : vector<9x1xf32> to vector<9x32xf32>
    %142 = arith.mulf %137, %141 : vector<9x32xf32>
    %143 = vector.broadcast %122 : vector<1x32xf32> to vector<9x32xf32>
    %144 = arith.mulf %142, %143 : vector<9x32xf32>
    %145 = vector.broadcast %124 : vector<1x32xf32> to vector<9x32xf32>
    %146 = arith.addf %144, %145 : vector<9x32xf32>
    %147 = arith.truncf %146 : vector<9x32xf32> to vector<9x32xbf16>
    %c0_61 = arith.constant 0 : index
    %c0_62 = arith.constant 0 : index
    %c0_63 = arith.constant 0 : index
    %148 = vector.load %arg10[%c0_61, %c0_62, %c0_63] : memref<1x32x64xbf16, #tpu.memory_space<vmem>>, vector<1x32x64xbf16>
    %149 = vector.shape_cast %148 : vector<1x32x64xbf16> to vector<32x64xbf16>
    %cst_64 = arith.constant dense<0.000000e+00> : vector<9x64xf32>
    %150 = tpu.matmul %147, %149, %cst_64 {dimension_numbers = #tpu.dot_dimension_numbers<[1], [0], [0], [1], [0, 0, 1, 1], [], []>} : vector<9x32xbf16>, vector<32x64xbf16>, vector<9x64xf32> -> vector<9x64xf32>
    %c0_65 = arith.constant 0 : index
    %c0_66 = arith.constant 0 : index
    %c0_67 = arith.constant 0 : index
    %151 = vector.load %arg11[%c0_65, %c0_66, %c0_67] : memref<1x1x64xf32, #tpu.memory_space<vmem>>, vector<1x1x64xf32>
    %152 = vector.shape_cast %151 : vector<1x1x64xf32> to vector<1x64xf32>
    %153 = vector.broadcast %152 : vector<1x64xf32> to vector<9x64xf32>
    %154 = arith.addf %150, %153 : vector<9x64xf32>
    %cst_68 = arith.constant 5.000000e-01 : f32
    %155 = vector.broadcast %cst_68 : f32 to vector<9x64xf32>
    %156 = arith.mulf %155, %154 : vector<9x64xf32>
    %cst_69 = arith.constant 0.707106769 : f32
    %157 = vector.broadcast %cst_69 : f32 to vector<9x64xf32>
    %158 = arith.mulf %154, %157 : vector<9x64xf32>
    %159 = math.erf %158 : vector<9x64xf32>
    %cst_70 = arith.constant 1.000000e+00 : f32
    %160 = vector.broadcast %cst_70 : f32 to vector<9x64xf32>
    %161 = arith.addf %160, %159 : vector<9x64xf32>
    %162 = arith.mulf %156, %161 : vector<9x64xf32>
    %163 = arith.truncf %162 : vector<9x64xf32> to vector<9x64xbf16>
    %c0_71 = arith.constant 0 : index
    %c0_72 = arith.constant 0 : index
    %c0_73 = arith.constant 0 : index
    %164 = vector.load %arg12[%c0_71, %c0_72, %c0_73] : memref<1x64x32xbf16, #tpu.memory_space<vmem>>, vector<1x64x32xbf16>
    %165 = vector.shape_cast %164 : vector<1x64x32xbf16> to vector<64x32xbf16>
    %cst_74 = arith.constant dense<0.000000e+00> : vector<9x32xf32>
    %166 = tpu.matmul %163, %165, %cst_74 {dimension_numbers = #tpu.dot_dimension_numbers<[1], [0], [0], [1], [0, 0, 1, 1], [], []>} : vector<9x64xbf16>, vector<64x32xbf16>, vector<9x32xf32> -> vector<9x32xf32>
    %c0_75 = arith.constant 0 : index
    %c0_76 = arith.constant 0 : index
    %c0_77 = arith.constant 0 : index
    %167 = vector.load %arg13[%c0_75, %c0_76, %c0_77] : memref<1x1x32xf32, #tpu.memory_space<vmem>>, vector<1x1x32xf32>
    %168 = vector.shape_cast %167 : vector<1x1x32xf32> to vector<1x32xf32>
    %169 = vector.broadcast %168 : vector<1x32xf32> to vector<9x32xf32>
    %170 = arith.addf %166, %169 : vector<9x32xf32>
    %171 = arith.addf %120, %170 : vector<9x32xf32>
    %172 = arith.index_cast %arg1 : i32 to index
    %c0_78 = arith.constant 0 : index
    %c0_79 = arith.constant 0 : index
    %173 = vector.load %arg18[%172, %c0_78, %c0_79] : memref<2x9x32xf32, #tpu.memory_space<vmem>>, vector<1x9x32xf32>
    %174 = vector.shape_cast %173 : vector<1x9x32xf32> to vector<9x32xf32>
    %175 = vector.shape_cast %171 : vector<9x32xf32> to vector<1x9x32xf32>
    tpu.vector_store %arg18[%172, %c0_78, %c0_79], %175 {strides = array<i32>} : memref<2x9x32xf32, #tpu.memory_space<vmem>>, vector<1x9x32xf32>,
    %c0_80 = arith.constant 0 : index
    %c0_81 = arith.constant 0 : index
    %c0_82 = arith.constant 0 : index
    %c0_83 = arith.constant 0 : index
    %176 = vector.load %arg17[%c0_80, %c0_81, %c0_82, %c0_83] : memref<1x1x9x32xf32, #tpu.memory_space<vmem>>, vector<1x1x9x32xf32>
    %177 = vector.shape_cast %176 : vector<1x1x9x32xf32> to vector<9x32xf32>
    %178 = vector.shape_cast %171 : vector<9x32xf32> to vector<1x1x9x32xf32>
    tpu.vector_store %arg17[%c0_80, %c0_81, %c0_82, %c0_83], %178 {strides = array<i32>} : memref<1x1x9x32xf32, #tpu.memory_space<vmem>>, vector<1x1x9x32xf32>,
    %c1_i32 = arith.constant 1 : i32
    %179 = arith.cmpi eq, %arg0, %c1_i32 : i32
    %180 = arith.extui %179 : i1 to i32
    %c0_i32_84 = arith.constant 0 : i32
    %181 = arith.cmpi ne, %180, %c0_i32_84 : i32
    scf.if %181 {
      %c0_85 = arith.constant 0 : index
      %c0_86 = arith.constant 0 : index
      %c0_87 = arith.constant 0 : index
      %182 = vector.load %arg14[%c0_85, %c0_86, %c0_87] : memref<1x1x32xf32, #tpu.memory_space<vmem>>, vector<1x1x32xf32>
      %183 = vector.shape_cast %182 : vector<1x1x32xf32> to vector<1x32xf32>
      %c0_88 = arith.constant 0 : index
      %c0_89 = arith.constant 0 : index
      %c0_90 = arith.constant 0 : index
      %184 = vector.load %arg15[%c0_88, %c0_89, %c0_90] : memref<1x1x32xf32, #tpu.memory_space<vmem>>, vector<1x1x32xf32>
      %185 = vector.shape_cast %184 : vector<1x1x32xf32> to vector<1x32xf32>
      %cst_91 = arith.constant dense<0.000000e+00> : vector<9xf32>
      %186 = vector.multi_reduction <add>, %171, %cst_91 [1] : vector<9x32xf32> to vector<9xf32>
      %187 = vector.shape_cast %186 : vector<9xf32> to vector<9x1xf32>
      %cst_92 = arith.constant 3.200000e+01 : f32
      %188 = vector.broadcast %cst_92 : f32 to vector<9x1xf32>
      %189 = arith.divf %187, %188 : vector<9x1xf32>
      %190 = vector.broadcast %189 : vector<9x1xf32> to vector<9x32xf32>
      %191 = arith.subf %171, %190 : vector<9x32xf32>
      %192 = arith.mulf %191, %191 : vector<9x32xf32>
      %cst_93 = arith.constant dense<0.000000e+00> : vector<9xf32>
      %193 = vector.multi_reduction <add>, %192, %cst_93 [1] : vector<9x32xf32> to vector<9xf32>
      %194 = vector.shape_cast %193 : vector<9xf32> to vector<9x1xf32>
      %cst_94 = arith.constant 3.200000e+01 : f32
      %195 = vector.broadcast %cst_94 : f32 to vector<9x1xf32>
      %196 = arith.divf %194, %195 : vector<9x1xf32>
      %197 = vector.broadcast %189 : vector<9x1xf32> to vector<9x32xf32>
      %198 = arith.subf %171, %197 : vector<9x32xf32>
      %cst_95 = arith.constant 9.99999974E-6 : f32
      %199 = vector.broadcast %cst_95 : f32 to vector<9x1xf32>
      %200 = arith.addf %196, %199 : vector<9x1xf32>
      %201 = math.rsqrt %200 : vector<9x1xf32>
      %202 = vector.broadcast %201 : vector<9x1xf32> to vector<9x32xf32>
      %203 = arith.mulf %198, %202 : vector<9x32xf32>
      %204 = vector.broadcast %183 : vector<1x32xf32> to vector<9x32xf32>
      %205 = arith.mulf %203, %204 : vector<9x32xf32>
      %206 = vector.broadcast %185 : vector<1x32xf32> to vector<9x32xf32>
      %207 = arith.addf %205, %206 : vector<9x32xf32>
      %208 = arith.index_cast %arg1 : i32 to index
      %c0_96 = arith.constant 0 : index
      %c0_97 = arith.constant 0 : index
      %209 = vector.load %arg16[%208, %c0_96, %c0_97] : memref<2x9x32xf32, #tpu.memory_space<vmem>>, vector<1x9x32xf32>
      %210 = vector.shape_cast %209 : vector<1x9x32xf32> to vector<9x32xf32>
      %211 = vector.shape_cast %207 : vector<9x32xf32> to vector<1x9x32xf32>
      tpu.vector_store %arg16[%208, %c0_96, %c0_97], %211 {strides = array<i32>} : memref<2x9x32xf32, #tpu.memory_space<vmem>>, vector<1x9x32xf32>,
    } else {
    }
    return
  }
  func.func @transform_0(%arg0: i32, %arg1: i32) -> (i32, i32, i32) {
    %c0_i32 = arith.constant 0 : i32
    %c0_i32_0 = arith.constant 0 : i32
    %c0_i32_1 = arith.constant 0 : i32
    %c0_i32_2 = arith.constant 0 : i32
    return %c0_i32, %c0_i32_0, %c0_i32_1 : i32, i32, i32
  }
  func.func @transform_1(%arg0: i32, %arg1: i32) -> (i32, i32, i32) {
    %c0_i32 = arith.constant 0 : i32
    %c0_i32_0 = arith.constant 0 : i32
    %c0_i32_1 = arith.constant 0 : i32
    return %arg0, %c0_i32, %c0_i32_0 : i32, i32, i32
  }
  func.func @transform_2(%arg0: i32, %arg1: i32) -> (i32, i32, i32) {
    %c0_i32 = arith.constant 0 : i32
    %c0_i32_0 = arith.constant 0 : i32
    %c0_i32_1 = arith.constant 0 : i32
    return %arg0, %c0_i32, %c0_i32_0 : i32, i32, i32
  }
  func.func @transform_3(%arg0: i32, %arg1: i32) -> (i32, i32, i32) {
    %c0_i32 = arith.constant 0 : i32
    %c0_i32_0 = arith.constant 0 : i32
    %c0_i32_1 = arith.constant 0 : i32
    return %arg0, %c0_i32, %c0_i32_0 : i32, i32, i32
  }
  func.func @transform_4(%arg0: i32, %arg1: i32) -> (i32, i32, i32) {
    %c0_i32 = arith.constant 0 : i32
    %c0_i32_0 = arith.constant 0 : i32
    %c0_i32_1 = arith.constant 0 : i32
    return %arg0, %c0_i32, %c0_i32_0 : i32, i32, i32
  }
  func.func @transform_5(%arg0: i32, %arg1: i32) -> (i32, i32, i32) {
    %c0_i32 = arith.constant 0 : i32
    %c0_i32_0 = arith.constant 0 : i32
    %c0_i32_1 = arith.constant 0 : i32
    return %arg0, %c0_i32, %c0_i32_0 : i32, i32, i32
  }
  func.func @transform_6(%arg0: i32, %arg1: i32) -> (i32, i32, i32) {
    %c0_i32 = arith.constant 0 : i32
    %c0_i32_0 = arith.constant 0 : i32
    %c0_i32_1 = arith.constant 0 : i32
    return %arg0, %c0_i32, %c0_i32_0 : i32, i32, i32
  }
  func.func @transform_7(%arg0: i32, %arg1: i32) -> (i32, i32, i32) {
    %c0_i32 = arith.constant 0 : i32
    %c0_i32_0 = arith.constant 0 : i32
    %c0_i32_1 = arith.constant 0 : i32
    return %arg0, %c0_i32, %c0_i32_0 : i32, i32, i32
  }
  func.func @transform_8(%arg0: i32, %arg1: i32) -> (i32, i32, i32) {
    %c0_i32 = arith.constant 0 : i32
    %c0_i32_0 = arith.constant 0 : i32
    %c0_i32_1 = arith.constant 0 : i32
    return %arg0, %c0_i32, %c0_i32_0 : i32, i32, i32
  }
  func.func @transform_9(%arg0: i32, %arg1: i32) -> (i32, i32, i32) {
    %c0_i32 = arith.constant 0 : i32
    %c0_i32_0 = arith.constant 0 : i32
    %c0_i32_1 = arith.constant 0 : i32
    return %arg0, %c0_i32, %c0_i32_0 : i32, i32, i32
  }
  func.func @transform_10(%arg0: i32, %arg1: i32) -> (i32, i32, i32) {
    %c0_i32 = arith.constant 0 : i32
    %c0_i32_0 = arith.constant 0 : i32
    %c0_i32_1 = arith.constant 0 : i32
    return %arg0, %c0_i32, %c0_i32_0 : i32, i32, i32
  }
  func.func @transform_11(%arg0: i32, %arg1: i32) -> (i32, i32, i32) {
    %c0_i32 = arith.constant 0 : i32
    %c0_i32_0 = arith.constant 0 : i32
    %c0_i32_1 = arith.constant 0 : i32
    return %arg0, %c0_i32, %c0_i32_0 : i32, i32, i32
  }
  func.func @transform_12(%arg0: i32, %arg1: i32) -> (i32, i32, i32) {
    %c0_i32 = arith.constant 0 : i32
    %c0_i32_0 = arith.constant 0 : i32
    %c0_i32_1 = arith.constant 0 : i32
    %c0_i32_2 = arith.constant 0 : i32
    return %c0_i32, %c0_i32_0, %c0_i32_1 : i32, i32, i32
  }
  func.func @transform_13(%arg0: i32, %arg1: i32) -> (i32, i32, i32) {
    %c0_i32 = arith.constant 0 : i32
    %c0_i32_0 = arith.constant 0 : i32
    %c0_i32_1 = arith.constant 0 : i32
    %c0_i32_2 = arith.constant 0 : i32
    return %c0_i32, %c0_i32_0, %c0_i32_1 : i32, i32, i32
  }
  func.func @transform_14(%arg0: i32, %arg1: i32) -> (i32, i32, i32) {
    %c0_i32 = arith.constant 0 : i32
    %c0_i32_0 = arith.constant 0 : i32
    %c0_i32_1 = arith.constant 0 : i32
    %c0_i32_2 = arith.constant 0 : i32
    return %c0_i32, %c0_i32_0, %c0_i32_1 : i32, i32, i32
  }
  func.func @transform_15(%arg0: i32, %arg1: i32) -> (i32, i32, i32, i32) {
    %c0_i32 = arith.constant 0 : i32
    %c0_i32_0 = arith.constant 0 : i32
    %c0_i32_1 = arith.constant 0 : i32
    return %arg0, %arg1, %c0_i32, %c0_i32_0 : i32, i32, i32, i32
  }
}

</mosaic_0001>

<llo_original>
// kernel: vit_forward.2
$region0: #{vit_forward.2}
  #allocation0 [shape = 'u32[]', space=smem, size = 0x4, offset = 0x4, fixed_abs, tag = 'smem constant byte address 0x4 - core index']
  #allocation1 [shape = 'u32[144,128]{1,0:T(1,128)}', space=vmem, size = 0x12000, scoped, tag = 'internal scratch']
  %s0 = inlined_call_operand.vmem [shape: f32[2,8,2048], index: 0, kind: input, shape index: {}]
  %s1 = inlined_call_operand.vmem [shape: f32[2,1,27], index: 1, kind: input, shape index: {}]
  %s2 = inlined_call_operand.vmem [shape: f32[2048,32], index: 2, kind: input, shape index: {}]
  %s3 = inlined_call_operand.vmem [shape: f32[1,32], index: 3, kind: input, shape index: {}]
  %s4 = inlined_call_operand.vmem [shape: f32[27,32], index: 4, kind: input, shape index: {}]
  %s5 = inlined_call_operand.vmem [shape: f32[1,32], index: 5, kind: input, shape index: {}]
  %s6 = inlined_call_operand.vmem [shape: f32[1,9,32], index: 6, kind: input, shape index: {}]
  %s7 = inlined_call_operand.vmem [shape: f32[2,9,32], index: 7, kind: output, shape index: {}]
  %s8 = sld [smem:[#allocation0]]
  $region61: #{vit_forward.2} parent=0
    _
  %s10 = ssub.s32 1, %s8
  %s11 = scalar_select 0, %s10, %s8
  loop: start=0, step=1, limit=4
  $region2: #{vit_forward.2} parent=0 // loop_pre_header
    _
  $region3: #{vit_forward.2} parent=0 // loop_header
    %s13 = sphi 0, %s17
    %p14 = scmp.ge.s32.totalorder %s13, 4
    %s23 = sphi 0, %s25
    %s26 = sphi 0, %s23
    %s27 = sphi 0, %s26
    %s43 = sphi 0, %s27
    %s49 = sphi 0, %s51
    %s52 = sphi 0, %s49
    %s53 = sphi 0, %s52
    %s69 = sphi 0, %s53
    %s73 = sphi 0, %s73
    %s75 = sphi 0, %s73
    %s76 = sphi 0, %s75
    %s90 = sphi 0, %s76
    %s94 = sphi 0, %s94
    %s96 = sphi 0, %s94
    %s97 = sphi 0, %s96
    %s111 = sphi 0, %s97
    %s115 = sphi 0, %s115
    %s117 = sphi 0, %s115
    %s118 = sphi 0, %s117
    %s132 = sphi 0, %s118
    %s136 = sphi 0, %s136
    %s138 = sphi 0, %s136
    %s139 = sphi 0, %s138
    %s153 = sphi 0, %s139
    %s157 = sphi 0, %s157
    %s159 = sphi 0, %s157
    %s160 = sphi 0, %s159
    %s174 = sphi 0, %s160
    %s180 = sphi 0, %s182
    %s183 = sphi 0, %s180
    %s184 = sphi 0, %s183
    %s200 = sphi 0, %s184
  $region4: #{vit_forward.2} parent=0 // loop_header_branch
    %16 = sbr.rel (%p14) target = $region8
  $region5: #{vit_forward.2} parent=0 // loop_body
    %s18 = ssub.s32 %s13, 1
    %s19 = ssub.s32 %s13, 2
    %s20 = sadd.s32 %s13, 1
    %s21 = ssub.s32 %s13, %s20
    %p22 = scmp.eq.s32.totalorder %s21, 0
    %s24 = sadd.s32 %s23, 1
    %s25 = scalar_select %p22, %s23, %s24
    %p28 = pneg %p22
    %p29 = scmp.eq.s32.totalorder %s13, 1
    %p30 = por %p28, %p29
    %p31 = scmp.ne.s32.totalorder %s23, %s26
    %p32 = scmp.eq.s32.totalorder %s13, 0
    %p33 = por %p31, %p32
    %p34 = scmp.ne.s32.totalorder %s23, %s26
    %p35 = scmp.eq.s32.totalorder %s18, 1
    %p36 = por %p34, %p35
    %p37 = scmp.ne.s32.totalorder %s26, %s27
    %p38 = scmp.eq.s32.totalorder %s18, 0
    %p39 = por %p37, %p38
    %p40 = scmp.ne.s32.totalorder %s26, %s27
    %p41 = scmp.eq.s32.totalorder %s19, 1
    %p42 = por %p40, %p41
    %p44 = scmp.ne.s32.totalorder %s27, %s43
    %p45 = scmp.eq.s32.totalorder %s19, 0
    %p46 = por %p44, %p45
    %s47 = ssub.s32 %s13, %s20
    %p48 = scmp.eq.s32.totalorder %s47, 0
    %s50 = sadd.s32 %s49, 1
    %s51 = scalar_select %p48, %s49, %s50
    %p54 = pneg %p48
    %p55 = scmp.eq.s32.totalorder %s13, 1
    %p56 = por %p54, %p55
    %p57 = scmp.ne.s32.totalorder %s49, %s52
    %p58 = scmp.eq.s32.totalorder %s13, 0
    %p59 = por %p57, %p58
    %p60 = scmp.ne.s32.totalorder %s49, %s52
    %p61 = scmp.eq.s32.totalorder %s18, 1
    %p62 = por %p60, %p61
    %p63 = scmp.ne.s32.totalorder %s52, %s53
    %p64 = scmp.eq.s32.totalorder %s18, 0
    %p65 = por %p63, %p64
    %p66 = scmp.ne.s32.totalorder %s52, %s53
    %p67 = scmp.eq.s32.totalorder %s19, 1
    %p68 = por %p66, %p67
    %p70 = scmp.ne.s32.totalorder %s53, %s69
    %p71 = scmp.eq.s32.totalorder %s19, 0
    %p72 = por %p70, %p71
    %s74 = sadd.s32 %s73, 1
    %p77 = scmp.eq.s32.totalorder %s13, 1
    %p78 = scmp.ne.s32.totalorder %s73, %s75
    %p79 = scmp.eq.s32.totalorder %s13, 0
    %p80 = por %p78, %p79
    %p81 = scmp.ne.s32.totalorder %s73, %s75
    %p82 = scmp.eq.s32.totalorder %s18, 1
    %p83 = por %p81, %p82
    %p84 = scmp.ne.s32.totalorder %s75, %s76
    %p85 = scmp.eq.s32.totalorder %s18, 0
    %p86 = por %p84, %p85
    %p87 = scmp.ne.s32.totalorder %s75, %s76
    %p88 = scmp.eq.s32.totalorder %s19, 1
    %p89 = por %p87, %p88
    %p91 = scmp.ne.s32.totalorder %s76, %s90
    %p92 = scmp.eq.s32.totalorder %s19, 0
    %p93 = por %p91, %p92
    %s95 = sadd.s32 %s94, 1
    %p98 = scmp.eq.s32.totalorder %s13, 1
    %p99 = scmp.ne.s32.totalorder %s94, %s96
    %p100 = scmp.eq.s32.totalorder %s13, 0
    %p101 = por %p99, %p100
    %p102 = scmp.ne.s32.totalorder %s94, %s96
    %p103 = scmp.eq.s32.totalorder %s18, 1
    %p104 = por %p102, %p103
    %p105 = scmp.ne.s32.totalorder %s96, %s97
    %p106 = scmp.eq.s32.totalorder %s18, 0
    %p107 = por %p105, %p106
    %p108 = scmp.ne.s32.totalorder %s96, %s97
    %p109 = scmp.eq.s32.totalorder %s19, 1
    %p110 = por %p108, %p109
    %p112 = scmp.ne.s32.totalorder %s97, %s111
    %p113 = scmp.eq.s32.totalorder %s19, 0
    %p114 = por %p112, %p113
    %s116 = sadd.s32 %s115, 1
    %p119 = scmp.eq.s32.totalorder %s13, 1
    %p120 = scmp.ne.s32.totalorder %s115, %s117
    %p121 = scmp.eq.s32.totalorder %s13, 0
    %p122 = por %p120, %p121
    %p123 = scmp.ne.s32.totalorder %s115, %s117
    %p124 = scmp.eq.s32.totalorder %s18, 1
    %p125 = por %p123, %p124
    %p126 = scmp.ne.s32.totalorder %s117, %s118
    %p127 = scmp.eq.s32.totalorder %s18, 0
    %p128 = por %p126, %p127
    %p129 = scmp.ne.s32.totalorder %s117, %s118
    %p130 = scmp.eq.s32.totalorder %s19, 1
    %p131 = por %p129, %p130
    %p133 = scmp.ne.s32.totalorder %s118, %s132
    %p134 = scmp.eq.s32.totalorder %s19, 0
    %p135 = por %p133, %p134
    %s137 = sadd.s32 %s136, 1
    %p140 = scmp.eq.s32.totalorder %s13, 1
    %p141 = scmp.ne.s32.totalorder %s136, %s138
    %p142 = scmp.eq.s32.totalorder %s13, 0
    %p143 = por %p141, %p142
    %p144 = scmp.ne.s32.totalorder %s136, %s138
    %p145 = scmp.eq.s32.totalorder %s18, 1
    %p146 = por %p144, %p145
    %p147 = scmp.ne.s32.totalorder %s138, %s139
    %p148 = scmp.eq.s32.totalorder %s18, 0
    %p149 = por %p147, %p148
    %p150 = scmp.ne.s32.totalorder %s138, %s139
    %p151 = scmp.eq.s32.totalorder %s19, 1
    %p152 = por %p150, %p151
    %p154 = scmp.ne.s32.totalorder %s139, %s153
    %p155 = scmp.eq.s32.totalorder %s19, 0
    %p156 = por %p154, %p155
    %s158 = sadd.s32 %s157, 1
    %p161 = scmp.eq.s32.totalorder %s13, 1
    %p162 = scmp.ne.s32.totalorder %s157, %s159
    %p163 = scmp.eq.s32.totalorder %s13, 0
    %p164 = por %p162, %p163
    %p165 = scmp.ne.s32.totalorder %s157, %s159
    %p166 = scmp.eq.s32.totalorder %s18, 1
    %p167 = por %p165, %p166
    %p168 = scmp.ne.s32.totalorder %s159, %s160
    %p169 = scmp.eq.s32.totalorder %s18, 0
    %p170 = por %p168, %p169
    %p171 = scmp.ne.s32.totalorder %s159, %s160
    %p172 = scmp.eq.s32.totalorder %s19, 1
    %p173 = por %p171, %p172
    %p175 = scmp.ne.s32.totalorder %s160, %s174
    %p176 = scmp.eq.s32.totalorder %s19, 0
    %p177 = por %p175, %p176
    %s178 = ssub.s32 %s13, %s20
    %p179 = scmp.eq.s32.totalorder %s178, 0
    %s181 = sadd.s32 %s180, 1
    %s182 = scalar_select %p179, %s180, %s181
    %p185 = pneg %p179
    %p186 = scmp.eq.s32.totalorder %s13, 1
    %p187 = por %p185, %p186
    %p188 = scmp.ne.s32.totalorder %s180, %s183
    %p189 = scmp.eq.s32.totalorder %s13, 0
    %p190 = por %p188, %p189
    %p191 = scmp.ne.s32.totalorder %s180, %s183
    %p192 = scmp.eq.s32.totalorder %s18, 1
    %p193 = por %p191, %p192
    %p194 = scmp.ne.s32.totalorder %s183, %s184
    %p195 = scmp.eq.s32.totalorder %s18, 0
    %p196 = por %p194, %p195
    %p197 = scmp.ne.s32.totalorder %s183, %s184
    %p198 = scmp.eq.s32.totalorder %s19, 1
    %p199 = por %p197, %p198
    %p201 = scmp.ne.s32.totalorder %s184, %s200
    %p202 = scmp.eq.s32.totalorder %s19, 0
    %p203 = por %p201, %p202
    %p204 = scmp.le.s32.totalorder 1, %s13
    %p205 = scmp.lt.s32.totalorder %s13, 3
    %p206 = pnand %p204, %p205
    %p207 = pneg %p206
    // Predicated region
    $region9: #{vit_forward.2} parent=5 // pred_check
      _
    $region10: #{vit_forward.2} parent=5 // pred_check_branch
      %209 = sbr.rel (%p206) target = $region12
    $region11: #{vit_forward.2} parent=5 // pred_region
      %s210 = ssub.s32 %s13, 1
      // Predicated region
      $region13: #{vit_forward.2} parent=11 // pred_check
        %p211 = pneg %p86
      $region14: #{vit_forward.2} parent=11 // pred_check_branch
        %213 = sbr.rel (%p211) target = $region16
      $region15: #{vit_forward.2} parent=11 // pred_region
        _
      $region16: #{vit_forward.2} parent=11 // pred_fallthru
        _
      // Predicated region
      $region17: #{vit_forward.2} parent=11 // pred_check
        %p214 = pneg %p107
      $region18: #{vit_forward.2} parent=11 // pred_check_branch
        %216 = sbr.rel (%p214) target = $region20
      $region19: #{vit_forward.2} parent=11 // pred_region
        _
      $region20: #{vit_forward.2} parent=11 // pred_fallthru
        _
      // Predicated region
      $region21: #{vit_forward.2} parent=11 // pred_check
        %p217 = pneg %p128
      $region22: #{vit_forward.2} parent=11 // pred_check_branch
        %219 = sbr.rel (%p217) target = $region24
      $region23: #{vit_forward.2} parent=11 // pred_region
        _
      $region24: #{vit_forward.2} parent=11 // pred_fallthru
        _
      // Predicated region
      $region25: #{vit_forward.2} parent=11 // pred_check
        %p220 = pneg %p149
      $region26: #{vit_forward.2} parent=11 // pred_check_branch
        %222 = sbr.rel (%p220) target = $region28
      $region27: #{vit_forward.2} parent=11 // pred_region
        _
      $region28: #{vit_forward.2} parent=11 // pred_fallthru
        _
      // Predicated region
      $region29: #{vit_forward.2} parent=11 // pred_check
        %p223 = pneg %p170
      $region30: #{vit_forward.2} parent=11 // pred_check_branch
        %225 = sbr.rel (%p223) target = $region32
      $region31: #{vit_forward.2} parent=11 // pred_region
        _
      $region32: #{vit_forward.2} parent=11 // pred_fallthru
        _
    $region12: #{vit_forward.2} parent=5 // pred_fallthru
      _
    %p226 = scmp.lt.s32.totalorder %s13, 2
    // Predicated region
    $region33: #{vit_forward.2} parent=5 // pred_check
      %p227 = pneg %p226
    $region34: #{vit_forward.2} parent=5 // pred_check_branch
      %229 = sbr.rel (%p227) target = $region36
    $region35: #{vit_forward.2} parent=5 // pred_region
      // Predicated region
      $region37: #{vit_forward.2} parent=35 // pred_check
        %p230 = pneg %p33
      $region38: #{vit_forward.2} parent=35 // pred_check_branch
        %232 = sbr.rel (%p230) target = $region40
      $region39: #{vit_forward.2} parent=35 // pred_region
        %p233 = scmp.lt.s32.totalorder %s13, 1
        %s234 = scalar_select %p233, %s13, 1
        %s235 = smul.addr %s234, 16
        %s236 = smul.addr %s235, 8
        %s237 = scalar_lea.vmem %s0, %s236
      $region40: #{vit_forward.2} parent=35 // pred_fallthru
        _
      // Predicated region
      $region41: #{vit_forward.2} parent=35 // pred_check
        %p238 = pneg %p59
      $region42: #{vit_forward.2} parent=35 // pred_check_branch
        %240 = sbr.rel (%p238) target = $region44
      $region43: #{vit_forward.2} parent=35 // pred_region
        %p241 = scmp.lt.s32.totalorder %s13, 1
        %s242 = scalar_select %p241, %s13, 1
        %s243 = scalar_lea.vmem %s1, %s242
      $region44: #{vit_forward.2} parent=35 // pred_fallthru
        _
    $region36: #{vit_forward.2} parent=5 // pred_fallthru
      _
    %p244 = scmp.le.s32.totalorder 1, %s13
    %p245 = scmp.lt.s32.totalorder %s13, 3
    %p246 = pnand %p244, %p245
    %p247 = pneg %p246
    // Predicated region
    $region45: #{vit_forward.2} parent=5 // pred_check
      _
    $region46: #{vit_forward.2} parent=5 // pred_check_branch
      %249 = sbr.rel (%p246) target = $region48
    $region47: #{vit_forward.2} parent=5 // pred_region
      %s250 = ssub.s32 %s13, 1
      %p251 = scmp.lt.s32.totalorder %s18, 1
      %s252 = scalar_select %p251, %s18, 1
      %s253 = smul.addr %s252, 16
      %s254 = smul.addr %s253, 8
      %s255 = scalar_lea.vmem %s0, %s254
      %p256 = pneg %p39
      %p257 = pneg %p36
      %p258 = scmp.lt.s32.totalorder %s18, 1
      %s259 = scalar_select %p258, %s18, 1
      %s260 = scalar_lea.vmem %s1, %s259
      %p261 = pneg %p65
      %p262 = pneg %p62
      %p263 = pneg %p86
      %p264 = pneg %p83
      %p265 = pneg %p107
      %p266 = pneg %p104
      %p267 = pneg %p128
      %p268 = pneg %p125
      %p269 = pneg %p149
      %p270 = pneg %p146
      %p271 = pneg %p170
      %p272 = pneg %p167
      %p273 = pneg %p196
      %p274 = pneg %p193
      %p275 = scmp.lt.s32.totalorder %s18, 1
      %s276 = scalar_select %p275, %s18, 1
      %s277 = smul.addr %s276, 2
      %s278 = smul.addr %s277, 8
      %s279 = scalar_lea.vmem %s7, %s278
      %p280 = scmp.lt.s32.totalorder %s18, 1
      %s281 = scalar_select %p280, %s18, 1
      %s282 = smul.addr %s281, 16
      %s283 = smul.addr %s282, 8
      %s284 = scalar_lea.vmem %s0, %s283
      %p285 = scmp.lt.s32.totalorder %s18, 1
      %s286 = scalar_select %p285, %s18, 1
      %s287 = scalar_lea.vmem %s1, %s286
      %p288 = scmp.lt.s32.totalorder %s18, 1
      %s289 = scalar_select %p288, %s18, 1
      %s290 = smul.addr %s289, 2
      %s291 = smul.addr %s290, 8
      %s292 = scalar_lea.vmem %s7, %s291
      %v293 = vld [vmem:[%s284] sm:$0xff]
      %v294 = vld [vmem:[%s284 + $0x8] sm:$0xff]
      %v295 = vld [vmem:[%s284 + $0x10] sm:$0xff]
      %v296 = vld [vmem:[%s284 + $0x18] sm:$0xff]
      %v297 = vld [vmem:[%s284 + $0x20] sm:$0xff]
      %v298 = vld [vmem:[%s284 + $0x28] sm:$0xff]
      %v299 = vld [vmem:[%s284 + $0x30] sm:$0xff]
      %v300 = vld [vmem:[%s284 + $0x38] sm:$0xff]
      %v301 = vld [vmem:[%s284 + $0x40] sm:$0xff]
      %v302 = vld [vmem:[%s284 + $0x48] sm:$0xff]
      %v303 = vld [vmem:[%s284 + $0x50] sm:$0xff]
      %v304 = vld [vmem:[%s284 + $0x58] sm:$0xff]
      %v305 = vld [vmem:[%s284 + $0x60] sm:$0xff]
      %v306 = vld [vmem:[%s284 + $0x68] sm:$0xff]
      %v307 = vld [vmem:[%s284 + $0x70] sm:$0xff]
      %v308 = vld [vmem:[%s284 + $0x78] sm:$0xff]
      %v309 = vld [vmem:[%s2] sm:$0xff]
      %v310 = vld [vmem:[%s2 + $0x8] sm:$0xff]
      %v311 = vld [vmem:[%s2 + $0x10] sm:$0xff]
      %v312 = vld [vmem:[%s2 + $0x18] sm:$0xff]
      %v313 = vld [vmem:[%s2 + $0x20] sm:$0xff]
      %v314 = vld [vmem:[%s2 + $0x28] sm:$0xff]
      %v315 = vld [vmem:[%s2 + $0x30] sm:$0xff]
      %v316 = vld [vmem:[%s2 + $0x38] sm:$0xff]
      %v317 = vld [vmem:[%s2 + $0x40] sm:$0xff]
      %v318 = vld [vmem:[%s2 + $0x48] sm:$0xff]
      %v319 = vld [vmem:[%s2 + $0x50] sm:$0xff]
      %v320 = vld [vmem:[%s2 + $0x58] sm:$0xff]
      %v321 = vld [vmem:[%s2 + $0x60] sm:$0xff]
      %v322 = vld [vmem:[%s2 + $0x68] sm:$0xff]
      %v323 = vld [vmem:[%s2 + $0x70] sm:$0xff]
      %v324 = vld [vmem:[%s2 + $0x78] sm:$0xff]
      %v325 = vld [vmem:[%s2 + $0x80] sm:$0xff]
      %v326 = vld [vmem:[%s2 + $0x88] sm:$0xff]
      %v327 = vld [vmem:[%s2 + $0x90] sm:$0xff]
      %v328 = vld [vmem:[%s2 + $0x98] sm:$0xff]
      %v329 = vld [vmem:[%s2 + $0xa0] sm:$0xff]
      %v330 = vld [vmem:[%s2 + $0xa8] sm:$0xff]
      %v331 = vld [vmem:[%s2 + $0xb0] sm:$0xff]
      %v332 = vld [vmem:[%s2 + $0xb8] sm:$0xff]
      %v333 = vld [vmem:[%s2 + $0xc0] sm:$0xff]
      %v334 = vld [vmem:[%s2 + $0xc8] sm:$0xff]
      %v335 = vld [vmem:[%s2 + $0xd0] sm:$0xff]
      %v336 = vld [vmem:[%s2 + $0xd8] sm:$0xff]
      %v337 = vld [vmem:[%s2 + $0xe0] sm:$0xff]
      %v338 = vld [vmem:[%s2 + $0xe8] sm:$0xff]
      %v339 = vld [vmem:[%s2 + $0xf0] sm:$0xff]
      %v340 = vld [vmem:[%s2 + $0xf8] sm:$0xff]
      %v341 = vld [vmem:[%s2 + $0x100] sm:$0xff]
      %v342 = vld [vmem:[%s2 + $0x108] sm:$0xff]
      %v343 = vld [vmem:[%s2 + $0x110] sm:$0xff]
      %v344 = vld [vmem:[%s2 + $0x118] sm:$0xff]
      %v345 = vld [vmem:[%s2 + $0x120] sm:$0xff]
      %v346 = vld [vmem:[%s2 + $0x128] sm:$0xff]
      %v347 = vld [vmem:[%s2 + $0x130] sm:$0xff]
      %v348 = vld [vmem:[%s2 + $0x138] sm:$0xff]
      %v349 = vld [vmem:[%s2 + $0x140] sm:$0xff]
      %v350 = vld [vmem:[%s2 + $0x148] sm:$0xff]
      %v351 = vld [vmem:[%s2 + $0x150] sm:$0xff]
      %v352 = vld [vmem:[%s2 + $0x158] sm:$0xff]
      %v353 = vld [vmem:[%s2 + $0x160] sm:$0xff]
      %v354 = vld [vmem:[%s2 + $0x168] sm:$0xff]
      %v355 = vld [vmem:[%s2 + $0x170] sm:$0xff]
      %v356 = vld [vmem:[%s2 + $0x178] sm:$0xff]
      %v357 = vld [vmem:[%s2 + $0x180] sm:$0xff]
      %v358 = vld [vmem:[%s2 + $0x188] sm:$0xff]
      %v359 = vld [vmem:[%s2 + $0x190] sm:$0xff]
      %v360 = vld [vmem:[%s2 + $0x198] sm:$0xff]
      %v361 = vld [vmem:[%s2 + $0x1a0] sm:$0xff]
      %v362 = vld [vmem:[%s2 + $0x1a8] sm:$0xff]
      %v363 = vld [vmem:[%s2 + $0x1b0] sm:$0xff]
      %v364 = vld [vmem:[%s2 + $0x1b8] sm:$0xff]
      %v365 = vld [vmem:[%s2 + $0x1c0] sm:$0xff]
      %v366 = vld [vmem:[%s2 + $0x1c8] sm:$0xff]
      %v367 = vld [vmem:[%s2 + $0x1d0] sm:$0xff]
      %v368 = vld [vmem:[%s2 + $0x1d8] sm:$0xff]
      %v369 = vld [vmem:[%s2 + $0x1e0] sm:$0xff]
      %v370 = vld [vmem:[%s2 + $0x1e8] sm:$0xff]
      %v371 = vld [vmem:[%s2 + $0x1f0] sm:$0xff]
      %v372 = vld [vmem:[%s2 + $0x1f8] sm:$0xff]
      %v373 = vld [vmem:[%s2 + $0x200] sm:$0xff]
      %v374 = vld [vmem:[%s2 + $0x208] sm:$0xff]
      %v375 = vld [vmem:[%s2 + $0x210] sm:$0xff]
      %v376 = vld [vmem:[%s2 + $0x218] sm:$0xff]
      %v377 = vld [vmem:[%s2 + $0x220] sm:$0xff]
      %v378 = vld [vmem:[%s2 + $0x228] sm:$0xff]
      %v379 = vld [vmem:[%s2 + $0x230] sm:$0xff]
      %v380 = vld [vmem:[%s2 + $0x238] sm:$0xff]
      %v381 = vld [vmem:[%s2 + $0x240] sm:$0xff]
      %v382 = vld [vmem:[%s2 + $0x248] sm:$0xff]
      %v383 = vld [vmem:[%s2 + $0x250] sm:$0xff]
      %v384 = vld [vmem:[%s2 + $0x258] sm:$0xff]
      %v385 = vld [vmem:[%s2 + $0x260] sm:$0xff]
      %v386 = vld [vmem:[%s2 + $0x268] sm:$0xff]
      %v387 = vld [vmem:[%s2 + $0x270] sm:$0xff]
      %v388 = vld [vmem:[%s2 + $0x278] sm:$0xff]
      %v389 = vld [vmem:[%s2 + $0x280] sm:$0xff]
      %v390 = vld [vmem:[%s2 + $0x288] sm:$0xff]
      %v391 = vld [vmem:[%s2 + $0x290] sm:$0xff]
      %v392 = vld [vmem:[%s2 + $0x298] sm:$0xff]
      %v393 = vld [vmem:[%s2 + $0x2a0] sm:$0xff]
      %v394 = vld [vmem:[%s2 + $0x2a8] sm:$0xff]
      %v395 = vld [vmem:[%s2 + $0x2b0] sm:$0xff]
      %v396 = vld [vmem:[%s2 + $0x2b8] sm:$0xff]
      %v397 = vld [vmem:[%s2 + $0x2c0] sm:$0xff]
      %v398 = vld [vmem:[%s2 + $0x2c8] sm:$0xff]
      %v399 = vld [vmem:[%s2 + $0x2d0] sm:$0xff]
      %v400 = vld [vmem:[%s2 + $0x2d8] sm:$0xff]
      %v401 = vld [vmem:[%s2 + $0x2e0] sm:$0xff]
      %v402 = vld [vmem:[%s2 + $0x2e8] sm:$0xff]
      %v403 = vld [vmem:[%s2 + $0x2f0] sm:$0xff]
      %v404 = vld [vmem:[%s2 + $0x2f8] sm:$0xff]
      %v405 = vld [vmem:[%s2 + $0x300] sm:$0xff]
      %v406 = vld [vmem:[%s2 + $0x308] sm:$0xff]
      %v407 = vld [vmem:[%s2 + $0x310] sm:$0xff]
      %v408 = vld [vmem:[%s2 + $0x318] sm:$0xff]
      %v409 = vld [vmem:[%s2 + $0x320] sm:$0xff]
      %v410 = vld [vmem:[%s2 + $0x328] sm:$0xff]
      %v411 = vld [vmem:[%s2 + $0x330] sm:$0xff]
      %v412 = vld [vmem:[%s2 + $0x338] sm:$0xff]
      %v413 = vld [vmem:[%s2 + $0x340] sm:$0xff]
      %v414 = vld [vmem:[%s2 + $0x348] sm:$0xff]
      %v415 = vld [vmem:[%s2 + $0x350] sm:$0xff]
      %v416 = vld [vmem:[%s2 + $0x358] sm:$0xff]
      %v417 = vld [vmem:[%s2 + $0x360] sm:$0xff]
      %v418 = vld [vmem:[%s2 + $0x368] sm:$0xff]
      %v419 = vld [vmem:[%s2 + $0x370] sm:$0xff]
      %v420 = vld [vmem:[%s2 + $0x378] sm:$0xff]
      %v421 = vld [vmem:[%s2 + $0x380] sm:$0xff]
      %v422 = vld [vmem:[%s2 + $0x388] sm:$0xff]
      %v423 = vld [vmem:[%s2 + $0x390] sm:$0xff]
      %v424 = vld [vmem:[%s2 + $0x398] sm:$0xff]
      %v425 = vld [vmem:[%s2 + $0x3a0] sm:$0xff]
      %v426 = vld [vmem:[%s2 + $0x3a8] sm:$0xff]
      %v427 = vld [vmem:[%s2 + $0x3b0] sm:$0xff]
      %v428 = vld [vmem:[%s2 + $0x3b8] sm:$0xff]
      %v429 = vld [vmem:[%s2 + $0x3c0] sm:$0xff]
      %v430 = vld [vmem:[%s2 + $0x3c8] sm:$0xff]
      %v431 = vld [vmem:[%s2 + $0x3d0] sm:$0xff]
      %v432 = vld [vmem:[%s2 + $0x3d8] sm:$0xff]
      %v433 = vld [vmem:[%s2 + $0x3e0] sm:$0xff]
      %v434 = vld [vmem:[%s2 + $0x3e8] sm:$0xff]
      %v435 = vld [vmem:[%s2 + $0x3f0] sm:$0xff]
      %v436 = vld [vmem:[%s2 + $0x3f8] sm:$0xff]
      %v437 = vld [vmem:[%s2 + $0x400] sm:$0xff]
      %v438 = vld [vmem:[%s2 + $0x408] sm:$0xff]
      %v439 = vld [vmem:[%s2 + $0x410] sm:$0xff]
      %v440 = vld [vmem:[%s2 + $0x418] sm:$0xff]
      %v441 = vld [vmem:[%s2 + $0x420] sm:$0xff]
      %v442 = vld [vmem:[%s2 + $0x428] sm:$0xff]
      %v443 = vld [vmem:[%s2 + $0x430] sm:$0xff]
      %v444 = vld [vmem:[%s2 + $0x438] sm:$0xff]
      %v445 = vld [vmem:[%s2 + $0x440] sm:$0xff]
      %v446 = vld [vmem:[%s2 + $0x448] sm:$0xff]
      %v447 = vld [vmem:[%s2 + $0x450] sm:$0xff]
      %v448 = vld [vmem:[%s2 + $0x458] sm:$0xff]
      %v449 = vld [vmem:[%s2 + $0x460] sm:$0xff]
      %v450 = vld [vmem:[%s2 + $0x468] sm:$0xff]
      %v451 = vld [vmem:[%s2 + $0x470] sm:$0xff]
      %v452 = vld [vmem:[%s2 + $0x478] sm:$0xff]
      %v453 = vld [vmem:[%s2 + $0x480] sm:$0xff]
      %v454 = vld [vmem:[%s2 + $0x488] sm:$0xff]
      %v455 = vld [vmem:[%s2 + $0x490] sm:$0xff]
      %v456 = vld [vmem:[%s2 + $0x498] sm:$0xff]
      %v457 = vld [vmem:[%s2 + $0x4a0] sm:$0xff]
      %v458 = vld [vmem:[%s2 + $0x4a8] sm:$0xff]
      %v459 = vld [vmem:[%s2 + $0x4b0] sm:$0xff]
      %v460 = vld [vmem:[%s2 + $0x4b8] sm:$0xff]
      %v461 = vld [vmem:[%s2 + $0x4c0] sm:$0xff]
      %v462 = vld [vmem:[%s2 + $0x4c8] sm:$0xff]
      %v463 = vld [vmem:[%s2 + $0x4d0] sm:$0xff]
      %v464 = vld [vmem:[%s2 + $0x4d8] sm:$0xff]
      %v465 = vld [vmem:[%s2 + $0x4e0] sm:$0xff]
      %v466 = vld [vmem:[%s2 + $0x4e8] sm:$0xff]
      %v467 = vld [vmem:[%s2 + $0x4f0] sm:$0xff]
      %v468 = vld [vmem:[%s2 + $0x4f8] sm:$0xff]
      %v469 = vld [vmem:[%s2 + $0x500] sm:$0xff]
      %v470 = vld [vmem:[%s2 + $0x508] sm:$0xff]
      %v471 = vld [vmem:[%s2 + $0x510] sm:$0xff]
      %v472 = vld [vmem:[%s2 + $0x518] sm:$0xff]
      %v473 = vld [vmem:[%s2 + $0x520] sm:$0xff]
      %v474 = vld [vmem:[%s2 + $0x528] sm:$0xff]
      %v475 = vld [vmem:[%s2 + $0x530] sm:$0xff]
      %v476 = vld [vmem:[%s2 + $0x538] sm:$0xff]
      %v477 = vld [vmem:[%s2 + $0x540] sm:$0xff]
      %v478 = vld [vmem:[%s2 + $0x548] sm:$0xff]
      %v479 = vld [vmem:[%s2 + $0x550] sm:$0xff]
      %v480 = vld [vmem:[%s2 + $0x558] sm:$0xff]
      %v481 = vld [vmem:[%s2 + $0x560] sm:$0xff]
      %v482 = vld [vmem:[%s2 + $0x568] sm:$0xff]
      %v483 = vld [vmem:[%s2 + $0x570] sm:$0xff]
      %v484 = vld [vmem:[%s2 + $0x578] sm:$0xff]
      %v485 = vld [vmem:[%s2 + $0x580] sm:$0xff]
      %v486 = vld [vmem:[%s2 + $0x588] sm:$0xff]
      %v487 = vld [vmem:[%s2 + $0x590] sm:$0xff]
      %v488 = vld [vmem:[%s2 + $0x598] sm:$0xff]
      %v489 = vld [vmem:[%s2 + $0x5a0] sm:$0xff]
      %v490 = vld [vmem:[%s2 + $0x5a8] sm:$0xff]
      %v491 = vld [vmem:[%s2 + $0x5b0] sm:$0xff]
      %v492 = vld [vmem:[%s2 + $0x5b8] sm:$0xff]
      %v493 = vld [vmem:[%s2 + $0x5c0] sm:$0xff]
      %v494 = vld [vmem:[%s2 + $0x5c8] sm:$0xff]
      %v495 = vld [vmem:[%s2 + $0x5d0] sm:$0xff]
      %v496 = vld [vmem:[%s2 + $0x5d8] sm:$0xff]
      %v497 = vld [vmem:[%s2 + $0x5e0] sm:$0xff]
      %v498 = vld [vmem:[%s2 + $0x5e8] sm:$0xff]
      %v499 = vld [vmem:[%s2 + $0x5f0] sm:$0xff]
      %v500 = vld [vmem:[%s2 + $0x5f8] sm:$0xff]
      %v501 = vld [vmem:[%s2 + $0x600] sm:$0xff]
      %v502 = vld [vmem:[%s2 + $0x608] sm:$0xff]
      %v503 = vld [vmem:[%s2 + $0x610] sm:$0xff]
      %v504 = vld [vmem:[%s2 + $0x618] sm:$0xff]
      %v505 = vld [vmem:[%s2 + $0x620] sm:$0xff]
      %v506 = vld [vmem:[%s2 + $0x628] sm:$0xff]
      %v507 = vld [vmem:[%s2 + $0x630] sm:$0xff]
      %v508 = vld [vmem:[%s2 + $0x638] sm:$0xff]
      %v509 = vld [vmem:[%s2 + $0x640] sm:$0xff]
      %v510 = vld [vmem:[%s2 + $0x648] sm:$0xff]
      %v511 = vld [vmem:[%s2 + $0x650] sm:$0xff]
      %v512 = vld [vmem:[%s2 + $0x658] sm:$0xff]
      %v513 = vld [vmem:[%s2 + $0x660] sm:$0xff]
      %v514 = vld [vmem:[%s2 + $0x668] sm:$0xff]
      %v515 = vld [vmem:[%s2 + $0x670] sm:$0xff]
      %v516 = vld [vmem:[%s2 + $0x678] sm:$0xff]
      %v517 = vld [vmem:[%s2 + $0x680] sm:$0xff]
      %v518 = vld [vmem:[%s2 + $0x688] sm:$0xff]
      %v519 = vld [vmem:[%s2 + $0x690] sm:$0xff]
      %v520 = vld [vmem:[%s2 + $0x698] sm:$0xff]
      %v521 = vld [vmem:[%s2 + $0x6a0] sm:$0xff]
      %v522 = vld [vmem:[%s2 + $0x6a8] sm:$0xff]
      %v523 = vld [vmem:[%s2 + $0x6b0] sm:$0xff]
      %v524 = vld [vmem:[%s2 + $0x6b8] sm:$0xff]
      %v525 = vld [vmem:[%s2 + $0x6c0] sm:$0xff]
      %v526 = vld [vmem:[%s2 + $0x6c8] sm:$0xff]
      %v527 = vld [vmem:[%s2 + $0x6d0] sm:$0xff]
      %v528 = vld [vmem:[%s2 + $0x6d8] sm:$0xff]
      %v529 = vld [vmem:[%s2 + $0x6e0] sm:$0xff]
      %v530 = vld [vmem:[%s2 + $0x6e8] sm:$0xff]
      %v531 = vld [vmem:[%s2 + $0x6f0] sm:$0xff]
      %v532 = vld [vmem:[%s2 + $0x6f8] sm:$0xff]
      %v533 = vld [vmem:[%s2 + $0x700] sm:$0xff]
      %v534 = vld [vmem:[%s2 + $0x708] sm:$0xff]
      %v535 = vld [vmem:[%s2 + $0x710] sm:$0xff]
      %v536 = vld [vmem:[%s2 + $0x718] sm:$0xff]
      %v537 = vld [vmem:[%s2 + $0x720] sm:$0xff]
      %v538 = vld [vmem:[%s2 + $0x728] sm:$0xff]
      %v539 = vld [vmem:[%s2 + $0x730] sm:$0xff]
      %v540 = vld [vmem:[%s2 + $0x738] sm:$0xff]
      %v541 = vld [vmem:[%s2 + $0x740] sm:$0xff]
      %v542 = vld [vmem:[%s2 + $0x748] sm:$0xff]
      %v543 = vld [vmem:[%s2 + $0x750] sm:$0xff]
      %v544 = vld [vmem:[%s2 + $0x758] sm:$0xff]
      %v545 = vld [vmem:[%s2 + $0x760] sm:$0xff]
      %v546 = vld [vmem:[%s2 + $0x768] sm:$0xff]
      %v547 = vld [vmem:[%s2 + $0x770] sm:$0xff]
      %v548 = vld [vmem:[%s2 + $0x778] sm:$0xff]
      %v549 = vld [vmem:[%s2 + $0x780] sm:$0xff]
      %v550 = vld [vmem:[%s2 + $0x788] sm:$0xff]
      %v551 = vld [vmem:[%s2 + $0x790] sm:$0xff]
      %v552 = vld [vmem:[%s2 + $0x798] sm:$0xff]
      %v553 = vld [vmem:[%s2 + $0x7a0] sm:$0xff]
      %v554 = vld [vmem:[%s2 + $0x7a8] sm:$0xff]
      %v555 = vld [vmem:[%s2 + $0x7b0] sm:$0xff]
      %v556 = vld [vmem:[%s2 + $0x7b8] sm:$0xff]
      %v557 = vld [vmem:[%s2 + $0x7c0] sm:$0xff]
      %v558 = vld [vmem:[%s2 + $0x7c8] sm:$0xff]
      %v559 = vld [vmem:[%s2 + $0x7d0] sm:$0xff]
      %v560 = vld [vmem:[%s2 + $0x7d8] sm:$0xff]
      %v561 = vld [vmem:[%s2 + $0x7e0] sm:$0xff]
      %v562 = vld [vmem:[%s2 + $0x7e8] sm:$0xff]
      %v563 = vld [vmem:[%s2 + $0x7f0] sm:$0xff]
      %v564 = vld [vmem:[%s2 + $0x7f8] sm:$0xff]
      %v565 = vld [vmem:[%s3] sm:$0x1]
      %v567 = vlaneseq
      %v568 = vshrl.u32 %v567, 7
      %v569 = vsub.s32 0, %v568
      %v570 = vrot.slane %v565, %v569
      %572 = vmatprep.subr.mxu0 0.0
      %573 = vmatpush1.msra.mxu0 %v324
      %574 = vmatprep.subr.mxu0 0.0
      %575 = vmatpush1.msra.mxu0 %v323
      %576 = vmatprep.subr.mxu0 0.0
      %577 = vmatpush1.msra.mxu0 %v322
      %578 = vmatprep.subr.mxu0 0.0
      %579 = vmatpush1.msra.mxu0 %v321
      %580 = vmatprep.subr.mxu0 0.0
      %581 = vmatpush1.msra.mxu0 %v320
      %582 = vmatprep.subr.mxu0 0.0
      %583 = vmatpush1.msra.mxu0 %v319
      %584 = vmatprep.subr.mxu0 0.0
      %585 = vmatpush1.msra.mxu0 %v318
      %586 = vmatprep.subr.mxu0 0.0
      %587 = vmatpush1.msra.mxu0 %v317
      %588 = vmatprep.subr.mxu0 0.0
      %589 = vmatpush1.msra.mxu0 %v316
      %590 = vmatprep.subr.mxu0 0.0
      %591 = vmatpush1.msra.mxu0 %v315
      %592 = vmatprep.subr.mxu0 0.0
      %593 = vmatpush1.msra.mxu0 %v314
      %594 = vmatprep.subr.mxu0 0.0
      %595 = vmatpush1.msra.mxu0 %v313
      %596 = vmatprep.subr.mxu0 0.0
      %597 = vmatpush1.msra.mxu0 %v312
      %598 = vmatprep.subr.mxu0 0.0
      %599 = vmatpush1.msra.mxu0 %v311
      %600 = vmatprep.subr.mxu0 0.0
      %601 = vmatpush1.msra.mxu0 %v310
      %602 = vmatprep.subr.mxu0 0.0
      %603 = vmatpush1.msra.mxu0 %v309
      %604 = vmatprep.subr.mxu0 0.0
      %605 = vmatpush2.msra.mxu0 %v340
      %606 = vmatprep.subr.mxu0 0.0
      %607 = vmatpush2.msra.mxu0 %v339
      %608 = vmatprep.subr.mxu0 0.0
      %609 = vmatpush2.msra.mxu0 %v338
      %610 = vmatprep.subr.mxu0 0.0
      %611 = vmatpush2.msra.mxu0 %v337
      %612 = vmatprep.subr.mxu0 0.0
      %613 = vmatpush2.msra.mxu0 %v336
      %614 = vmatprep.subr.mxu0 0.0
      %615 = vmatpush2.msra.mxu0 %v335
      %616 = vmatprep.subr.mxu0 0.0
      %617 = vmatpush2.msra.mxu0 %v334
      %618 = vmatprep.subr.mxu0 0.0
      %619 = vmatpush2.msra.mxu0 %v333
      %620 = vmatprep.subr.mxu0 0.0
      %621 = vmatpush2.msra.mxu0 %v332
      %622 = vmatprep.subr.mxu0 0.0
      %623 = vmatpush2.msra.mxu0 %v331
      %624 = vmatprep.subr.mxu0 0.0
      %625 = vmatpush2.msra.mxu0 %v330
      %626 = vmatprep.subr.mxu0 0.0
      %627 = vmatpush2.msra.mxu0 %v329
      %628 = vmatprep.subr.mxu0 0.0
      %629 = vmatpush2.msra.mxu0 %v328
      %630 = vmatprep.subr.mxu0 0.0
      %631 = vmatpush2.msra.mxu0 %v327
      %632 = vmatprep.subr.mxu0 0.0
      %633 = vmatpush2.msra.mxu0 %v326
      %634 = vmatprep.subr.mxu0 0.0
      %635 = vmatpush2.msra.mxu0 %v325
      %636 = vmatprep.mubr.f32.mxu0 %v294
      %637 = vmatmul.mubr.f32.gmra.mxu0 %v293
      %v638 = vpop.f32.mrf.mxu0
      %v639 = vadd.f32 %v570, %v638
      %v640 = vpop.f32.mrf.mxu0
      %641 = vdwg.mxu0
      %642 = vmatprep.subr.mxu0 0.0
      %643 = vmatpush1.msra.mxu0 %v356
      %644 = vmatprep.subr.mxu0 0.0
      %645 = vmatpush1.msra.mxu0 %v355
      %646 = vmatprep.subr.mxu0 0.0
      %647 = vmatpush1.msra.mxu0 %v354
      %648 = vmatprep.subr.mxu0 0.0
      %649 = vmatpush1.msra.mxu0 %v353
      %650 = vmatprep.subr.mxu0 0.0
      %651 = vmatpush1.msra.mxu0 %v352
      %652 = vmatprep.subr.mxu0 0.0
      %653 = vmatpush1.msra.mxu0 %v351
      %654 = vmatprep.subr.mxu0 0.0
      %655 = vmatpush1.msra.mxu0 %v350
      %656 = vmatprep.subr.mxu0 0.0
      %657 = vmatpush1.msra.mxu0 %v349
      %658 = vmatprep.subr.mxu0 0.0
      %659 = vmatpush1.msra.mxu0 %v348
      %660 = vmatprep.subr.mxu0 0.0
      %661 = vmatpush1.msra.mxu0 %v347
      %662 = vmatprep.subr.mxu0 0.0
      %663 = vmatpush1.msra.mxu0 %v346
      %664 = vmatprep.subr.mxu0 0.0
      %665 = vmatpush1.msra.mxu0 %v345
      %666 = vmatprep.subr.mxu0 0.0
      %667 = vmatpush1.msra.mxu0 %v344
      %668 = vmatprep.subr.mxu0 0.0
      %669 = vmatpush1.msra.mxu0 %v343
      %670 = vmatprep.subr.mxu0 0.0
      %671 = vmatpush1.msra.mxu0 %v342
      %672 = vmatprep.subr.mxu0 0.0
      %673 = vmatpush1.msra.mxu0 %v341
      %674 = vmatprep.subr.mxu0 0.0
      %675 = vmatpush2.msra.mxu0 %v372
      %676 = vmatprep.subr.mxu0 0.0
      %677 = vmatpush2.msra.mxu0 %v371
      %678 = vmatprep.subr.mxu0 0.0
      %679 = vmatpush2.msra.mxu0 %v370
      %680 = vmatprep.subr.mxu0 0.0
      %681 = vmatpush2.msra.mxu0 %v369
      %682 = vmatprep.subr.mxu0 0.0
      %683 = vmatpush2.msra.mxu0 %v368
      %684 = vmatprep.subr.mxu0 0.0
      %685 = vmatpush2.msra.mxu0 %v367
      %686 = vmatprep.subr.mxu0 0.0
      %687 = vmatpush2.msra.mxu0 %v366
      %688 = vmatprep.subr.mxu0 0.0
      %689 = vmatpush2.msra.mxu0 %v365
      %690 = vmatprep.subr.mxu0 0.0
      %691 = vmatpush2.msra.mxu0 %v364
      %692 = vmatprep.subr.mxu0 0.0
      %693 = vmatpush2.msra.mxu0 %v363
      %694 = vmatprep.subr.mxu0 0.0
      %695 = vmatpush2.msra.mxu0 %v362
      %696 = vmatprep.subr.mxu0 0.0
      %697 = vmatpush2.msra.mxu0 %v361
      %698 = vmatprep.subr.mxu0 0.0
      %699 = vmatpush2.msra.mxu0 %v360
      %700 = vmatprep.subr.mxu0 0.0
      %701 = vmatpush2.msra.mxu0 %v359
      %702 = vmatprep.subr.mxu0 0.0
      %703 = vmatpush2.msra.mxu0 %v358
      %704 = vmatprep.subr.mxu0 0.0
      %705 = vmatpush2.msra.mxu0 %v357
      %706 = vmatprep.mubr.f32.mxu0 %v296
      %707 = vmatmul.mubr.f32.gmra.mxu0 %v295
      %v708 = vpop.f32.mrf.mxu0
      %v709 = vadd.f32 %v639, %v708
      %v710 = vpop.f32.mrf.mxu0
      %711 = vdwg.mxu0
      %712 = vmatprep.subr.mxu0 0.0
      %713 = vmatpush1.msra.mxu0 %v388
      %714 = vmatprep.subr.mxu0 0.0
      %715 = vmatpush1.msra.mxu0 %v387
      %716 = vmatprep.subr.mxu0 0.0
      %717 = vmatpush1.msra.mxu0 %v386
      %718 = vmatprep.subr.mxu0 0.0
      %719 = vmatpush1.msra.mxu0 %v385
      %720 = vmatprep.subr.mxu0 0.0
      %721 = vmatpush1.msra.mxu0 %v384
      %722 = vmatprep.subr.mxu0 0.0
      %723 = vmatpush1.msra.mxu0 %v383
      %724 = vmatprep.subr.mxu0 0.0
      %725 = vmatpush1.msra.mxu0 %v382
      %726 = vmatprep.subr.mxu0 0.0
      %727 = vmatpush1.msra.mxu0 %v381
      %728 = vmatprep.subr.mxu0 0.0
      %729 = vmatpush1.msra.mxu0 %v380
      %730 = vmatprep.subr.mxu0 0.0
      %731 = vmatpush1.msra.mxu0 %v379
      %732 = vmatprep.subr.mxu0 0.0
      %733 = vmatpush1.msra.mxu0 %v378
      %734 = vmatprep.subr.mxu0 0.0
      %735 = vmatpush1.msra.mxu0 %v377
      %736 = vmatprep.subr.mxu0 0.0
      %737 = vmatpush1.msra.mxu0 %v376
      %738 = vmatprep.subr.mxu0 0.0
      %739 = vmatpush1.msra.mxu0 %v375
      %740 = vmatprep.subr.mxu0 0.0
      %741 = vmatpush1.msra.mxu0 %v374
      %742 = vmatprep.subr.mxu0 0.0
      %743 = vmatpush1.msra.mxu0 %v373
      %744 = vmatprep.subr.mxu0 0.0
      %745 = vmatpush2.msra.mxu0 %v404
      %746 = vmatprep.subr.mxu0 0.0
      %747 = vmatpush2.msra.mxu0 %v403
      %748 = vmatprep.subr.mxu0 0.0
      %749 = vmatpush2.msra.mxu0 %v402
      %750 = vmatprep.subr.mxu0 0.0
      %751 = vmatpush2.msra.mxu0 %v401
      %752 = vmatprep.subr.mxu0 0.0
      %753 = vmatpush2.msra.mxu0 %v400
      %754 = vmatprep.subr.mxu0 0.0
      %755 = vmatpush2.msra.mxu0 %v399
      %756 = vmatprep.subr.mxu0 0.0
      %757 = vmatpush2.msra.mxu0 %v398
      %758 = vmatprep.subr.mxu0 0.0
      %759 = vmatpush2.msra.mxu0 %v397
      %760 = vmatprep.subr.mxu0 0.0
      %761 = vmatpush2.msra.mxu0 %v396
      %762 = vmatprep.subr.mxu0 0.0
      %763 = vmatpush2.msra.mxu0 %v395
      %764 = vmatprep.subr.mxu0 0.0
      %765 = vmatpush2.msra.mxu0 %v394
      %766 = vmatprep.subr.mxu0 0.0
      %767 = vmatpush2.msra.mxu0 %v393
      %768 = vmatprep.subr.mxu0 0.0
      %769 = vmatpush2.msra.mxu0 %v392
      %770 = vmatprep.subr.mxu0 0.0
      %771 = vmatpush2.msra.mxu0 %v391
      %772 = vmatprep.subr.mxu0 0.0
      %773 = vmatpush2.msra.mxu0 %v390
      %774 = vmatprep.subr.mxu0 0.0
      %775 = vmatpush2.msra.mxu0 %v389
      %776 = vmatprep.mubr.f32.mxu0 %v298
      %777 = vmatmul.mubr.f32.gmra.mxu0 %v297
      %v778 = vpop.f32.mrf.mxu0
      %v779 = vadd.f32 %v709, %v778
      %v780 = vpop.f32.mrf.mxu0
      %781 = vdwg.mxu0
      %782 = vmatprep.subr.mxu0 0.0
      %783 = vmatpush1.msra.mxu0 %v420
      %784 = vmatprep.subr.mxu0 0.0
      %785 = vmatpush1.msra.mxu0 %v419
      %786 = vmatprep.subr.mxu0 0.0
      %787 = vmatpush1.msra.mxu0 %v418
      %788 = vmatprep.subr.mxu0 0.0
      %789 = vmatpush1.msra.mxu0 %v417
      %790 = vmatprep.subr.mxu0 0.0
      %791 = vmatpush1.msra.mxu0 %v416
      %792 = vmatprep.subr.mxu0 0.0
      %793 = vmatpush1.msra.mxu0 %v415
      %794 = vmatprep.subr.mxu0 0.0
      %795 = vmatpush1.msra.mxu0 %v414
      %796 = vmatprep.subr.mxu0 0.0
      %797 = vmatpush1.msra.mxu0 %v413
      %798 = vmatprep.subr.mxu0 0.0
      %799 = vmatpush1.msra.mxu0 %v412
      %800 = vmatprep.subr.mxu0 0.0
      %801 = vmatpush1.msra.mxu0 %v411
      %802 = vmatprep.subr.mxu0 0.0
      %803 = vmatpush1.msra.mxu0 %v410
      %804 = vmatprep.subr.mxu0 0.0
      %805 = vmatpush1.msra.mxu0 %v409
      %806 = vmatprep.subr.mxu0 0.0
      %807 = vmatpush1.msra.mxu0 %v408
      %808 = vmatprep.subr.mxu0 0.0
      %809 = vmatpush1.msra.mxu0 %v407
      %810 = vmatprep.subr.mxu0 0.0
      %811 = vmatpush1.msra.mxu0 %v406
      %812 = vmatprep.subr.mxu0 0.0
      %813 = vmatpush1.msra.mxu0 %v405
      %814 = vmatprep.subr.mxu0 0.0
      %815 = vmatpush2.msra.mxu0 %v436
      %816 = vmatprep.subr.mxu0 0.0
      %817 = vmatpush2.msra.mxu0 %v435
      %818 = vmatprep.subr.mxu0 0.0
      %819 = vmatpush2.msra.mxu0 %v434
      %820 = vmatprep.subr.mxu0 0.0
      %821 = vmatpush2.msra.mxu0 %v433
      %822 = vmatprep.subr.mxu0 0.0
      %823 = vmatpush2.msra.mxu0 %v432
      %824 = vmatprep.subr.mxu0 0.0
      %825 = vmatpush2.msra.mxu0 %v431
      %826 = vmatprep.subr.mxu0 0.0
      %827 = vmatpush2.msra.mxu0 %v430
      %828 = vmatprep.subr.mxu0 0.0
      %829 = vmatpush2.msra.mxu0 %v429
      %830 = vmatprep.subr.mxu0 0.0
      %831 = vmatpush2.msra.mxu0 %v428
      %832 = vmatprep.subr.mxu0 0.0
      %833 = vmatpush2.msra.mxu0 %v427
      %834 = vmatprep.subr.mxu0 0.0
      %835 = vmatpush2.msra.mxu0 %v426
      %836 = vmatprep.subr.mxu0 0.0
      %837 = vmatpush2.msra.mxu0 %v425
      %838 = vmatprep.subr.mxu0 0.0
      %839 = vmatpush2.msra.mxu0 %v424
      %840 = vmatprep.subr.mxu0 0.0
      %841 = vmatpush2.msra.mxu0 %v423
      %842 = vmatprep.subr.mxu0 0.0
      %843 = vmatpush2.msra.mxu0 %v422
      %844 = vmatprep.subr.mxu0 0.0
      %845 = vmatpush2.msra.mxu0 %v421
      %846 = vmatprep.mubr.f32.mxu0 %v300
      %847 = vmatmul.mubr.f32.gmra.mxu0 %v299
      %v848 = vpop.f32.mrf.mxu0
      %v849 = vadd.f32 %v779, %v848
      %v850 = vpop.f32.mrf.mxu0
      %851 = vdwg.mxu0
      %852 = vmatprep.subr.mxu0 0.0
      %853 = vmatpush1.msra.mxu0 %v452
      %854 = vmatprep.subr.mxu0 0.0
      %855 = vmatpush1.msra.mxu0 %v451
      %856 = vmatprep.subr.mxu0 0.0
      %857 = vmatpush1.msra.mxu0 %v450
      %858 = vmatprep.subr.mxu0 0.0
      %859 = vmatpush1.msra.mxu0 %v449
      %860 = vmatprep.subr.mxu0 0.0
      %861 = vmatpush1.msra.mxu0 %v448
      %862 = vmatprep.subr.mxu0 0.0
      %863 = vmatpush1.msra.mxu0 %v447
      %864 = vmatprep.subr.mxu0 0.0
      %865 = vmatpush1.msra.mxu0 %v446
      %866 = vmatprep.subr.mxu0 0.0
      %867 = vmatpush1.msra.mxu0 %v445
      %868 = vmatprep.subr.mxu0 0.0
      %869 = vmatpush1.msra.mxu0 %v444
      %870 = vmatprep.subr.mxu0 0.0
      %871 = vmatpush1.msra.mxu0 %v443
      %872 = vmatprep.subr.mxu0 0.0
      %873 = vmatpush1.msra.mxu0 %v442
      %874 = vmatprep.subr.mxu0 0.0
      %875 = vmatpush1.msra.mxu0 %v441
      %876 = vmatprep.subr.mxu0 0.0
      %877 = vmatpush1.msra.mxu0 %v440
      %878 = vmatprep.subr.mxu0 0.0
      %879 = vmatpush1.msra.mxu0 %v439
      %880 = vmatprep.subr.mxu0 0.0
      %881 = vmatpush1.msra.mxu0 %v438
      %882 = vmatprep.subr.mxu0 0.0
      %883 = vmatpush1.msra.mxu0 %v437
      %884 = vmatprep.subr.mxu0 0.0
      %885 = vmatpush2.msra.mxu0 %v468
      %886 = vmatprep.subr.mxu0 0.0
      %887 = vmatpush2.msra.mxu0 %v467
      %888 = vmatprep.subr.mxu0 0.0
      %889 = vmatpush2.msra.mxu0 %v466
      %890 = vmatprep.subr.mxu0 0.0
      %891 = vmatpush2.msra.mxu0 %v465
      %892 = vmatprep.subr.mxu0 0.0
      %893 = vmatpush2.msra.mxu0 %v464
      %894 = vmatprep.subr.mxu0 0.0
      %895 = vmatpush2.msra.mxu0 %v463
      %896 = vmatprep.subr.mxu0 0.0
      %897 = vmatpush2.msra.mxu0 %v462
      %898 = vmatprep.subr.mxu0 0.0
      %899 = vmatpush2.msra.mxu0 %v461
      %900 = vmatprep.subr.mxu0 0.0
      %901 = vmatpush2.msra.mxu0 %v460
      %902 = vmatprep.subr.mxu0 0.0
      %903 = vmatpush2.msra.mxu0 %v459
      %904 = vmatprep.subr.mxu0 0.0
      %905 = vmatpush2.msra.mxu0 %v458
      %906 = vmatprep.subr.mxu0 0.0
      %907 = vmatpush2.msra.mxu0 %v457
      %908 = vmatprep.subr.mxu0 0.0
      %909 = vmatpush2.msra.mxu0 %v456
      %910 = vmatprep.subr.mxu0 0.0
      %911 = vmatpush2.msra.mxu0 %v455
      %912 = vmatprep.subr.mxu0 0.0
      %913 = vmatpush2.msra.mxu0 %v454
      %914 = vmatprep.subr.mxu0 0.0
      %915 = vmatpush2.msra.mxu0 %v453
      %916 = vmatprep.mubr.f32.mxu0 %v302
      %917 = vmatmul.mubr.f32.gmra.mxu0 %v301
      %v918 = vpop.f32.mrf.mxu0
      %v919 = vadd.f32 %v849, %v918
      %v920 = vpop.f32.mrf.mxu0
      %921 = vdwg.mxu0
      %922 = vmatprep.subr.mxu0 0.0
      %923 = vmatpush1.msra.mxu0 %v484
      %924 = vmatprep.subr.mxu0 0.0
      %925 = vmatpush1.msra.mxu0 %v483
      %926 = vmatprep.subr.mxu0 0.0
      %927 = vmatpush1.msra.mxu0 %v482
      %928 = vmatprep.subr.mxu0 0.0
      %929 = vmatpush1.msra.mxu0 %v481
      %930 = vmatprep.subr.mxu0 0.0
      %931 = vmatpush1.msra.mxu0 %v480
      %932 = vmatprep.subr.mxu0 0.0
      %933 = vmatpush1.msra.mxu0 %v479
      %934 = vmatprep.subr.mxu0 0.0
      %935 = vmatpush1.msra.mxu0 %v478
      %936 = vmatprep.subr.mxu0 0.0
      %937 = vmatpush1.msra.mxu0 %v477
      %938 = vmatprep.subr.mxu0 0.0
      %939 = vmatpush1.msra.mxu0 %v476
      %940 = vmatprep.subr.mxu0 0.0
      %941 = vmatpush1.msra.mxu0 %v475
      %942 = vmatprep.subr.mxu0 0.0
      %943 = vmatpush1.msra.mxu0 %v474
      %944 = vmatprep.subr.mxu0 0.0
      %945 = vmatpush1.msra.mxu0 %v473
      %946 = vmatprep.subr.mxu0 0.0
      %947 = vmatpush1.msra.mxu0 %v472
      %948 = vmatprep.subr.mxu0 0.0
      %949 = vmatpush1.msra.mxu0 %v471
      %950 = vmatprep.subr.mxu0 0.0
      %951 = vmatpush1.msra.mxu0 %v470
      %952 = vmatprep.subr.mxu0 0.0
      %953 = vmatpush1.msra.mxu0 %v469
      %954 = vmatprep.subr.mxu0 0.0
      %955 = vmatpush2.msra.mxu0 %v500
      %956 = vmatprep.subr.mxu0 0.0
      %957 = vmatpush2.msra.mxu0 %v499
      %958 = vmatprep.subr.mxu0 0.0
      %959 = vmatpush2.msra.mxu0 %v498
      %960 = vmatprep.subr.mxu0 0.0
      %961 = vmatpush2.msra.mxu0 %v497
      %962 = vmatprep.subr.mxu0 0.0
      %963 = vmatpush2.msra.mxu0 %v496
      %964 = vmatprep.subr.mxu0 0.0
      %965 = vmatpush2.msra.mxu0 %v495
      %966 = vmatprep.subr.mxu0 0.0
      %967 = vmatpush2.msra.mxu0 %v494
      %968 = vmatprep.subr.mxu0 0.0
      %969 = vmatpush2.msra.mxu0 %v493
      %970 = vmatprep.subr.mxu0 0.0
      %971 = vmatpush2.msra.mxu0 %v492
      %972 = vmatprep.subr.mxu0 0.0
      %973 = vmatpush2.msra.mxu0 %v491
      %974 = vmatprep.subr.mxu0 0.0
      %975 = vmatpush2.msra.mxu0 %v490
      %976 = vmatprep.subr.mxu0 0.0
      %977 = vmatpush2.msra.mxu0 %v489
      %978 = vmatprep.subr.mxu0 0.0
      %979 = vmatpush2.msra.mxu0 %v488
      %980 = vmatprep.subr.mxu0 0.0
      %981 = vmatpush2.msra.mxu0 %v487
      %982 = vmatprep.subr.mxu0 0.0
      %983 = vmatpush2.msra.mxu0 %v486
      %984 = vmatprep.subr.mxu0 0.0
      %985 = vmatpush2.msra.mxu0 %v485
      %986 = vmatprep.mubr.f32.mxu0 %v304
      %987 = vmatmul.mubr.f32.gmra.mxu0 %v303
      %v988 = vpop.f32.mrf.mxu0
      %v989 = vadd.f32 %v919, %v988
      %v990 = vpop.f32.mrf.mxu0
      %991 = vdwg.mxu0
      %992 = vmatprep.subr.mxu0 0.0
      %993 = vmatpush1.msra.mxu0 %v516
      %994 = vmatprep.subr.mxu0 0.0
      %995 = vmatpush1.msra.mxu0 %v515
      %996 = vmatprep.subr.mxu0 0.0
      %997 = vmatpush1.msra.mxu0 %v514
      %998 = vmatprep.subr.mxu0 0.0
      %999 = vmatpush1.msra.mxu0 %v513
      %1000 = vmatprep.subr.mxu0 0.0
      %1001 = vmatpush1.msra.mxu0 %v512
      %1002 = vmatprep.subr.mxu0 0.0
      %1003 = vmatpush1.msra.mxu0 %v511
      %1004 = vmatprep.subr.mxu0 0.0
      %1005 = vmatpush1.msra.mxu0 %v510
      %1006 = vmatprep.subr.mxu0 0.0
      %1007 = vmatpush1.msra.mxu0 %v509
      %1008 = vmatprep.subr.mxu0 0.0
      %1009 = vmatpush1.msra.mxu0 %v508
      %1010 = vmatprep.subr.mxu0 0.0
      %1011 = vmatpush1.msra.mxu0 %v507
      %1012 = vmatprep.subr.mxu0 0.0
      %1013 = vmatpush1.msra.mxu0 %v506
      %1014 = vmatprep.subr.mxu0 0.0
      %1015 = vmatpush1.msra.mxu0 %v505
      %1016 = vmatprep.subr.mxu0 0.0
      %1017 = vmatpush1.msra.mxu0 %v504
      %1018 = vmatprep.subr.mxu0 0.0
      %1019 = vmatpush1.msra.mxu0 %v503
      %1020 = vmatprep.subr.mxu0 0.0
      %1021 = vmatpush1.msra.mxu0 %v502
      %1022 = vmatprep.subr.mxu0 0.0
      %1023 = vmatpush1.msra.mxu0 %v501
      %1024 = vmatprep.subr.mxu0 0.0
      %1025 = vmatpush2.msra.mxu0 %v532
      %1026 = vmatprep.subr.mxu0 0.0
      %1027 = vmatpush2.msra.mxu0 %v531
      %1028 = vmatprep.subr.mxu0 0.0
      %1029 = vmatpush2.msra.mxu0 %v530
      %1030 = vmatprep.subr.mxu0 0.0
      %1031 = vmatpush2.msra.mxu0 %v529
      %1032 = vmatprep.subr.mxu0 0.0
      %1033 = vmatpush2.msra.mxu0 %v528
      %1034 = vmatprep.subr.mxu0 0.0
      %1035 = vmatpush2.msra.mxu0 %v527
      %1036 = vmatprep.subr.mxu0 0.0
      %1037 = vmatpush2.msra.mxu0 %v526
      %1038 = vmatprep.subr.mxu0 0.0
      %1039 = vmatpush2.msra.mxu0 %v525
      %1040 = vmatprep.subr.mxu0 0.0
      %1041 = vmatpush2.msra.mxu0 %v524
      %1042 = vmatprep.subr.mxu0 0.0
      %1043 = vmatpush2.msra.mxu0 %v523
      %1044 = vmatprep.subr.mxu0 0.0
      %1045 = vmatpush2.msra.mxu0 %v522
      %1046 = vmatprep.subr.mxu0 0.0
      %1047 = vmatpush2.msra.mxu0 %v521
      %1048 = vmatprep.subr.mxu0 0.0
      %1049 = vmatpush2.msra.mxu0 %v520
      %1050 = vmatprep.subr.mxu0 0.0
      %1051 = vmatpush2.msra.mxu0 %v519
      %1052 = vmatprep.subr.mxu0 0.0
      %1053 = vmatpush2.msra.mxu0 %v518
      %1054 = vmatprep.subr.mxu0 0.0
      %1055 = vmatpush2.msra.mxu0 %v517
      %1056 = vmatprep.mubr.f32.mxu0 %v306
      %1057 = vmatmul.mubr.f32.gmra.mxu0 %v305
      %v1058 = vpop.f32.mrf.mxu0
      %v1059 = vadd.f32 %v989, %v1058
      %v1060 = vpop.f32.mrf.mxu0
      %1061 = vdwg.mxu0
      %1062 = vmatprep.subr.mxu0 0.0
      %1063 = vmatpush1.msra.mxu0 %v548
      %1064 = vmatprep.subr.mxu0 0.0
      %1065 = vmatpush1.msra.mxu0 %v547
      %1066 = vmatprep.subr.mxu0 0.0
      %1067 = vmatpush1.msra.mxu0 %v546
      %1068 = vmatprep.subr.mxu0 0.0
      %1069 = vmatpush1.msra.mxu0 %v545
      %1070 = vmatprep.subr.mxu0 0.0
      %1071 = vmatpush1.msra.mxu0 %v544
      %1072 = vmatprep.subr.mxu0 0.0
      %1073 = vmatpush1.msra.mxu0 %v543
      %1074 = vmatprep.subr.mxu0 0.0
      %1075 = vmatpush1.msra.mxu0 %v542
      %1076 = vmatprep.subr.mxu0 0.0
      %1077 = vmatpush1.msra.mxu0 %v541
      %1078 = vmatprep.subr.mxu0 0.0
      %1079 = vmatpush1.msra.mxu0 %v540
      %1080 = vmatprep.subr.mxu0 0.0
      %1081 = vmatpush1.msra.mxu0 %v539
      %1082 = vmatprep.subr.mxu0 0.0
      %1083 = vmatpush1.msra.mxu0 %v538
      %1084 = vmatprep.subr.mxu0 0.0
      %1085 = vmatpush1.msra.mxu0 %v537
      %1086 = vmatprep.subr.mxu0 0.0
      %1087 = vmatpush1.msra.mxu0 %v536
      %1088 = vmatprep.subr.mxu0 0.0
      %1089 = vmatpush1.msra.mxu0 %v535
      %1090 = vmatprep.subr.mxu0 0.0
      %1091 = vmatpush1.msra.mxu0 %v534
      %1092 = vmatprep.subr.mxu0 0.0
      %1093 = vmatpush1.msra.mxu0 %v533
      %1094 = vmatprep.subr.mxu0 0.0
      %1095 = vmatpush2.msra.mxu0 %v564
      %1096 = vmatprep.subr.mxu0 0.0
      %1097 = vmatpush2.msra.mxu0 %v563
      %1098 = vmatprep.subr.mxu0 0.0
      %1099 = vmatpush2.msra.mxu0 %v562
      %1100 = vmatprep.subr.mxu0 0.0
      %1101 = vmatpush2.msra.mxu0 %v561
      %1102 = vmatprep.subr.mxu0 0.0
      %1103 = vmatpush2.msra.mxu0 %v560
      %1104 = vmatprep.subr.mxu0 0.0
      %1105 = vmatpush2.msra.mxu0 %v559
      %1106 = vmatprep.subr.mxu0 0.0
      %1107 = vmatpush2.msra.mxu0 %v558
      %1108 = vmatprep.subr.mxu0 0.0
      %1109 = vmatpush2.msra.mxu0 %v557
      %1110 = vmatprep.subr.mxu0 0.0
      %1111 = vmatpush2.msra.mxu0 %v556
      %1112 = vmatprep.subr.mxu0 0.0
      %1113 = vmatpush2.msra.mxu0 %v555
      %1114 = vmatprep.subr.mxu0 0.0
      %1115 = vmatpush2.msra.mxu0 %v554
      %1116 = vmatprep.subr.mxu0 0.0
      %1117 = vmatpush2.msra.mxu0 %v553
      %1118 = vmatprep.subr.mxu0 0.0
      %1119 = vmatpush2.msra.mxu0 %v552
      %1120 = vmatprep.subr.mxu0 0.0
      %1121 = vmatpush2.msra.mxu0 %v551
      %1122 = vmatprep.subr.mxu0 0.0
      %1123 = vmatpush2.msra.mxu0 %v550
      %1124 = vmatprep.subr.mxu0 0.0
      %1125 = vmatpush2.msra.mxu0 %v549
      %1126 = vmatprep.mubr.f32.mxu0 %v308
      %1127 = vmatmul.mubr.f32.gmra.mxu0 %v307
      %v1128 = vpop.f32.mrf.mxu0
      %v1129 = vadd.f32 %v1059, %v1128
      %v1130 = vpop.f32.mrf.mxu0
      %1131 = vdwg.mxu0
      %v1132 = vld [vmem:[%s287] sm:$0x1]
      %v1133 = vld [vmem:[%s4] sm:$0xff]
      %v1134 = vld [vmem:[%s4 + $0x8] sm:$0xff]
      %v1135 = vld [vmem:[%s4 + $0x10] sm:$0xff]
      %v1136 = vld [vmem:[%s4 + $0x18] sm:$0x7]
      %v1137 = vld [vmem:[%s5] sm:$0x1]
      %vm1138 = vcmask 220160
      %v1140 = vsel %vm1138, %v1132, 0
      %vm1142 = vcmask 1042432
      %v1144 = vsel %vm1142, %v1136, 0
      %1146 = vmatprep.subr.mxu0 0.0
      %1147 = vmatpush1.msra.mxu0 0.0
      %1148 = vmatprep.subr.mxu0 0.0
      %1149 = vmatpush1.msra.mxu0 0.0
      %1150 = vmatprep.subr.mxu0 0.0
      %1151 = vmatpush1.msra.mxu0 0.0
      %1152 = vmatprep.subr.mxu0 0.0
      %1153 = vmatpush1.msra.mxu0 0.0
      %1154 = vmatprep.subr.mxu0 0.0
      %1155 = vmatpush1.msra.mxu0 0.0
      %1156 = vmatprep.subr.mxu0 0.0
      %1157 = vmatpush1.msra.mxu0 0.0
      %1158 = vmatprep.subr.mxu0 0.0
      %1159 = vmatpush1.msra.mxu0 0.0
      %1160 = vmatprep.subr.mxu0 0.0
      %1161 = vmatpush1.msra.mxu0 0.0
      %1162 = vmatprep.subr.mxu0 0.0
      %1163 = vmatpush1.msra.mxu0 0.0
      %1164 = vmatprep.subr.mxu0 0.0
      %1165 = vmatpush1.msra.mxu0 0.0
      %1166 = vmatprep.subr.mxu0 0.0
      %1167 = vmatpush1.msra.mxu0 0.0
      %1168 = vmatprep.subr.mxu0 0.0
      %1169 = vmatpush1.msra.mxu0 0.0
      %1170 = vmatprep.subr.mxu0 0.0
      %1171 = vmatpush1.msra.mxu0 %v1144
      %1172 = vmatprep.subr.mxu0 0.0
      %1173 = vmatpush1.msra.mxu0 %v1135
      %1174 = vmatprep.subr.mxu0 0.0
      %1175 = vmatpush1.msra.mxu0 %v1134
      %1176 = vmatprep.subr.mxu0 0.0
      %1177 = vmatpush1.msra.mxu0 %v1133
      %1178 = vmatprep.subr.mxu0 0.0
      %1179 = vmatpush2.msra.mxu0 0.0
      %1180 = vmatprep.subr.mxu0 0.0
      %1181 = vmatpush2.msra.mxu0 0.0
      %1182 = vmatprep.subr.mxu0 0.0
      %1183 = vmatpush2.msra.mxu0 0.0
      %1184 = vmatprep.subr.mxu0 0.0
      %1185 = vmatpush2.msra.mxu0 0.0
      %1186 = vmatprep.subr.mxu0 0.0
      %1187 = vmatpush2.msra.mxu0 0.0
      %1188 = vmatprep.subr.mxu0 0.0
      %1189 = vmatpush2.msra.mxu0 0.0
      %1190 = vmatprep.subr.mxu0 0.0
      %1191 = vmatpush2.msra.mxu0 0.0
      %1192 = vmatprep.subr.mxu0 0.0
      %1193 = vmatpush2.msra.mxu0 0.0
      %1194 = vmatprep.subr.mxu0 0.0
      %1195 = vmatpush2.msra.mxu0 0.0
      %1196 = vmatprep.subr.mxu0 0.0
      %1197 = vmatpush2.msra.mxu0 0.0
      %1198 = vmatprep.subr.mxu0 0.0
      %1199 = vmatpush2.msra.mxu0 0.0
      %1200 = vmatprep.subr.mxu0 0.0
      %1201 = vmatpush2.msra.mxu0 0.0
      %1202 = vmatprep.subr.mxu0 0.0
      %1203 = vmatpush2.msra.mxu0 0.0
      %1204 = vmatprep.subr.mxu0 0.0
      %1205 = vmatpush2.msra.mxu0 0.0
      %1206 = vmatprep.subr.mxu0 0.0
      %1207 = vmatpush2.msra.mxu0 0.0
      %1208 = vmatprep.subr.mxu0 0.0
      %1209 = vmatpush2.msra.mxu0 0.0
      %1210 = vmatprep.mubr.f32.mxu0 0.0
      %1211 = vmatmul.mubr.f32.gmra.mxu0 %v1140
      %v1212 = vpop.f32.mrf.mxu0
      %v1213 = vadd.f32 %v1137, %v1212
      %v1214 = vpop.f32.mrf.mxu0
      %1215 = vdwg.mxu0
      %v1216 = vld [vmem:[%s6] sm:$0x1]
      %v1217 = vadd.f32 %v1213, %v1216
      %vm1218 = vcmask 253952
      %1219 = vst.msk [vmem:[%s292] sm:$0x1] %vm1218, %v1217
      %v1220 = vld [vmem:[%s6 + $0x1] sm:$0xff]
      %v1221 = vadd.f32 %v1129, %v1220
      %vm1222 = vcmask 261120
      %1223 = vst.msk [vmem:[%s292 + $0x1] sm:$0xff] %vm1222, %v1221
      %p1224 = scmp.lt.s32.totalorder %s18, 1
      %s1225 = scalar_select %p1224, %s18, 1
      %s1226 = smul.addr %s1225, 2
      %s1227 = smul.addr %s1226, 8
      %s1228 = scalar_lea.vmem %s7, %s1227
      // Predicated region
      $region49: #{vit_forward.2} parent=47 // pred_check
        %p1229 = pneg %p193
      $region50: #{vit_forward.2} parent=47 // pred_check_branch
        %1231 = sbr.rel (%p1229) target = $region52
      $region51: #{vit_forward.2} parent=47 // pred_region
        _
      $region52: #{vit_forward.2} parent=47 // pred_fallthru
        _
    $region48: #{vit_forward.2} parent=5 // pred_fallthru
      _
    %p1232 = scmp.le.s32.totalorder 2, %s13
    // Predicated region
    $region53: #{vit_forward.2} parent=5 // pred_check
      %p1233 = pneg %p1232
    $region54: #{vit_forward.2} parent=5 // pred_check_branch
      %1235 = sbr.rel (%p1233) target = $region56
    $region55: #{vit_forward.2} parent=5 // pred_region
      %s1236 = ssub.s32 %s13, 2
      // Predicated region
      $region57: #{vit_forward.2} parent=55 // pred_check
        %p1237 = pneg %p199
      $region58: #{vit_forward.2} parent=55 // pred_check_branch
        %1239 = sbr.rel (%p1237) target = $region60
      $region59: #{vit_forward.2} parent=55 // pred_region
        %p1240 = scmp.lt.s32.totalorder %s19, 1
        %s1241 = scalar_select %p1240, %s19, 1
        %s1242 = smul.addr %s1241, 2
        %s1243 = smul.addr %s1242, 8
        %s1244 = scalar_lea.vmem %s7, %s1243
      $region60: #{vit_forward.2} parent=55 // pred_fallthru
        _
    $region56: #{vit_forward.2} parent=5 // pred_fallthru
      _
  $region6: #{vit_forward.2} parent=0 // loop_footer
    %s17 = sadd.s32 1, %s13
  $region7: #{vit_forward.2} parent=0 // loop_footer_branch
    %12 = sbr.rel target = $region3
  $region8: #{vit_forward.2} parent=0 // loop_exit
    _

// kernel: vit_forward.3
$region0: #{vit_forward.3}
  #allocation0 [shape = 'u32[]', space=smem, size = 0x4, offset = 0x4, fixed_abs, tag = 'smem constant byte address 0x4 - core index']
  #allocation1 [shape = 'u32[144,128]{1,0:T(1,128)}', space=vmem, size = 0x12000, scoped, tag = 'internal scratch']
  #allocation2 [shape = 'f32[2,9,32]{2,1,0:T(8,128)}', space=vmem, size = 0x4000, scoped, tag = 'scratch operand']
  #allocation3 [shape = 'f32[9,32]{1,0:T(8,128)}', space=vmem, size = 0x2000, scoped, tag = 'scratch operand']
  %s0 = inlined_call_operand.vmem [shape: f32[2,9,32], index: 0, kind: input, shape index: {}]
  %s1 = inlined_call_operand.vmem [shape: f32[2,1,32], index: 1, kind: input, shape index: {}]
  %s2 = inlined_call_operand.vmem [shape: f32[2,1,32], index: 2, kind: input, shape index: {}]
  %s3 = inlined_call_operand.vmem [shape: bf16[2,32,96], index: 3, kind: input, shape index: {}]
  %s4 = inlined_call_operand.vmem [shape: bf16[2,32,32], index: 4, kind: input, shape index: {}]
  %s5 = inlined_call_operand.vmem [shape: f32[2,1,32], index: 5, kind: input, shape index: {}]
  %s6 = inlined_call_operand.vmem [shape: f32[2,1,32], index: 6, kind: input, shape index: {}]
  %s7 = inlined_call_operand.vmem [shape: f32[2,1,32], index: 7, kind: input, shape index: {}]
  %s8 = inlined_call_operand.vmem [shape: bf16[2,32,64], index: 8, kind: input, shape index: {}]
  %s9 = inlined_call_operand.vmem [shape: f32[2,1,64], index: 9, kind: input, shape index: {}]
  %s10 = inlined_call_operand.vmem [shape: bf16[2,64,32], index: 10, kind: input, shape index: {}]
  %s11 = inlined_call_operand.vmem [shape: f32[2,1,32], index: 11, kind: input, shape index: {}]
  %s12 = inlined_call_operand.vmem [shape: f32[1,1,32], index: 12, kind: input, shape index: {}]
  %s13 = inlined_call_operand.vmem [shape: f32[1,1,32], index: 13, kind: input, shape index: {}]
  %s14 = inlined_call_operand.vmem [shape: f32[2,9,32], index: 14, kind: output, shape index: {0}]
  %s15 = inlined_call_operand.vmem [shape: f32[2,2,9,32], index: 15, kind: output, shape index: {1}]
  %16 = xla_tuple %s14, %s15
  %s17 = sld [smem:[#allocation0]]
  $region105: #{vit_forward.3} parent=0
    _
  %s19 = ssub.s32 1, %s17
  %s20 = scalar_select 0, %s19, %s17
  loop: start=0, step=1, limit=6
  $region2: #{vit_forward.3} parent=0 // loop_pre_header
    _
  $region3: #{vit_forward.3} parent=0 // loop_header
    %s22 = sphi 0, %s26
    %p23 = scmp.ge.s32.totalorder %s22, 6
    %s29 = sphi 0, %s41
    %s30 = sphi 0, %s37
    %s31 = sphi 0, %s29
    %s32 = sphi 0, %s30
    %s33 = sphi 0, %s31
    %s34 = sphi 0, %s32
    %s42 = sphi 0, %s42
    %s44 = sphi 0, %s42
    %s45 = sphi 0, %s44
    %s59 = sphi 0, %s45
    %s65 = sphi 0, %s67
    %s68 = sphi 0, %s65
    %s69 = sphi 0, %s68
    %s85 = sphi 0, %s69
    %s91 = sphi 0, %s93
    %s94 = sphi 0, %s91
    %s95 = sphi 0, %s94
    %s111 = sphi 0, %s95
    %s117 = sphi 0, %s119
    %s120 = sphi 0, %s117
    %s121 = sphi 0, %s120
    %s137 = sphi 0, %s121
    %s143 = sphi 0, %s145
    %s146 = sphi 0, %s143
    %s147 = sphi 0, %s146
    %s163 = sphi 0, %s147
    %s169 = sphi 0, %s171
    %s172 = sphi 0, %s169
    %s173 = sphi 0, %s172
    %s189 = sphi 0, %s173
    %s195 = sphi 0, %s197
    %s198 = sphi 0, %s195
    %s199 = sphi 0, %s198
    %s215 = sphi 0, %s199
    %s221 = sphi 0, %s223
    %s224 = sphi 0, %s221
    %s225 = sphi 0, %s224
    %s241 = sphi 0, %s225
    %s247 = sphi 0, %s249
    %s250 = sphi 0, %s247
    %s251 = sphi 0, %s250
    %s267 = sphi 0, %s251
    %s273 = sphi 0, %s275
    %s276 = sphi 0, %s273
    %s277 = sphi 0, %s276
    %s293 = sphi 0, %s277
    %s299 = sphi 0, %s301
    %s302 = sphi 0, %s299
    %s303 = sphi 0, %s302
    %s319 = sphi 0, %s303
    %s325 = sphi 0, %s327
    %s328 = sphi 0, %s325
    %s329 = sphi 0, %s328
    %s345 = sphi 0, %s329
    %s349 = sphi 0, %s349
    %s351 = sphi 0, %s349
    %s352 = sphi 0, %s351
    %s366 = sphi 0, %s352
    %s370 = sphi 0, %s370
    %s372 = sphi 0, %s370
    %s373 = sphi 0, %s372
    %s387 = sphi 0, %s373
    %s391 = sphi 0, %s391
    %s393 = sphi 0, %s391
    %s394 = sphi 0, %s393
    %s408 = sphi 0, %s394
    %s416 = sphi 0, %s418
    %s419 = sphi 0, %s416
    %s420 = sphi 0, %s419
    %s436 = sphi 0, %s420
  $region4: #{vit_forward.3} parent=0 // loop_header_branch
    %25 = sbr.rel (%p23) target = $region8
  $region5: #{vit_forward.3} parent=0 // loop_body
    %s27 = ssub.s32 %s22, 1
    %s28 = ssub.s32 %s22, 2
    %s35 = sadd.s32 1, %s30
    %p36 = scmp.ge.s32.totalorder %s35, 2
    %s37 = scalar_select %p36, 0, %s35
    %s38 = sadd.s32 1, %s29
    %s39 = scalar_select %p36, %s38, %s29
    %p40 = scmp.ge.s32.totalorder %s39, 2
    %s41 = scalar_select %p40, 0, %s39
    %s43 = sadd.s32 %s42, 1
    %p46 = scmp.eq.s32.totalorder %s22, 3
    %p47 = scmp.ne.s32.totalorder %s42, %s44
    %p48 = scmp.eq.s32.totalorder %s22, 0
    %p49 = por %p47, %p48
    %p50 = scmp.ne.s32.totalorder %s42, %s44
    %p51 = scmp.eq.s32.totalorder %s27, 3
    %p52 = por %p50, %p51
    %p53 = scmp.ne.s32.totalorder %s44, %s45
    %p54 = scmp.eq.s32.totalorder %s27, 0
    %p55 = por %p53, %p54
    %p56 = scmp.ne.s32.totalorder %s44, %s45
    %p57 = scmp.eq.s32.totalorder %s28, 3
    %p58 = por %p56, %p57
    %p60 = scmp.ne.s32.totalorder %s45, %s59
    %p61 = scmp.eq.s32.totalorder %s28, 0
    %p62 = por %p60, %p61
    %s63 = ssub.s32 %s29, %s41
    %p64 = scmp.eq.s32.totalorder %s63, 0
    %s66 = sadd.s32 %s65, 1
    %s67 = scalar_select %p64, %s65, %s66
    %p70 = pneg %p64
    %p71 = scmp.eq.s32.totalorder %s22, 3
    %p72 = por %p70, %p71
    %p73 = scmp.ne.s32.totalorder %s65, %s68
    %p74 = scmp.eq.s32.totalorder %s22, 0
    %p75 = por %p73, %p74
    %p76 = scmp.ne.s32.totalorder %s65, %s68
    %p77 = scmp.eq.s32.totalorder %s27, 3
    %p78 = por %p76, %p77
    %p79 = scmp.ne.s32.totalorder %s68, %s69
    %p80 = scmp.eq.s32.totalorder %s27, 0
    %p81 = por %p79, %p80
    %p82 = scmp.ne.s32.totalorder %s68, %s69
    %p83 = scmp.eq.s32.totalorder %s28, 3
    %p84 = por %p82, %p83
    %p86 = scmp.ne.s32.totalorder %s69, %s85
    %p87 = scmp.eq.s32.totalorder %s28, 0
    %p88 = por %p86, %p87
    %s89 = ssub.s32 %s29, %s41
    %p90 = scmp.eq.s32.totalorder %s89, 0
    %s92 = sadd.s32 %s91, 1
    %s93 = scalar_select %p90, %s91, %s92
    %p96 = pneg %p90
    %p97 = scmp.eq.s32.totalorder %s22, 3
    %p98 = por %p96, %p97
    %p99 = scmp.ne.s32.totalorder %s91, %s94
    %p100 = scmp.eq.s32.totalorder %s22, 0
    %p101 = por %p99, %p100
    %p102 = scmp.ne.s32.totalorder %s91, %s94
    %p103 = scmp.eq.s32.totalorder %s27, 3
    %p104 = por %p102, %p103
    %p105 = scmp.ne.s32.totalorder %s94, %s95
    %p106 = scmp.eq.s32.totalorder %s27, 0
    %p107 = por %p105, %p106
    %p108 = scmp.ne.s32.totalorder %s94, %s95
    %p109 = scmp.eq.s32.totalorder %s28, 3
    %p110 = por %p108, %p109
    %p112 = scmp.ne.s32.totalorder %s95, %s111
    %p113 = scmp.eq.s32.totalorder %s28, 0
    %p114 = por %p112, %p113
    %s115 = ssub.s32 %s29, %s41
    %p116 = scmp.eq.s32.totalorder %s115, 0
    %s118 = sadd.s32 %s117, 1
    %s119 = scalar_select %p116, %s117, %s118
    %p122 = pneg %p116
    %p123 = scmp.eq.s32.totalorder %s22, 3
    %p124 = por %p122, %p123
    %p125 = scmp.ne.s32.totalorder %s117, %s120
    %p126 = scmp.eq.s32.totalorder %s22, 0
    %p127 = por %p125, %p126
    %p128 = scmp.ne.s32.totalorder %s117, %s120
    %p129 = scmp.eq.s32.totalorder %s27, 3
    %p130 = por %p128, %p129
    %p131 = scmp.ne.s32.totalorder %s120, %s121
    %p132 = scmp.eq.s32.totalorder %s27, 0
    %p133 = por %p131, %p132
    %p134 = scmp.ne.s32.totalorder %s120, %s121
    %p135 = scmp.eq.s32.totalorder %s28, 3
    %p136 = por %p134, %p135
    %p138 = scmp.ne.s32.totalorder %s121, %s137
    %p139 = scmp.eq.s32.totalorder %s28, 0
    %p140 = por %p138, %p139
    %s141 = ssub.s32 %s29, %s41
    %p142 = scmp.eq.s32.totalorder %s141, 0
    %s144 = sadd.s32 %s143, 1
    %s145 = scalar_select %p142, %s143, %s144
    %p148 = pneg %p142
    %p149 = scmp.eq.s32.totalorder %s22, 3
    %p150 = por %p148, %p149
    %p151 = scmp.ne.s32.totalorder %s143, %s146
    %p152 = scmp.eq.s32.totalorder %s22, 0
    %p153 = por %p151, %p152
    %p154 = scmp.ne.s32.totalorder %s143, %s146
    %p155 = scmp.eq.s32.totalorder %s27, 3
    %p156 = por %p154, %p155
    %p157 = scmp.ne.s32.totalorder %s146, %s147
    %p158 = scmp.eq.s32.totalorder %s27, 0
    %p159 = por %p157, %p158
    %p160 = scmp.ne.s32.totalorder %s146, %s147
    %p161 = scmp.eq.s32.totalorder %s28, 3
    %p162 = por %p160, %p161
    %p164 = scmp.ne.s32.totalorder %s147, %s163
    %p165 = scmp.eq.s32.totalorder %s28, 0
    %p166 = por %p164, %p165
    %s167 = ssub.s32 %s29, %s41
    %p168 = scmp.eq.s32.totalorder %s167, 0
    %s170 = sadd.s32 %s169, 1
    %s171 = scalar_select %p168, %s169, %s170
    %p174 = pneg %p168
    %p175 = scmp.eq.s32.totalorder %s22, 3
    %p176 = por %p174, %p175
    %p177 = scmp.ne.s32.totalorder %s169, %s172
    %p178 = scmp.eq.s32.totalorder %s22, 0
    %p179 = por %p177, %p178
    %p180 = scmp.ne.s32.totalorder %s169, %s172
    %p181 = scmp.eq.s32.totalorder %s27, 3
    %p182 = por %p180, %p181
    %p183 = scmp.ne.s32.totalorder %s172, %s173
    %p184 = scmp.eq.s32.totalorder %s27, 0
    %p185 = por %p183, %p184
    %p186 = scmp.ne.s32.totalorder %s172, %s173
    %p187 = scmp.eq.s32.totalorder %s28, 3
    %p188 = por %p186, %p187
    %p190 = scmp.ne.s32.totalorder %s173, %s189
    %p191 = scmp.eq.s32.totalorder %s28, 0
    %p192 = por %p190, %p191
    %s193 = ssub.s32 %s29, %s41
    %p194 = scmp.eq.s32.totalorder %s193, 0
    %s196 = sadd.s32 %s195, 1
    %s197 = scalar_select %p194, %s195, %s196
    %p200 = pneg %p194
    %p201 = scmp.eq.s32.totalorder %s22, 3
    %p202 = por %p200, %p201
    %p203 = scmp.ne.s32.totalorder %s195, %s198
    %p204 = scmp.eq.s32.totalorder %s22, 0
    %p205 = por %p203, %p204
    %p206 = scmp.ne.s32.totalorder %s195, %s198
    %p207 = scmp.eq.s32.totalorder %s27, 3
    %p208 = por %p206, %p207
    %p209 = scmp.ne.s32.totalorder %s198, %s199
    %p210 = scmp.eq.s32.totalorder %s27, 0
    %p211 = por %p209, %p210
    %p212 = scmp.ne.s32.totalorder %s198, %s199
    %p213 = scmp.eq.s32.totalorder %s28, 3
    %p214 = por %p212, %p213
    %p216 = scmp.ne.s32.totalorder %s199, %s215
    %p217 = scmp.eq.s32.totalorder %s28, 0
    %p218 = por %p216, %p217
    %s219 = ssub.s32 %s29, %s41
    %p220 = scmp.eq.s32.totalorder %s219, 0
    %s222 = sadd.s32 %s221, 1
    %s223 = scalar_select %p220, %s221, %s222
    %p226 = pneg %p220
    %p227 = scmp.eq.s32.totalorder %s22, 3
    %p228 = por %p226, %p227
    %p229 = scmp.ne.s32.totalorder %s221, %s224
    %p230 = scmp.eq.s32.totalorder %s22, 0
    %p231 = por %p229, %p230
    %p232 = scmp.ne.s32.totalorder %s221, %s224
    %p233 = scmp.eq.s32.totalorder %s27, 3
    %p234 = por %p232, %p233
    %p235 = scmp.ne.s32.totalorder %s224, %s225
    %p236 = scmp.eq.s32.totalorder %s27, 0
    %p237 = por %p235, %p236
    %p238 = scmp.ne.s32.totalorder %s224, %s225
    %p239 = scmp.eq.s32.totalorder %s28, 3
    %p240 = por %p238, %p239
    %p242 = scmp.ne.s32.totalorder %s225, %s241
    %p243 = scmp.eq.s32.totalorder %s28, 0
    %p244 = por %p242, %p243
    %s245 = ssub.s32 %s29, %s41
    %p246 = scmp.eq.s32.totalorder %s245, 0
    %s248 = sadd.s32 %s247, 1
    %s249 = scalar_select %p246, %s247, %s248
    %p252 = pneg %p246
    %p253 = scmp.eq.s32.totalorder %s22, 3
    %p254 = por %p252, %p253
    %p255 = scmp.ne.s32.totalorder %s247, %s250
    %p256 = scmp.eq.s32.totalorder %s22, 0
    %p257 = por %p255, %p256
    %p258 = scmp.ne.s32.totalorder %s247, %s250
    %p259 = scmp.eq.s32.totalorder %s27, 3
    %p260 = por %p258, %p259
    %p261 = scmp.ne.s32.totalorder %s250, %s251
    %p262 = scmp.eq.s32.totalorder %s27, 0
    %p263 = por %p261, %p262
    %p264 = scmp.ne.s32.totalorder %s250, %s251
    %p265 = scmp.eq.s32.totalorder %s28, 3
    %p266 = por %p264, %p265
    %p268 = scmp.ne.s32.totalorder %s251, %s267
    %p269 = scmp.eq.s32.totalorder %s28, 0
    %p270 = por %p268, %p269
    %s271 = ssub.s32 %s29, %s41
    %p272 = scmp.eq.s32.totalorder %s271, 0
    %s274 = sadd.s32 %s273, 1
    %s275 = scalar_select %p272, %s273, %s274
    %p278 = pneg %p272
    %p279 = scmp.eq.s32.totalorder %s22, 3
    %p280 = por %p278, %p279
    %p281 = scmp.ne.s32.totalorder %s273, %s276
    %p282 = scmp.eq.s32.totalorder %s22, 0
    %p283 = por %p281, %p282
    %p284 = scmp.ne.s32.totalorder %s273, %s276
    %p285 = scmp.eq.s32.totalorder %s27, 3
    %p286 = por %p284, %p285
    %p287 = scmp.ne.s32.totalorder %s276, %s277
    %p288 = scmp.eq.s32.totalorder %s27, 0
    %p289 = por %p287, %p288
    %p290 = scmp.ne.s32.totalorder %s276, %s277
    %p291 = scmp.eq.s32.totalorder %s28, 3
    %p292 = por %p290, %p291
    %p294 = scmp.ne.s32.totalorder %s277, %s293
    %p295 = scmp.eq.s32.totalorder %s28, 0
    %p296 = por %p294, %p295
    %s297 = ssub.s32 %s29, %s41
    %p298 = scmp.eq.s32.totalorder %s297, 0
    %s300 = sadd.s32 %s299, 1
    %s301 = scalar_select %p298, %s299, %s300
    %p304 = pneg %p298
    %p305 = scmp.eq.s32.totalorder %s22, 3
    %p306 = por %p304, %p305
    %p307 = scmp.ne.s32.totalorder %s299, %s302
    %p308 = scmp.eq.s32.totalorder %s22, 0
    %p309 = por %p307, %p308
    %p310 = scmp.ne.s32.totalorder %s299, %s302
    %p311 = scmp.eq.s32.totalorder %s27, 3
    %p312 = por %p310, %p311
    %p313 = scmp.ne.s32.totalorder %s302, %s303
    %p314 = scmp.eq.s32.totalorder %s27, 0
    %p315 = por %p313, %p314
    %p316 = scmp.ne.s32.totalorder %s302, %s303
    %p317 = scmp.eq.s32.totalorder %s28, 3
    %p318 = por %p316, %p317
    %p320 = scmp.ne.s32.totalorder %s303, %s319
    %p321 = scmp.eq.s32.totalorder %s28, 0
    %p322 = por %p320, %p321
    %s323 = ssub.s32 %s29, %s41
    %p324 = scmp.eq.s32.totalorder %s323, 0
    %s326 = sadd.s32 %s325, 1
    %s327 = scalar_select %p324, %s325, %s326
    %p330 = pneg %p324
    %p331 = scmp.eq.s32.totalorder %s22, 3
    %p332 = por %p330, %p331
    %p333 = scmp.ne.s32.totalorder %s325, %s328
    %p334 = scmp.eq.s32.totalorder %s22, 0
    %p335 = por %p333, %p334
    %p336 = scmp.ne.s32.totalorder %s325, %s328
    %p337 = scmp.eq.s32.totalorder %s27, 3
    %p338 = por %p336, %p337
    %p339 = scmp.ne.s32.totalorder %s328, %s329
    %p340 = scmp.eq.s32.totalorder %s27, 0
    %p341 = por %p339, %p340
    %p342 = scmp.ne.s32.totalorder %s328, %s329
    %p343 = scmp.eq.s32.totalorder %s28, 3
    %p344 = por %p342, %p343
    %p346 = scmp.ne.s32.totalorder %s329, %s345
    %p347 = scmp.eq.s32.totalorder %s28, 0
    %p348 = por %p346, %p347
    %s350 = sadd.s32 %s349, 1
    %p353 = scmp.eq.s32.totalorder %s22, 3
    %p354 = scmp.ne.s32.totalorder %s349, %s351
    %p355 = scmp.eq.s32.totalorder %s22, 0
    %p356 = por %p354, %p355
    %p357 = scmp.ne.s32.totalorder %s349, %s351
    %p358 = scmp.eq.s32.totalorder %s27, 3
    %p359 = por %p357, %p358
    %p360 = scmp.ne.s32.totalorder %s351, %s352
    %p361 = scmp.eq.s32.totalorder %s27, 0
    %p362 = por %p360, %p361
    %p363 = scmp.ne.s32.totalorder %s351, %s352
    %p364 = scmp.eq.s32.totalorder %s28, 3
    %p365 = por %p363, %p364
    %p367 = scmp.ne.s32.totalorder %s352, %s366
    %p368 = scmp.eq.s32.totalorder %s28, 0
    %p369 = por %p367, %p368
    %s371 = sadd.s32 %s370, 1
    %p374 = scmp.eq.s32.totalorder %s22, 3
    %p375 = scmp.ne.s32.totalorder %s370, %s372
    %p376 = scmp.eq.s32.totalorder %s22, 0
    %p377 = por %p375, %p376
    %p378 = scmp.ne.s32.totalorder %s370, %s372
    %p379 = scmp.eq.s32.totalorder %s27, 3
    %p380 = por %p378, %p379
    %p381 = scmp.ne.s32.totalorder %s372, %s373
    %p382 = scmp.eq.s32.totalorder %s27, 0
    %p383 = por %p381, %p382
    %p384 = scmp.ne.s32.totalorder %s372, %s373
    %p385 = scmp.eq.s32.totalorder %s28, 3
    %p386 = por %p384, %p385
    %p388 = scmp.ne.s32.totalorder %s373, %s387
    %p389 = scmp.eq.s32.totalorder %s28, 0
    %p390 = por %p388, %p389
    %s392 = sadd.s32 %s391, 1
    %p395 = scmp.eq.s32.totalorder %s22, 3
    %p396 = scmp.ne.s32.totalorder %s391, %s393
    %p397 = scmp.eq.s32.totalorder %s22, 0
    %p398 = por %p396, %p397
    %p399 = scmp.ne.s32.totalorder %s391, %s393
    %p400 = scmp.eq.s32.totalorder %s27, 3
    %p401 = por %p399, %p400
    %p402 = scmp.ne.s32.totalorder %s393, %s394
    %p403 = scmp.eq.s32.totalorder %s27, 0
    %p404 = por %p402, %p403
    %p405 = scmp.ne.s32.totalorder %s393, %s394
    %p406 = scmp.eq.s32.totalorder %s28, 3
    %p407 = por %p405, %p406
    %p409 = scmp.ne.s32.totalorder %s394, %s408
    %p410 = scmp.eq.s32.totalorder %s28, 0
    %p411 = por %p409, %p410
    %s412 = ssub.s32 %s29, %s41
    %s413 = ssub.s32 %s30, %s37
    %s414 = sor.u32 %s412, %s413
    %p415 = scmp.eq.s32.totalorder %s414, 0
    %s417 = sadd.s32 %s416, 1
    %s418 = scalar_select %p415, %s416, %s417
    %p421 = pneg %p415
    %p422 = scmp.eq.s32.totalorder %s22, 3
    %p423 = por %p421, %p422
    %p424 = scmp.ne.s32.totalorder %s416, %s419
    %p425 = scmp.eq.s32.totalorder %s22, 0
    %p426 = por %p424, %p425
    %p427 = scmp.ne.s32.totalorder %s416, %s419
    %p428 = scmp.eq.s32.totalorder %s27, 3
    %p429 = por %p427, %p428
    %p430 = scmp.ne.s32.totalorder %s419, %s420
    %p431 = scmp.eq.s32.totalorder %s27, 0
    %p432 = por %p430, %p431
    %p433 = scmp.ne.s32.totalorder %s419, %s420
    %p434 = scmp.eq.s32.totalorder %s28, 3
    %p435 = por %p433, %p434
    %p437 = scmp.ne.s32.totalorder %s420, %s436
    %p438 = scmp.eq.s32.totalorder %s28, 0
    %p439 = por %p437, %p438
    %p440 = scmp.le.s32.totalorder 1, %s22
    %p441 = scmp.lt.s32.totalorder %s22, 5
    %p442 = pnand %p440, %p441
    %p443 = pneg %p442
    // Predicated region
    $region9: #{vit_forward.3} parent=5 // pred_check
      _
    $region10: #{vit_forward.3} parent=5 // pred_check_branch
      %445 = sbr.rel (%p442) target = $region12
    $region11: #{vit_forward.3} parent=5 // pred_region
      %s446 = ssub.s32 %s22, 1
      // Predicated region
      $region13: #{vit_forward.3} parent=11 // pred_check
        %p447 = pneg %p55
      $region14: #{vit_forward.3} parent=11 // pred_check_branch
        %449 = sbr.rel (%p447) target = $region16
      $region15: #{vit_forward.3} parent=11 // pred_region
        _
      $region16: #{vit_forward.3} parent=11 // pred_fallthru
        _
      // Predicated region
      $region17: #{vit_forward.3} parent=11 // pred_check
        %p450 = pneg %p362
      $region18: #{vit_forward.3} parent=11 // pred_check_branch
        %452 = sbr.rel (%p450) target = $region20
      $region19: #{vit_forward.3} parent=11 // pred_region
        _
      $region20: #{vit_forward.3} parent=11 // pred_fallthru
        _
      // Predicated region
      $region21: #{vit_forward.3} parent=11 // pred_check
        %p453 = pneg %p383
      $region22: #{vit_forward.3} parent=11 // pred_check_branch
        %455 = sbr.rel (%p453) target = $region24
      $region23: #{vit_forward.3} parent=11 // pred_region
        _
      $region24: #{vit_forward.3} parent=11 // pred_fallthru
        _
    $region12: #{vit_forward.3} parent=5 // pred_fallthru
      _
    %p456 = scmp.lt.s32.totalorder %s22, 4
    // Predicated region
    $region25: #{vit_forward.3} parent=5 // pred_check
      %p457 = pneg %p456
    $region26: #{vit_forward.3} parent=5 // pred_check_branch
      %459 = sbr.rel (%p457) target = $region28
    $region27: #{vit_forward.3} parent=5 // pred_region
      // Predicated region
      $region29: #{vit_forward.3} parent=27 // pred_check
        %p460 = pneg %p75
      $region30: #{vit_forward.3} parent=27 // pred_check_branch
        %462 = sbr.rel (%p460) target = $region32
      $region31: #{vit_forward.3} parent=27 // pred_region
        %p463 = scmp.lt.s32.totalorder %s29, 1
        %s464 = scalar_select %p463, %s29, 1
        %s465 = scalar_lea.vmem %s1, %s464
      $region32: #{vit_forward.3} parent=27 // pred_fallthru
        _
      // Predicated region
      $region33: #{vit_forward.3} parent=27 // pred_check
        %p466 = pneg %p101
      $region34: #{vit_forward.3} parent=27 // pred_check_branch
        %468 = sbr.rel (%p466) target = $region36
      $region35: #{vit_forward.3} parent=27 // pred_region
        %p469 = scmp.lt.s32.totalorder %s29, 1
        %s470 = scalar_select %p469, %s29, 1
        %s471 = scalar_lea.vmem %s2, %s470
      $region36: #{vit_forward.3} parent=27 // pred_fallthru
        _
      // Predicated region
      $region37: #{vit_forward.3} parent=27 // pred_check
        %p472 = pneg %p127
      $region38: #{vit_forward.3} parent=27 // pred_check_branch
        %474 = sbr.rel (%p472) target = $region40
      $region39: #{vit_forward.3} parent=27 // pred_region
        %p475 = scmp.lt.s32.totalorder %s29, 1
        %s476 = scalar_select %p475, %s29, 1
        %s477 = smul.addr %s476, 4
        %s478 = smul.addr %s477, 4
        %s479 = scalar_lea.vmem %s3, %s478
      $region40: #{vit_forward.3} parent=27 // pred_fallthru
        _
      // Predicated region
      $region41: #{vit_forward.3} parent=27 // pred_check
        %p480 = pneg %p153
      $region42: #{vit_forward.3} parent=27 // pred_check_branch
        %482 = sbr.rel (%p480) target = $region44
      $region43: #{vit_forward.3} parent=27 // pred_region
        %p483 = scmp.lt.s32.totalorder %s29, 1
        %s484 = scalar_select %p483, %s29, 1
        %s485 = smul.addr %s484, 4
        %s486 = smul.addr %s485, 4
        %s487 = scalar_lea.vmem %s4, %s486
      $region44: #{vit_forward.3} parent=27 // pred_fallthru
        _
      // Predicated region
      $region45: #{vit_forward.3} parent=27 // pred_check
        %p488 = pneg %p179
      $region46: #{vit_forward.3} parent=27 // pred_check_branch
        %490 = sbr.rel (%p488) target = $region48
      $region47: #{vit_forward.3} parent=27 // pred_region
        %p491 = scmp.lt.s32.totalorder %s29, 1
        %s492 = scalar_select %p491, %s29, 1
        %s493 = scalar_lea.vmem %s5, %s492
      $region48: #{vit_forward.3} parent=27 // pred_fallthru
        _
      // Predicated region
      $region49: #{vit_forward.3} parent=27 // pred_check
        %p494 = pneg %p205
      $region50: #{vit_forward.3} parent=27 // pred_check_branch
        %496 = sbr.rel (%p494) target = $region52
      $region51: #{vit_forward.3} parent=27 // pred_region
        %p497 = scmp.lt.s32.totalorder %s29, 1
        %s498 = scalar_select %p497, %s29, 1
        %s499 = scalar_lea.vmem %s6, %s498
      $region52: #{vit_forward.3} parent=27 // pred_fallthru
        _
      // Predicated region
      $region53: #{vit_forward.3} parent=27 // pred_check
        %p500 = pneg %p231
      $region54: #{vit_forward.3} parent=27 // pred_check_branch
        %502 = sbr.rel (%p500) target = $region56
      $region55: #{vit_forward.3} parent=27 // pred_region
        %p503 = scmp.lt.s32.totalorder %s29, 1
        %s504 = scalar_select %p503, %s29, 1
        %s505 = scalar_lea.vmem %s7, %s504
      $region56: #{vit_forward.3} parent=27 // pred_fallthru
        _
      // Predicated region
      $region57: #{vit_forward.3} parent=27 // pred_check
        %p506 = pneg %p257
      $region58: #{vit_forward.3} parent=27 // pred_check_branch
        %508 = sbr.rel (%p506) target = $region60
      $region59: #{vit_forward.3} parent=27 // pred_region
        %p509 = scmp.lt.s32.totalorder %s29, 1
        %s510 = scalar_select %p509, %s29, 1
        %s511 = smul.addr %s510, 4
        %s512 = smul.addr %s511, 4
        %s513 = scalar_lea.vmem %s8, %s512
      $region60: #{vit_forward.3} parent=27 // pred_fallthru
        _
      // Predicated region
      $region61: #{vit_forward.3} parent=27 // pred_check
        %p514 = pneg %p283
      $region62: #{vit_forward.3} parent=27 // pred_check_branch
        %516 = sbr.rel (%p514) target = $region64
      $region63: #{vit_forward.3} parent=27 // pred_region
        %p517 = scmp.lt.s32.totalorder %s29, 1
        %s518 = scalar_select %p517, %s29, 1
        %s519 = scalar_lea.vmem %s9, %s518
      $region64: #{vit_forward.3} parent=27 // pred_fallthru
        _
      // Predicated region
      $region65: #{vit_forward.3} parent=27 // pred_check
        %p520 = pneg %p309
      $region66: #{vit_forward.3} parent=27 // pred_check_branch
        %522 = sbr.rel (%p520) target = $region68
      $region67: #{vit_forward.3} parent=27 // pred_region
        %p523 = scmp.lt.s32.totalorder %s29, 1
        %s524 = scalar_select %p523, %s29, 1
        %s525 = smul.addr %s524, 8
        %s526 = smul.addr %s525, 4
        %s527 = scalar_lea.vmem %s10, %s526
      $region68: #{vit_forward.3} parent=27 // pred_fallthru
        _
      // Predicated region
      $region69: #{vit_forward.3} parent=27 // pred_check
        %p528 = pneg %p335
      $region70: #{vit_forward.3} parent=27 // pred_check_branch
        %530 = sbr.rel (%p528) target = $region72
      $region71: #{vit_forward.3} parent=27 // pred_region
        %p531 = scmp.lt.s32.totalorder %s29, 1
        %s532 = scalar_select %p531, %s29, 1
        %s533 = scalar_lea.vmem %s11, %s532
      $region72: #{vit_forward.3} parent=27 // pred_fallthru
        _
    $region28: #{vit_forward.3} parent=5 // pred_fallthru
      _
    %p534 = scmp.le.s32.totalorder 1, %s22
    %p535 = scmp.lt.s32.totalorder %s22, 5
    %p536 = pnand %p534, %p535
    %p537 = pneg %p536
    // Predicated region
    $region73: #{vit_forward.3} parent=5 // pred_check
      _
    $region74: #{vit_forward.3} parent=5 // pred_check_branch
      %539 = sbr.rel (%p536) target = $region76
    $region75: #{vit_forward.3} parent=5 // pred_region
      %s540 = ssub.s32 %s22, 1
      %p541 = pneg %p55
      %p542 = pneg %p52
      %p543 = scmp.lt.s32.totalorder %s31, 1
      %s544 = scalar_select %p543, %s31, 1
      %s545 = scalar_lea.vmem %s1, %s544
      %p546 = pneg %p81
      %p547 = pneg %p78
      %p548 = scmp.lt.s32.totalorder %s31, 1
      %s549 = scalar_select %p548, %s31, 1
      %s550 = scalar_lea.vmem %s2, %s549
      %p551 = pneg %p107
      %p552 = pneg %p104
      %p553 = scmp.lt.s32.totalorder %s31, 1
      %s554 = scalar_select %p553, %s31, 1
      %s555 = smul.addr %s554, 4
      %s556 = smul.addr %s555, 4
      %s557 = scalar_lea.vmem %s3, %s556
      %p558 = pneg %p133
      %p559 = pneg %p130
      %p560 = scmp.lt.s32.totalorder %s31, 1
      %s561 = scalar_select %p560, %s31, 1
      %s562 = smul.addr %s561, 4
      %s563 = smul.addr %s562, 4
      %s564 = scalar_lea.vmem %s4, %s563
      %p565 = pneg %p159
      %p566 = pneg %p156
      %p567 = scmp.lt.s32.totalorder %s31, 1
      %s568 = scalar_select %p567, %s31, 1
      %s569 = scalar_lea.vmem %s5, %s568
      %p570 = pneg %p185
      %p571 = pneg %p182
      %p572 = scmp.lt.s32.totalorder %s31, 1
      %s573 = scalar_select %p572, %s31, 1
      %s574 = scalar_lea.vmem %s6, %s573
      %p575 = pneg %p211
      %p576 = pneg %p208
      %p577 = scmp.lt.s32.totalorder %s31, 1
      %s578 = scalar_select %p577, %s31, 1
      %s579 = scalar_lea.vmem %s7, %s578
      %p580 = pneg %p237
      %p581 = pneg %p234
      %p582 = scmp.lt.s32.totalorder %s31, 1
      %s583 = scalar_select %p582, %s31, 1
      %s584 = smul.addr %s583, 4
      %s585 = smul.addr %s584, 4
      %s586 = scalar_lea.vmem %s8, %s585
      %p587 = pneg %p263
      %p588 = pneg %p260
      %p589 = scmp.lt.s32.totalorder %s31, 1
      %s590 = scalar_select %p589, %s31, 1
      %s591 = scalar_lea.vmem %s9, %s590
      %p592 = pneg %p289
      %p593 = pneg %p286
      %p594 = scmp.lt.s32.totalorder %s31, 1
      %s595 = scalar_select %p594, %s31, 1
      %s596 = smul.addr %s595, 8
      %s597 = smul.addr %s596, 4
      %s598 = scalar_lea.vmem %s10, %s597
      %p599 = pneg %p315
      %p600 = pneg %p312
      %p601 = scmp.lt.s32.totalorder %s31, 1
      %s602 = scalar_select %p601, %s31, 1
      %s603 = scalar_lea.vmem %s11, %s602
      %p604 = pneg %p341
      %p605 = pneg %p338
      %p606 = pneg %p362
      %p607 = pneg %p359
      %p608 = pneg %p383
      %p609 = pneg %p380
      %p610 = pneg %p404
      %p611 = pneg %p401
      %p612 = pneg %p432
      %p613 = pneg %p429
      %p614 = scmp.lt.s32.totalorder %s31, 1
      %s615 = scalar_select %p614, %s31, 1
      %p616 = scmp.lt.s32.totalorder %s32, 1
      %s617 = scalar_select %p616, %s32, 1
      %s618 = smul.addr %s617, 2
      %s619 = smul.addr %s615, 4
      %s620 = sadd.s32 %s618, %s619
      %s621 = smul.addr %s620, 8
      %s622 = scalar_lea.vmem %s15, %s621
      %p623 = scmp.lt.s32.totalorder %s31, 1
      %s624 = scalar_select %p623, %s31, 1
      %s625 = scalar_lea.vmem %s1, %s624
      %p626 = scmp.lt.s32.totalorder %s31, 1
      %s627 = scalar_select %p626, %s31, 1
      %s628 = scalar_lea.vmem %s2, %s627
      %p629 = scmp.lt.s32.totalorder %s31, 1
      %s630 = scalar_select %p629, %s31, 1
      %s631 = smul.addr %s630, 4
      %s632 = smul.addr %s631, 4
      %s633 = scalar_lea.vmem %s3, %s632
      %p634 = scmp.lt.s32.totalorder %s31, 1
      %s635 = scalar_select %p634, %s31, 1
      %s636 = smul.addr %s635, 4
      %s637 = smul.addr %s636, 4
      %s638 = scalar_lea.vmem %s4, %s637
      %p639 = scmp.lt.s32.totalorder %s31, 1
      %s640 = scalar_select %p639, %s31, 1
      %s641 = scalar_lea.vmem %s5, %s640
      %p642 = scmp.lt.s32.totalorder %s31, 1
      %s643 = scalar_select %p642, %s31, 1
      %s644 = scalar_lea.vmem %s6, %s643
      %p645 = scmp.lt.s32.totalorder %s31, 1
      %s646 = scalar_select %p645, %s31, 1
      %s647 = scalar_lea.vmem %s7, %s646
      %p648 = scmp.lt.s32.totalorder %s31, 1
      %s649 = scalar_select %p648, %s31, 1
      %s650 = smul.addr %s649, 4
      %s651 = smul.addr %s650, 4
      %s652 = scalar_lea.vmem %s8, %s651
      %p653 = scmp.lt.s32.totalorder %s31, 1
      %s654 = scalar_select %p653, %s31, 1
      %s655 = scalar_lea.vmem %s9, %s654
      %p656 = scmp.lt.s32.totalorder %s31, 1
      %s657 = scalar_select %p656, %s31, 1
      %s658 = smul.addr %s657, 8
      %s659 = smul.addr %s658, 4
      %s660 = scalar_lea.vmem %s10, %s659
      %p661 = scmp.lt.s32.totalorder %s31, 1
      %s662 = scalar_select %p661, %s31, 1
      %s663 = scalar_lea.vmem %s11, %s662
      %p664 = scmp.lt.s32.totalorder %s31, 1
      %s665 = scalar_select %p664, %s31, 1
      %p666 = scmp.lt.s32.totalorder %s32, 1
      %s667 = scalar_select %p666, %s32, 1
      %s668 = smul.addr %s667, 2
      %s669 = smul.addr %s665, 4
      %s670 = sadd.s32 %s668, %s669
      %s671 = smul.addr %s670, 8
      %s672 = scalar_lea.vmem %s15, %s671
      %p674 = scmp.eq.s32.totalorder %s31, 0
      // Predicated region
      $region77: #{vit_forward.3} parent=75 // pred_check
        %p675 = pneg %p674
      $region78: #{vit_forward.3} parent=75 // pred_check_branch
        %677 = sbr.rel (%p675) target = $region80
      $region79: #{vit_forward.3} parent=75 // pred_region
        %s678 = smul.u32 %s32, 16
        %s679 = scalar_lea.vmem %s0, %s678
        %v680 = vld [vmem:[%s679] sm:$0xff]
        %v681 = vld [vmem:[%s679 + $0x8] sm:$0x1]
        %s682 = scalar_lea.vmem [#allocation2], %s678
        %vm683 = vcmask 261120
        %684 = vst.msk [vmem:[%s682] sm:$0xff] %vm683, %v680
        %vm685 = vcmask 253952
        %686 = vst.msk [vmem:[%s682 + $0x8] sm:$0x1] %vm685, %v681
      $region80: #{vit_forward.3} parent=75 // pred_fallthru
        _
      %s687 = smul.u32 %s32, 16
      %s688 = scalar_lea.vmem [#allocation2], %s687
      %v689 = vld [vmem:[%s688] sm:$0xff]
      %v690 = vld [vmem:[%s688 + $0x8] sm:$0x1]
      %v691 = vld [vmem:[%s625] sm:$0x1]
      %v692 = vld [vmem:[%s628] sm:$0x1]
      %vm693 = vcmask 261120
      %v694 = vsel %vm693, %v689, 0.0
      %695 = vadd.xlane.f32.xlu0 %v694
      %v696 = vpop.xlane.xlu0 %695
      %vm697 = vcmask 253952
      %v698 = vsel %vm697, %v690, 0.0
      %699 = vadd.xlane.f32.xlu0 %v698
      %v700 = vpop.xlane.xlu0 %699
      %v701 = vrcp.pop 32.0
      %v702 = vmul.f32 %v696, %v701
      %v703 = vmul.f32 %v700, %v701
      %v704 = vsub.f32 %v689, %v702
      %v705 = vsub.f32 %v690, %v703
      %v706 = vmul.f32 %v704, %v704
      %v707 = vmul.f32 %v705, %v705
      %v708 = vsel %vm693, %v706, 0.0
      %709 = vadd.xlane.f32.xlu0 %v708
      %v710 = vpop.xlane.xlu0 %709
      %v711 = vsel %vm697, %v707, 0.0
      %712 = vadd.xlane.f32.xlu0 %v711
      %v713 = vpop.xlane.xlu0 %712
      %v714 = vmul.f32 %v710, %v701
      %v715 = vmul.f32 %v713, %v701
      %v716 = vadd.f32 %v714, 1e-05
      %v717 = vadd.f32 %v715, 1e-05
      %v718 = vrsqrt.pop %v716
      %v719 = vrsqrt.pop %v717
      %v720 = vmul.f32 %v704, %v718
      %v721 = vmul.f32 %v705, %v719
      %v723 = vlaneseq
      %v724 = vshrl.u32 %v723, 7
      %v725 = vsub.s32 0, %v724
      %v726 = vrot.slane %v691, %v725
      %v728 = vmul.f32 %v720, %v726
      %v729 = vmul.f32 %v721, %v726
      %v731 = vlaneseq
      %v732 = vshrl.u32 %v731, 7
      %v733 = vsub.s32 0, %v732
      %v734 = vrot.slane %v692, %v733
      %v736 = vadd.f32 %v728, %v734
      %v737 = vadd.f32 %v729, %v734
      %v738 = vpack.c.bf16 %v737, %v736
      %v739 = vld [vmem:[%s633] sm:$0xf]
      %v740 = vld [vmem:[%s633 + $0x4] sm:$0xf]
      %v741 = vld [vmem:[%s633 + $0x8] sm:$0xf]
      %v742 = vld [vmem:[%s633 + $0xc] sm:$0xf]
      %v747 = vunpack.c.l.b16 %v739
      %v748 = vunpack.c.l.b16 %v740
      %v749 = vunpack.c.l.b16 %v741
      %v750 = vunpack.c.l.b16 %v742
      %v751 = vpack.c.b16 %v748, %v747
      %v752 = vpack.c.b16 %v750, %v749
      %v756 = vsel %vm693, %v738, 0
      %758 = vmatprep.subr.bf16.mxu0 0
      %759 = vmatpush1.bf16.msra.mxu0 0
      %760 = vmatprep.subr.bf16.mxu0 0
      %761 = vmatpush1.bf16.msra.mxu0 0
      %762 = vmatprep.subr.bf16.mxu0 0
      %763 = vmatpush1.bf16.msra.mxu0 0
      %764 = vmatprep.subr.bf16.mxu0 0
      %765 = vmatpush1.bf16.msra.mxu0 0
      %766 = vmatprep.subr.bf16.mxu0 0
      %767 = vmatpush1.bf16.msra.mxu0 0
      %768 = vmatprep.subr.bf16.mxu0 0
      %769 = vmatpush1.bf16.msra.mxu0 0
      %770 = vmatprep.subr.bf16.mxu0 0
      %771 = vmatpush1.bf16.msra.mxu0 %v752
      %772 = vmatprep.subr.bf16.mxu0 0
      %773 = vmatpush1.bf16.msra.mxu0 %v751
      %774 = vmatprep.subr.bf16.mxu0 0
      %775 = vmatpush2.bf16.msra.mxu0 0
      %776 = vmatprep.subr.bf16.mxu0 0
      %777 = vmatpush2.bf16.msra.mxu0 0
      %778 = vmatprep.subr.bf16.mxu0 0
      %779 = vmatpush2.bf16.msra.mxu0 0
      %780 = vmatprep.subr.bf16.mxu0 0
      %781 = vmatpush2.bf16.msra.mxu0 0
      %782 = vmatprep.subr.bf16.mxu0 0
      %783 = vmatpush2.bf16.msra.mxu0 0
      %784 = vmatprep.subr.bf16.mxu0 0
      %785 = vmatpush2.bf16.msra.mxu0 0
      %786 = vmatprep.subr.bf16.mxu0 0
      %787 = vmatpush2.bf16.msra.mxu0 0
      %788 = vmatprep.subr.bf16.mxu0 0
      %789 = vmatpush2.bf16.msra.mxu0 0
      %790 = vmatprep.mubr.bf16.mxu0 0
      %791 = vmatmul.mubr.bf16.gmra.mxu0 %v756
      %v792 = vpop.f32.mrf.mxu0
      %v793 = vadd.f32 0.0, %v792
      %v794 = vpop.f32.mrf.mxu0
      %v795 = vpop.f32.mrf.mxu0
      %v796 = vadd.f32 0.0, %v795
      %v797 = vpop.f32.mrf.mxu0
      %798 = vdwg.mxu0
      %801 = vrot.lane.b32.xlu0 %v793, 96
      %v802 = vpop.permute.xlu0 %801
      %803 = vrot.lane.b32.xlu0 %v796, 96
      %v804 = vpop.permute.xlu0 %803
      %vm805 = vcmask 64512
      %v806 = vsel %vm805, %v793, 0
      %v808 = vsel %vm805, %v796, 0
      %v810 = vsel %vm805, %v802, 0
      %v812 = vsel %vm805, %v804, 0
      %814 = vmatprep.subr.mxu0 0.0
      %815 = vmatpush1.xpose.msra.mxu0 0.0
      %816 = vmatprep.subr.mxu0 0.0
      %817 = vmatpush1.xpose.msra.mxu0 0.0
      %818 = vmatprep.subr.mxu0 0.0
      %819 = vmatpush1.xpose.msra.mxu0 0.0
      %820 = vmatprep.subr.mxu0 0.0
      %821 = vmatpush1.xpose.msra.mxu0 0.0
      %822 = vmatprep.subr.mxu0 0.0
      %823 = vmatpush1.xpose.msra.mxu0 0.0
      %824 = vmatprep.subr.mxu0 0.0
      %825 = vmatpush1.xpose.msra.mxu0 0.0
      %826 = vmatprep.subr.mxu0 0.0
      %827 = vmatpush1.xpose.msra.mxu0 0.0
      %828 = vmatprep.subr.mxu0 0.0
      %829 = vmatpush1.xpose.msra.mxu0 0.0
      %830 = vmatprep.subr.mxu0 0.0
      %831 = vmatpush1.xpose.msra.mxu0 0.0
      %832 = vmatprep.subr.mxu0 0.0
      %833 = vmatpush1.xpose.msra.mxu0 0.0
      %834 = vmatprep.subr.mxu0 0.0
      %835 = vmatpush1.xpose.msra.mxu0 0.0
      %836 = vmatprep.subr.mxu0 0.0
      %837 = vmatpush1.xpose.msra.mxu0 0.0
      %838 = vmatprep.subr.mxu0 0.0
      %839 = vmatpush1.xpose.msra.mxu0 0.0
      %840 = vmatprep.subr.mxu0 0.0
      %841 = vmatpush1.xpose.msra.mxu0 0.0
      %842 = vmatprep.subr.mxu0 0.0
      %843 = vmatpush1.xpose.msra.mxu0 %v812
      %844 = vmatprep.subr.mxu0 0.0
      %845 = vmatpush1.xpose.msra.mxu0 %v810
      %846 = vmatprep.subr.mxu0 0.0
      %847 = vmatpush2.xpose.msra.mxu0 0.0
      %848 = vmatprep.subr.mxu0 0.0
      %849 = vmatpush2.xpose.msra.mxu0 0.0
      %850 = vmatprep.subr.mxu0 0.0
      %851 = vmatpush2.xpose.msra.mxu0 0.0
      %852 = vmatprep.subr.mxu0 0.0
      %853 = vmatpush2.xpose.msra.mxu0 0.0
      %854 = vmatprep.subr.mxu0 0.0
      %855 = vmatpush2.xpose.msra.mxu0 0.0
      %856 = vmatprep.subr.mxu0 0.0
      %857 = vmatpush2.xpose.msra.mxu0 0.0
      %858 = vmatprep.subr.mxu0 0.0
      %859 = vmatpush2.xpose.msra.mxu0 0.0
      %860 = vmatprep.subr.mxu0 0.0
      %861 = vmatpush2.xpose.msra.mxu0 0.0
      %862 = vmatprep.subr.mxu0 0.0
      %863 = vmatpush2.xpose.msra.mxu0 0.0
      %864 = vmatprep.subr.mxu0 0.0
      %865 = vmatpush2.xpose.msra.mxu0 0.0
      %866 = vmatprep.subr.mxu0 0.0
      %867 = vmatpush2.xpose.msra.mxu0 0.0
      %868 = vmatprep.subr.mxu0 0.0
      %869 = vmatpush2.xpose.msra.mxu0 0.0
      %870 = vmatprep.subr.mxu0 0.0
      %871 = vmatpush2.xpose.msra.mxu0 0.0
      %872 = vmatprep.subr.mxu0 0.0
      %873 = vmatpush2.xpose.msra.mxu0 0.0
      %874 = vmatprep.subr.mxu0 0.0
      %875 = vmatpush2.xpose.msra.mxu0 0.0
      %876 = vmatprep.subr.mxu0 0.0
      %877 = vmatpush2.xpose.msra.mxu0 0.0
      %878 = vmatprep.mubr.f32.mxu0 0.0
      %879 = vmatmul.mubr.f32.gmra.mxu0 %v806
      %v880 = vpop.f32.mrf.mxu0
      %v881 = vadd.f32 0.0, %v880
      %v882 = vpop.f32.mrf.mxu0
      %883 = vmatprep.mubr.f32.mxu0 0.0
      %884 = vmatmul.mubr.f32.gmra.mxu0 %v808
      %v885 = vpop.f32.mrf.mxu0
      %v886 = vadd.f32 0.0, %v885
      %v887 = vpop.f32.mrf.mxu0
      %888 = vdwg.mxu0
      %v889 = vmul.f32 %v881, 0.35355338
      %v890 = vmul.f32 %v886, 0.35355338
      %vm891 = vcmask 72704
      %v892 = vsel %vm891, %v889, -inf
      %893 = vmax.xlane.f32.xlu0 %v892
      %v894 = vpop.xlane.xlu0 %893
      %vm895 = vcmask 65536
      %v896 = vsel %vm895, %v890, -inf
      %897 = vmax.xlane.f32.xlu0 %v896
      %v898 = vpop.xlane.xlu0 %897
      %v899 = vsub.f32 %v889, %v894
      %v900 = vsub.f32 %v890, %v898
      %v901 = vmul.f32 %v899, 1.442695
      %v902 = vpow.pop %v901
      %v903 = vmul.f32 %v900, 1.442695
      %v904 = vpow.pop %v903
      %v905 = vsel %vm891, %v902, 0.0
      %906 = vadd.xlane.f32.xlu0 %v905
      %v907 = vpop.xlane.xlu0 %906
      %v908 = vsel %vm895, %v904, 0.0
      %909 = vadd.xlane.f32.xlu0 %v908
      %v910 = vpop.xlane.xlu0 %909
      %v911 = vrcp.pop %v907
      %v912 = vrcp.pop %v910
      %v913 = vmul.f32 %v902, %v911
      %v914 = vmul.f32 %v904, %v912
      %915 = vrot.lane.b32.xlu0 %v793, 64
      %v916 = vpop.permute.xlu0 %915
      %917 = vrot.lane.b32.xlu0 %v796, 64
      %v918 = vpop.permute.xlu0 %917
      %v921 = vsel %vm891, %v913, 0
      %v924 = vsel %vm891, %v914, 0
      %vm926 = vcmask 1040384
      %v927 = vsel %vm926, %v918, 0
      %929 = vmatprep.subr.mxu0 0.0
      %930 = vmatpush1.msra.mxu0 0.0
      %931 = vmatprep.subr.mxu0 0.0
      %932 = vmatpush1.msra.mxu0 0.0
      %933 = vmatprep.subr.mxu0 0.0
      %934 = vmatpush1.msra.mxu0 0.0
      %935 = vmatprep.subr.mxu0 0.0
      %936 = vmatpush1.msra.mxu0 0.0
      %937 = vmatprep.subr.mxu0 0.0
      %938 = vmatpush1.msra.mxu0 0.0
      %939 = vmatprep.subr.mxu0 0.0
      %940 = vmatpush1.msra.mxu0 0.0
      %941 = vmatprep.subr.mxu0 0.0
      %942 = vmatpush1.msra.mxu0 0.0
      %943 = vmatprep.subr.mxu0 0.0
      %944 = vmatpush1.msra.mxu0 0.0
      %945 = vmatprep.subr.mxu0 0.0
      %946 = vmatpush1.msra.mxu0 0.0
      %947 = vmatprep.subr.mxu0 0.0
      %948 = vmatpush1.msra.mxu0 0.0
      %949 = vmatprep.subr.mxu0 0.0
      %950 = vmatpush1.msra.mxu0 0.0
      %951 = vmatprep.subr.mxu0 0.0
      %952 = vmatpush1.msra.mxu0 0.0
      %953 = vmatprep.subr.mxu0 0.0
      %954 = vmatpush1.msra.mxu0 0.0
      %955 = vmatprep.subr.mxu0 0.0
      %956 = vmatpush1.msra.mxu0 0.0
      %957 = vmatprep.subr.mxu0 0.0
      %958 = vmatpush1.msra.mxu0 %v927
      %959 = vmatprep.subr.mxu0 0.0
      %960 = vmatpush1.msra.mxu0 %v916
      %961 = vmatprep.subr.mxu0 0.0
      %962 = vmatpush2.msra.mxu0 0.0
      %963 = vmatprep.subr.mxu0 0.0
      %964 = vmatpush2.msra.mxu0 0.0
      %965 = vmatprep.subr.mxu0 0.0
      %966 = vmatpush2.msra.mxu0 0.0
      %967 = vmatprep.subr.mxu0 0.0
      %968 = vmatpush2.msra.mxu0 0.0
      %969 = vmatprep.subr.mxu0 0.0
      %970 = vmatpush2.msra.mxu0 0.0
      %971 = vmatprep.subr.mxu0 0.0
      %972 = vmatpush2.msra.mxu0 0.0
      %973 = vmatprep.subr.mxu0 0.0
      %974 = vmatpush2.msra.mxu0 0.0
      %975 = vmatprep.subr.mxu0 0.0
      %976 = vmatpush2.msra.mxu0 0.0
      %977 = vmatprep.subr.mxu0 0.0
      %978 = vmatpush2.msra.mxu0 0.0
      %979 = vmatprep.subr.mxu0 0.0
      %980 = vmatpush2.msra.mxu0 0.0
      %981 = vmatprep.subr.mxu0 0.0
      %982 = vmatpush2.msra.mxu0 0.0
      %983 = vmatprep.subr.mxu0 0.0
      %984 = vmatpush2.msra.mxu0 0.0
      %985 = vmatprep.subr.mxu0 0.0
      %986 = vmatpush2.msra.mxu0 0.0
      %987 = vmatprep.subr.mxu0 0.0
      %988 = vmatpush2.msra.mxu0 0.0
      %989 = vmatprep.subr.mxu0 0.0
      %990 = vmatpush2.msra.mxu0 0.0
      %991 = vmatprep.subr.mxu0 0.0
      %992 = vmatpush2.msra.mxu0 0.0
      %993 = vmatprep.mubr.f32.mxu0 0.0
      %994 = vmatmul.mubr.f32.gmra.mxu0 %v921
      %v995 = vpop.f32.mrf.mxu0
      %v996 = vadd.f32 0.0, %v995
      %v997 = vpop.f32.mrf.mxu0
      %998 = vmatprep.mubr.f32.mxu0 0.0
      %999 = vmatmul.mubr.f32.gmra.mxu0 %v924
      %v1000 = vpop.f32.mrf.mxu0
      %v1001 = vadd.f32 0.0, %v1000
      %v1002 = vpop.f32.mrf.mxu0
      %1003 = vdwg.mxu0
      %1004 = vst.msk [vmem:[#allocation3] sm:$0xff] %vm805, %v996
      %vm1005 = vcmask 57344
      %1006 = vst.msk [vmem:[#allocation3 + $0x8] sm:$0x1] %vm1005, %v1001
      %1007 = vrot.lane.b32.xlu0 %v793, 120
      %v1008 = vpop.permute.xlu0 %1007
      %1009 = vrot.lane.b32.xlu0 %v796, 120
      %v1010 = vpop.permute.xlu0 %1009
      %1011 = vrot.lane.b32.xlu0 %v793, 88
      %v1012 = vpop.permute.xlu0 %1011
      %1013 = vrot.lane.b32.xlu0 %v796, 88
      %v1014 = vpop.permute.xlu0 %1013
      %v1015 = vsel %vm805, %v1008, 0
      %v1017 = vsel %vm805, %v1010, 0
      %v1019 = vsel %vm805, %v1012, 0
      %v1021 = vsel %vm805, %v1014, 0
      %1023 = vmatprep.subr.mxu0 0.0
      %1024 = vmatpush1.xpose.msra.mxu0 0.0
      %1025 = vmatprep.subr.mxu0 0.0
      %1026 = vmatpush1.xpose.msra.mxu0 0.0
      %1027 = vmatprep.subr.mxu0 0.0
      %1028 = vmatpush1.xpose.msra.mxu0 0.0
      %1029 = vmatprep.subr.mxu0 0.0
      %1030 = vmatpush1.xpose.msra.mxu0 0.0
      %1031 = vmatprep.subr.mxu0 0.0
      %1032 = vmatpush1.xpose.msra.mxu0 0.0
      %1033 = vmatprep.subr.mxu0 0.0
      %1034 = vmatpush1.xpose.msra.mxu0 0.0
      %1035 = vmatprep.subr.mxu0 0.0
      %1036 = vmatpush1.xpose.msra.mxu0 0.0
      %1037 = vmatprep.subr.mxu0 0.0
      %1038 = vmatpush1.xpose.msra.mxu0 0.0
      %1039 = vmatprep.subr.mxu0 0.0
      %1040 = vmatpush1.xpose.msra.mxu0 0.0
      %1041 = vmatprep.subr.mxu0 0.0
      %1042 = vmatpush1.xpose.msra.mxu0 0.0
      %1043 = vmatprep.subr.mxu0 0.0
      %1044 = vmatpush1.xpose.msra.mxu0 0.0
      %1045 = vmatprep.subr.mxu0 0.0
      %1046 = vmatpush1.xpose.msra.mxu0 0.0
      %1047 = vmatprep.subr.mxu0 0.0
      %1048 = vmatpush1.xpose.msra.mxu0 0.0
      %1049 = vmatprep.subr.mxu0 0.0
      %1050 = vmatpush1.xpose.msra.mxu0 0.0
      %1051 = vmatprep.subr.mxu0 0.0
      %1052 = vmatpush1.xpose.msra.mxu0 %v1021
      %1053 = vmatprep.subr.mxu0 0.0
      %1054 = vmatpush1.xpose.msra.mxu0 %v1019
      %1055 = vmatprep.subr.mxu0 0.0
      %1056 = vmatpush2.xpose.msra.mxu0 0.0
      %1057 = vmatprep.subr.mxu0 0.0
      %1058 = vmatpush2.xpose.msra.mxu0 0.0
      %1059 = vmatprep.subr.mxu0 0.0
      %1060 = vmatpush2.xpose.msra.mxu0 0.0
      %1061 = vmatprep.subr.mxu0 0.0
      %1062 = vmatpush2.xpose.msra.mxu0 0.0
      %1063 = vmatprep.subr.mxu0 0.0
      %1064 = vmatpush2.xpose.msra.mxu0 0.0
      %1065 = vmatprep.subr.mxu0 0.0
      %1066 = vmatpush2.xpose.msra.mxu0 0.0
      %1067 = vmatprep.subr.mxu0 0.0
      %1068 = vmatpush2.xpose.msra.mxu0 0.0
      %1069 = vmatprep.subr.mxu0 0.0
      %1070 = vmatpush2.xpose.msra.mxu0 0.0
      %1071 = vmatprep.subr.mxu0 0.0
      %1072 = vmatpush2.xpose.msra.mxu0 0.0
      %1073 = vmatprep.subr.mxu0 0.0
      %1074 = vmatpush2.xpose.msra.mxu0 0.0
      %1075 = vmatprep.subr.mxu0 0.0
      %1076 = vmatpush2.xpose.msra.mxu0 0.0
      %1077 = vmatprep.subr.mxu0 0.0
      %1078 = vmatpush2.xpose.msra.mxu0 0.0
      %1079 = vmatprep.subr.mxu0 0.0
      %1080 = vmatpush2.xpose.msra.mxu0 0.0
      %1081 = vmatprep.subr.mxu0 0.0
      %1082 = vmatpush2.xpose.msra.mxu0 0.0
      %1083 = vmatprep.subr.mxu0 0.0
      %1084 = vmatpush2.xpose.msra.mxu0 0.0
      %1085 = vmatprep.subr.mxu0 0.0
      %1086 = vmatpush2.xpose.msra.mxu0 0.0
      %1087 = vmatprep.mubr.f32.mxu0 0.0
      %1088 = vmatmul.mubr.f32.gmra.mxu0 %v1015
      %v1089 = vpop.f32.mrf.mxu0
      %v1090 = vadd.f32 0.0, %v1089
      %v1091 = vpop.f32.mrf.mxu0
      %1092 = vmatprep.mubr.f32.mxu0 0.0
      %1093 = vmatmul.mubr.f32.gmra.mxu0 %v1017
      %v1094 = vpop.f32.mrf.mxu0
      %v1095 = vadd.f32 0.0, %v1094
      %v1096 = vpop.f32.mrf.mxu0
      %1097 = vdwg.mxu0
      %v1098 = vmul.f32 %v1090, 0.35355338
      %v1099 = vmul.f32 %v1095, 0.35355338
      %v1100 = vsel %vm891, %v1098, -inf
      %1101 = vmax.xlane.f32.xlu0 %v1100
      %v1102 = vpop.xlane.xlu0 %1101
      %v1103 = vsel %vm895, %v1099, -inf
      %1104 = vmax.xlane.f32.xlu0 %v1103
      %v1105 = vpop.xlane.xlu0 %1104
      %v1106 = vsub.f32 %v1098, %v1102
      %v1107 = vsub.f32 %v1099, %v1105
      %v1108 = vmul.f32 %v1106, 1.442695
      %v1109 = vpow.pop %v1108
      %v1110 = vmul.f32 %v1107, 1.442695
      %v1111 = vpow.pop %v1110
      %v1112 = vsel %vm891, %v1109, 0.0
      %1113 = vadd.xlane.f32.xlu0 %v1112
      %v1114 = vpop.xlane.xlu0 %1113
      %v1115 = vsel %vm895, %v1111, 0.0
      %1116 = vadd.xlane.f32.xlu0 %v1115
      %v1117 = vpop.xlane.xlu0 %1116
      %v1118 = vrcp.pop %v1114
      %v1119 = vrcp.pop %v1117
      %v1120 = vmul.f32 %v1109, %v1118
      %v1121 = vmul.f32 %v1111, %v1119
      %1122 = vrot.lane.b32.xlu0 %v793, 56
      %v1123 = vpop.permute.xlu0 %1122
      %1124 = vrot.lane.b32.xlu0 %v796, 56
      %v1125 = vpop.permute.xlu0 %1124
      %v1128 = vsel %vm891, %v1120, 0
      %v1131 = vsel %vm891, %v1121, 0
      %v1133 = vsel %vm926, %v1125, 0
      %1135 = vmatprep.subr.mxu0 0.0
      %1136 = vmatpush1.msra.mxu0 0.0
      %1137 = vmatprep.subr.mxu0 0.0
      %1138 = vmatpush1.msra.mxu0 0.0
      %1139 = vmatprep.subr.mxu0 0.0
      %1140 = vmatpush1.msra.mxu0 0.0
      %1141 = vmatprep.subr.mxu0 0.0
      %1142 = vmatpush1.msra.mxu0 0.0
      %1143 = vmatprep.subr.mxu0 0.0
      %1144 = vmatpush1.msra.mxu0 0.0
      %1145 = vmatprep.subr.mxu0 0.0
      %1146 = vmatpush1.msra.mxu0 0.0
      %1147 = vmatprep.subr.mxu0 0.0
      %1148 = vmatpush1.msra.mxu0 0.0
      %1149 = vmatprep.subr.mxu0 0.0
      %1150 = vmatpush1.msra.mxu0 0.0
      %1151 = vmatprep.subr.mxu0 0.0
      %1152 = vmatpush1.msra.mxu0 0.0
      %1153 = vmatprep.subr.mxu0 0.0
      %1154 = vmatpush1.msra.mxu0 0.0
      %1155 = vmatprep.subr.mxu0 0.0
      %1156 = vmatpush1.msra.mxu0 0.0
      %1157 = vmatprep.subr.mxu0 0.0
      %1158 = vmatpush1.msra.mxu0 0.0
      %1159 = vmatprep.subr.mxu0 0.0
      %1160 = vmatpush1.msra.mxu0 0.0
      %1161 = vmatprep.subr.mxu0 0.0
      %1162 = vmatpush1.msra.mxu0 0.0
      %1163 = vmatprep.subr.mxu0 0.0
      %1164 = vmatpush1.msra.mxu0 %v1133
      %1165 = vmatprep.subr.mxu0 0.0
      %1166 = vmatpush1.msra.mxu0 %v1123
      %1167 = vmatprep.subr.mxu0 0.0
      %1168 = vmatpush2.msra.mxu0 0.0
      %1169 = vmatprep.subr.mxu0 0.0
      %1170 = vmatpush2.msra.mxu0 0.0
      %1171 = vmatprep.subr.mxu0 0.0
      %1172 = vmatpush2.msra.mxu0 0.0
      %1173 = vmatprep.subr.mxu0 0.0
      %1174 = vmatpush2.msra.mxu0 0.0
      %1175 = vmatprep.subr.mxu0 0.0
      %1176 = vmatpush2.msra.mxu0 0.0
      %1177 = vmatprep.subr.mxu0 0.0
      %1178 = vmatpush2.msra.mxu0 0.0
      %1179 = vmatprep.subr.mxu0 0.0
      %1180 = vmatpush2.msra.mxu0 0.0
      %1181 = vmatprep.subr.mxu0 0.0
      %1182 = vmatpush2.msra.mxu0 0.0
      %1183 = vmatprep.subr.mxu0 0.0
      %1184 = vmatpush2.msra.mxu0 0.0
      %1185 = vmatprep.subr.mxu0 0.0
      %1186 = vmatpush2.msra.mxu0 0.0
      %1187 = vmatprep.subr.mxu0 0.0
      %1188 = vmatpush2.msra.mxu0 0.0
      %1189 = vmatprep.subr.mxu0 0.0
      %1190 = vmatpush2.msra.mxu0 0.0
      %1191 = vmatprep.subr.mxu0 0.0
      %1192 = vmatpush2.msra.mxu0 0.0
      %1193 = vmatprep.subr.mxu0 0.0
      %1194 = vmatpush2.msra.mxu0 0.0
      %1195 = vmatprep.subr.mxu0 0.0
      %1196 = vmatpush2.msra.mxu0 0.0
      %1197 = vmatprep.subr.mxu0 0.0
      %1198 = vmatpush2.msra.mxu0 0.0
      %1199 = vmatprep.mubr.f32.mxu0 0.0
      %1200 = vmatmul.mubr.f32.gmra.mxu0 %v1128
      %v1201 = vpop.f32.mrf.mxu0
      %v1202 = vadd.f32 0.0, %v1201
      %v1203 = vpop.f32.mrf.mxu0
      %1204 = vmatprep.mubr.f32.mxu0 0.0
      %1205 = vmatmul.mubr.f32.gmra.mxu0 %v1131
      %v1206 = vpop.f32.mrf.mxu0
      %v1207 = vadd.f32 0.0, %v1206
      %v1208 = vpop.f32.mrf.mxu0
      %1209 = vdwg.mxu0
      %1212 = vrot.lane.b32.xlu0 %v1202, 8
      %v1213 = vpop.permute.xlu0 %1212
      %1214 = vrot.lane.b32.xlu0 %v1207, 8
      %v1215 = vpop.permute.xlu0 %1214
      %vm1218 = vcmask 130112
      %1219 = vst.msk [vmem:[#allocation3] sm:$0xff] %vm1218, %v1213
      %vm1220 = vcmask 122944
      %1221 = vst.msk [vmem:[#allocation3 + $0x8] sm:$0x1] %vm1220, %v1215
      %1222 = vrot.lane.b32.xlu0 %v793, 112
      %v1223 = vpop.permute.xlu0 %1222
      %1224 = vrot.lane.b32.xlu0 %v796, 112
      %v1225 = vpop.permute.xlu0 %1224
      %1226 = vrot.lane.b32.xlu0 %v793, 80
      %v1227 = vpop.permute.xlu0 %1226
      %1228 = vrot.lane.b32.xlu0 %v796, 80
      %v1229 = vpop.permute.xlu0 %1228
      %v1230 = vsel %vm805, %v1223, 0
      %v1232 = vsel %vm805, %v1225, 0
      %v1234 = vsel %vm805, %v1227, 0
      %v1236 = vsel %vm805, %v1229, 0
      %1238 = vmatprep.subr.mxu0 0.0
      %1239 = vmatpush1.xpose.msra.mxu0 0.0
      %1240 = vmatprep.subr.mxu0 0.0
      %1241 = vmatpush1.xpose.msra.mxu0 0.0
      %1242 = vmatprep.subr.mxu0 0.0
      %1243 = vmatpush1.xpose.msra.mxu0 0.0
      %1244 = vmatprep.subr.mxu0 0.0
      %1245 = vmatpush1.xpose.msra.mxu0 0.0
      %1246 = vmatprep.subr.mxu0 0.0
      %1247 = vmatpush1.xpose.msra.mxu0 0.0
      %1248 = vmatprep.subr.mxu0 0.0
      %1249 = vmatpush1.xpose.msra.mxu0 0.0
      %1250 = vmatprep.subr.mxu0 0.0
      %1251 = vmatpush1.xpose.msra.mxu0 0.0
      %1252 = vmatprep.subr.mxu0 0.0
      %1253 = vmatpush1.xpose.msra.mxu0 0.0
      %1254 = vmatprep.subr.mxu0 0.0
      %1255 = vmatpush1.xpose.msra.mxu0 0.0
      %1256 = vmatprep.subr.mxu0 0.0
      %1257 = vmatpush1.xpose.msra.mxu0 0.0
      %1258 = vmatprep.subr.mxu0 0.0
      %1259 = vmatpush1.xpose.msra.mxu0 0.0
      %1260 = vmatprep.subr.mxu0 0.0
      %1261 = vmatpush1.xpose.msra.mxu0 0.0
      %1262 = vmatprep.subr.mxu0 0.0
      %1263 = vmatpush1.xpose.msra.mxu0 0.0
      %1264 = vmatprep.subr.mxu0 0.0
      %1265 = vmatpush1.xpose.msra.mxu0 0.0
      %1266 = vmatprep.subr.mxu0 0.0
      %1267 = vmatpush1.xpose.msra.mxu0 %v1236
      %1268 = vmatprep.subr.mxu0 0.0
      %1269 = vmatpush1.xpose.msra.mxu0 %v1234
      %1270 = vmatprep.subr.mxu0 0.0
      %1271 = vmatpush2.xpose.msra.mxu0 0.0
      %1272 = vmatprep.subr.mxu0 0.0
      %1273 = vmatpush2.xpose.msra.mxu0 0.0
      %1274 = vmatprep.subr.mxu0 0.0
      %1275 = vmatpush2.xpose.msra.mxu0 0.0
      %1276 = vmatprep.subr.mxu0 0.0
      %1277 = vmatpush2.xpose.msra.mxu0 0.0
      %1278 = vmatprep.subr.mxu0 0.0
      %1279 = vmatpush2.xpose.msra.mxu0 0.0
      %1280 = vmatprep.subr.mxu0 0.0
      %1281 = vmatpush2.xpose.msra.mxu0 0.0
      %1282 = vmatprep.subr.mxu0 0.0
      %1283 = vmatpush2.xpose.msra.mxu0 0.0
      %1284 = vmatprep.subr.mxu0 0.0
      %1285 = vmatpush2.xpose.msra.mxu0 0.0
      %1286 = vmatprep.subr.mxu0 0.0
      %1287 = vmatpush2.xpose.msra.mxu0 0.0
      %1288 = vmatprep.subr.mxu0 0.0
      %1289 = vmatpush2.xpose.msra.mxu0 0.0
      %1290 = vmatprep.subr.mxu0 0.0
      %1291 = vmatpush2.xpose.msra.mxu0 0.0
      %1292 = vmatprep.subr.mxu0 0.0
      %1293 = vmatpush2.xpose.msra.mxu0 0.0
      %1294 = vmatprep.subr.mxu0 0.0
      %1295 = vmatpush2.xpose.msra.mxu0 0.0
      %1296 = vmatprep.subr.mxu0 0.0
      %1297 = vmatpush2.xpose.msra.mxu0 0.0
      %1298 = vmatprep.subr.mxu0 0.0
      %1299 = vmatpush2.xpose.msra.mxu0 0.0
      %1300 = vmatprep.subr.mxu0 0.0
      %1301 = vmatpush2.xpose.msra.mxu0 0.0
      %1302 = vmatprep.mubr.f32.mxu0 0.0
      %1303 = vmatmul.mubr.f32.gmra.mxu0 %v1230
      %v1304 = vpop.f32.mrf.mxu0
      %v1305 = vadd.f32 0.0, %v1304
      %v1306 = vpop.f32.mrf.mxu0
      %1307 = vmatprep.mubr.f32.mxu0 0.0
      %1308 = vmatmul.mubr.f32.gmra.mxu0 %v1232
      %v1309 = vpop.f32.mrf.mxu0
      %v1310 = vadd.f32 0.0, %v1309
      %v1311 = vpop.f32.mrf.mxu0
      %1312 = vdwg.mxu0
      %v1313 = vmul.f32 %v1305, 0.35355338
      %v1314 = vmul.f32 %v1310, 0.35355338
      %v1315 = vsel %vm891, %v1313, -inf
      %1316 = vmax.xlane.f32.xlu0 %v1315
      %v1317 = vpop.xlane.xlu0 %1316
      %v1318 = vsel %vm895, %v1314, -inf
      %1319 = vmax.xlane.f32.xlu0 %v1318
      %v1320 = vpop.xlane.xlu0 %1319
      %v1321 = vsub.f32 %v1313, %v1317
      %v1322 = vsub.f32 %v1314, %v1320
      %v1323 = vmul.f32 %v1321, 1.442695
      %v1324 = vpow.pop %v1323
      %v1325 = vmul.f32 %v1322, 1.442695
      %v1326 = vpow.pop %v1325
      %v1327 = vsel %vm891, %v1324, 0.0
      %1328 = vadd.xlane.f32.xlu0 %v1327
      %v1329 = vpop.xlane.xlu0 %1328
      %v1330 = vsel %vm895, %v1326, 0.0
      %1331 = vadd.xlane.f32.xlu0 %v1330
      %v1332 = vpop.xlane.xlu0 %1331
      %v1333 = vrcp.pop %v1329
      %v1334 = vrcp.pop %v1332
      %v1335 = vmul.f32 %v1324, %v1333
      %v1336 = vmul.f32 %v1326, %v1334
      %1337 = vrot.lane.b32.xlu0 %v793, 48
      %v1338 = vpop.permute.xlu0 %1337
      %1339 = vrot.lane.b32.xlu0 %v796, 48
      %v1340 = vpop.permute.xlu0 %1339
      %v1343 = vsel %vm891, %v1335, 0
      %v1346 = vsel %vm891, %v1336, 0
      %v1348 = vsel %vm926, %v1340, 0
      %1350 = vmatprep.subr.mxu0 0.0
      %1351 = vmatpush1.msra.mxu0 0.0
      %1352 = vmatprep.subr.mxu0 0.0
      %1353 = vmatpush1.msra.mxu0 0.0
      %1354 = vmatprep.subr.mxu0 0.0
      %1355 = vmatpush1.msra.mxu0 0.0
      %1356 = vmatprep.subr.mxu0 0.0
      %1357 = vmatpush1.msra.mxu0 0.0
      %1358 = vmatprep.subr.mxu0 0.0
      %1359 = vmatpush1.msra.mxu0 0.0
      %1360 = vmatprep.subr.mxu0 0.0
      %1361 = vmatpush1.msra.mxu0 0.0
      %1362 = vmatprep.subr.mxu0 0.0
      %1363 = vmatpush1.msra.mxu0 0.0
      %1364 = vmatprep.subr.mxu0 0.0
      %1365 = vmatpush1.msra.mxu0 0.0
      %1366 = vmatprep.subr.mxu0 0.0
      %1367 = vmatpush1.msra.mxu0 0.0
      %1368 = vmatprep.subr.mxu0 0.0
      %1369 = vmatpush1.msra.mxu0 0.0
      %1370 = vmatprep.subr.mxu0 0.0
      %1371 = vmatpush1.msra.mxu0 0.0
      %1372 = vmatprep.subr.mxu0 0.0
      %1373 = vmatpush1.msra.mxu0 0.0
      %1374 = vmatprep.subr.mxu0 0.0
      %1375 = vmatpush1.msra.mxu0 0.0
      %1376 = vmatprep.subr.mxu0 0.0
      %1377 = vmatpush1.msra.mxu0 0.0
      %1378 = vmatprep.subr.mxu0 0.0
      %1379 = vmatpush1.msra.mxu0 %v1348
      %1380 = vmatprep.subr.mxu0 0.0
      %1381 = vmatpush1.msra.mxu0 %v1338
      %1382 = vmatprep.subr.mxu0 0.0
      %1383 = vmatpush2.msra.mxu0 0.0
      %1384 = vmatprep.subr.mxu0 0.0
      %1385 = vmatpush2.msra.mxu0 0.0
      %1386 = vmatprep.subr.mxu0 0.0
      %1387 = vmatpush2.msra.mxu0 0.0
      %1388 = vmatprep.subr.mxu0 0.0
      %1389 = vmatpush2.msra.mxu0 0.0
      %1390 = vmatprep.subr.mxu0 0.0
      %1391 = vmatpush2.msra.mxu0 0.0
      %1392 = vmatprep.subr.mxu0 0.0
      %1393 = vmatpush2.msra.mxu0 0.0
      %1394 = vmatprep.subr.mxu0 0.0
      %1395 = vmatpush2.msra.mxu0 0.0
      %1396 = vmatprep.subr.mxu0 0.0
      %1397 = vmatpush2.msra.mxu0 0.0
      %1398 = vmatprep.subr.mxu0 0.0
      %1399 = vmatpush2.msra.mxu0 0.0
      %1400 = vmatprep.subr.mxu0 0.0
      %1401 = vmatpush2.msra.mxu0 0.0
      %1402 = vmatprep.subr.mxu0 0.0
      %1403 = vmatpush2.msra.mxu0 0.0
      %1404 = vmatprep.subr.mxu0 0.0
      %1405 = vmatpush2.msra.mxu0 0.0
      %1406 = vmatprep.subr.mxu0 0.0
      %1407 = vmatpush2.msra.mxu0 0.0
      %1408 = vmatprep.subr.mxu0 0.0
      %1409 = vmatpush2.msra.mxu0 0.0
      %1410 = vmatprep.subr.mxu0 0.0
      %1411 = vmatpush2.msra.mxu0 0.0
      %1412 = vmatprep.subr.mxu0 0.0
      %1413 = vmatpush2.msra.mxu0 0.0
      %1414 = vmatprep.mubr.f32.mxu0 0.0
      %1415 = vmatmul.mubr.f32.gmra.mxu0 %v1343
      %v1416 = vpop.f32.mrf.mxu0
      %v1417 = vadd.f32 0.0, %v1416
      %v1418 = vpop.f32.mrf.mxu0
      %1419 = vmatprep.mubr.f32.mxu0 0.0
      %1420 = vmatmul.mubr.f32.gmra.mxu0 %v1346
      %v1421 = vpop.f32.mrf.mxu0
      %v1422 = vadd.f32 0.0, %v1421
      %v1423 = vpop.f32.mrf.mxu0
      %1424 = vdwg.mxu0
      %1427 = vrot.lane.b32.xlu0 %v1417, 16
      %v1428 = vpop.permute.xlu0 %1427
      %1429 = vrot.lane.b32.xlu0 %v1422, 16
      %v1430 = vpop.permute.xlu0 %1429
      %vm1433 = vcmask 195712
      %1434 = vst.msk [vmem:[#allocation3] sm:$0xff] %vm1433, %v1428
      %vm1435 = vcmask 188544
      %1436 = vst.msk [vmem:[#allocation3 + $0x8] sm:$0x1] %vm1435, %v1430
      %1437 = vrot.lane.b32.xlu0 %v793, 104
      %v1438 = vpop.permute.xlu0 %1437
      %1439 = vrot.lane.b32.xlu0 %v796, 104
      %v1440 = vpop.permute.xlu0 %1439
      %1441 = vrot.lane.b32.xlu0 %v793, 72
      %v1442 = vpop.permute.xlu0 %1441
      %1443 = vrot.lane.b32.xlu0 %v796, 72
      %v1444 = vpop.permute.xlu0 %1443
      %v1445 = vsel %vm805, %v1438, 0
      %v1447 = vsel %vm805, %v1440, 0
      %v1449 = vsel %vm805, %v1442, 0
      %v1451 = vsel %vm805, %v1444, 0
      %1453 = vmatprep.subr.mxu0 0.0
      %1454 = vmatpush1.xpose.msra.mxu0 0.0
      %1455 = vmatprep.subr.mxu0 0.0
      %1456 = vmatpush1.xpose.msra.mxu0 0.0
      %1457 = vmatprep.subr.mxu0 0.0
      %1458 = vmatpush1.xpose.msra.mxu0 0.0
      %1459 = vmatprep.subr.mxu0 0.0
      %1460 = vmatpush1.xpose.msra.mxu0 0.0
      %1461 = vmatprep.subr.mxu0 0.0
      %1462 = vmatpush1.xpose.msra.mxu0 0.0
      %1463 = vmatprep.subr.mxu0 0.0
      %1464 = vmatpush1.xpose.msra.mxu0 0.0
      %1465 = vmatprep.subr.mxu0 0.0
      %1466 = vmatpush1.xpose.msra.mxu0 0.0
      %1467 = vmatprep.subr.mxu0 0.0
      %1468 = vmatpush1.xpose.msra.mxu0 0.0
      %1469 = vmatprep.subr.mxu0 0.0
      %1470 = vmatpush1.xpose.msra.mxu0 0.0
      %1471 = vmatprep.subr.mxu0 0.0
      %1472 = vmatpush1.xpose.msra.mxu0 0.0
      %1473 = vmatprep.subr.mxu0 0.0
      %1474 = vmatpush1.xpose.msra.mxu0 0.0
      %1475 = vmatprep.subr.mxu0 0.0
      %1476 = vmatpush1.xpose.msra.mxu0 0.0
      %1477 = vmatprep.subr.mxu0 0.0
      %1478 = vmatpush1.xpose.msra.mxu0 0.0
      %1479 = vmatprep.subr.mxu0 0.0
      %1480 = vmatpush1.xpose.msra.mxu0 0.0
      %1481 = vmatprep.subr.mxu0 0.0
      %1482 = vmatpush1.xpose.msra.mxu0 %v1451
      %1483 = vmatprep.subr.mxu0 0.0
      %1484 = vmatpush1.xpose.msra.mxu0 %v1449
      %1485 = vmatprep.subr.mxu0 0.0
      %1486 = vmatpush2.xpose.msra.mxu0 0.0
      %1487 = vmatprep.subr.mxu0 0.0
      %1488 = vmatpush2.xpose.msra.mxu0 0.0
      %1489 = vmatprep.subr.mxu0 0.0
      %1490 = vmatpush2.xpose.msra.mxu0 0.0
      %1491 = vmatprep.subr.mxu0 0.0
      %1492 = vmatpush2.xpose.msra.mxu0 0.0
      %1493 = vmatprep.subr.mxu0 0.0
      %1494 = vmatpush2.xpose.msra.mxu0 0.0
      %1495 = vmatprep.subr.mxu0 0.0
      %1496 = vmatpush2.xpose.msra.mxu0 0.0
      %1497 = vmatprep.subr.mxu0 0.0
      %1498 = vmatpush2.xpose.msra.mxu0 0.0
      %1499 = vmatprep.subr.mxu0 0.0
      %1500 = vmatpush2.xpose.msra.mxu0 0.0
      %1501 = vmatprep.subr.mxu0 0.0
      %1502 = vmatpush2.xpose.msra.mxu0 0.0
      %1503 = vmatprep.subr.mxu0 0.0
      %1504 = vmatpush2.xpose.msra.mxu0 0.0
      %1505 = vmatprep.subr.mxu0 0.0
      %1506 = vmatpush2.xpose.msra.mxu0 0.0
      %1507 = vmatprep.subr.mxu0 0.0
      %1508 = vmatpush2.xpose.msra.mxu0 0.0
      %1509 = vmatprep.subr.mxu0 0.0
      %1510 = vmatpush2.xpose.msra.mxu0 0.0
      %1511 = vmatprep.subr.mxu0 0.0
      %1512 = vmatpush2.xpose.msra.mxu0 0.0
      %1513 = vmatprep.subr.mxu0 0.0
      %1514 = vmatpush2.xpose.msra.mxu0 0.0
      %1515 = vmatprep.subr.mxu0 0.0
      %1516 = vmatpush2.xpose.msra.mxu0 0.0
      %1517 = vmatprep.mubr.f32.mxu0 0.0
      %1518 = vmatmul.mubr.f32.gmra.mxu0 %v1445
      %v1519 = vpop.f32.mrf.mxu0
      %v1520 = vadd.f32 0.0, %v1519
      %v1521 = vpop.f32.mrf.mxu0
      %1522 = vmatprep.mubr.f32.mxu0 0.0
      %1523 = vmatmul.mubr.f32.gmra.mxu0 %v1447
      %v1524 = vpop.f32.mrf.mxu0
      %v1525 = vadd.f32 0.0, %v1524
      %v1526 = vpop.f32.mrf.mxu0
      %1527 = vdwg.mxu0
      %v1528 = vmul.f32 %v1520, 0.35355338
      %v1529 = vmul.f32 %v1525, 0.35355338
      %v1530 = vsel %vm891, %v1528, -inf
      %1531 = vmax.xlane.f32.xlu0 %v1530
      %v1532 = vpop.xlane.xlu0 %1531
      %v1533 = vsel %vm895, %v1529, -inf
      %1534 = vmax.xlane.f32.xlu0 %v1533
      %v1535 = vpop.xlane.xlu0 %1534
      %v1536 = vsub.f32 %v1528, %v1532
      %v1537 = vsub.f32 %v1529, %v1535
      %v1538 = vmul.f32 %v1536, 1.442695
      %v1539 = vpow.pop %v1538
      %v1540 = vmul.f32 %v1537, 1.442695
      %v1541 = vpow.pop %v1540
      %v1542 = vsel %vm891, %v1539, 0.0
      %1543 = vadd.xlane.f32.xlu0 %v1542
      %v1544 = vpop.xlane.xlu0 %1543
      %v1545 = vsel %vm895, %v1541, 0.0
      %1546 = vadd.xlane.f32.xlu0 %v1545
      %v1547 = vpop.xlane.xlu0 %1546
      %v1548 = vrcp.pop %v1544
      %v1549 = vrcp.pop %v1547
      %v1550 = vmul.f32 %v1539, %v1548
      %v1551 = vmul.f32 %v1541, %v1549
      %1552 = vrot.lane.b32.xlu0 %v793, 40
      %v1553 = vpop.permute.xlu0 %1552
      %1554 = vrot.lane.b32.xlu0 %v796, 40
      %v1555 = vpop.permute.xlu0 %1554
      %v1558 = vsel %vm891, %v1550, 0
      %v1561 = vsel %vm891, %v1551, 0
      %v1563 = vsel %vm926, %v1555, 0
      %1565 = vmatprep.subr.mxu0 0.0
      %1566 = vmatpush1.msra.mxu0 0.0
      %1567 = vmatprep.subr.mxu0 0.0
      %1568 = vmatpush1.msra.mxu0 0.0
      %1569 = vmatprep.subr.mxu0 0.0
      %1570 = vmatpush1.msra.mxu0 0.0
      %1571 = vmatprep.subr.mxu0 0.0
      %1572 = vmatpush1.msra.mxu0 0.0
      %1573 = vmatprep.subr.mxu0 0.0
      %1574 = vmatpush1.msra.mxu0 0.0
      %1575 = vmatprep.subr.mxu0 0.0
      %1576 = vmatpush1.msra.mxu0 0.0
      %1577 = vmatprep.subr.mxu0 0.0
      %1578 = vmatpush1.msra.mxu0 0.0
      %1579 = vmatprep.subr.mxu0 0.0
      %1580 = vmatpush1.msra.mxu0 0.0
      %1581 = vmatprep.subr.mxu0 0.0
      %1582 = vmatpush1.msra.mxu0 0.0
      %1583 = vmatprep.subr.mxu0 0.0
      %1584 = vmatpush1.msra.mxu0 0.0
      %1585 = vmatprep.subr.mxu0 0.0
      %1586 = vmatpush1.msra.mxu0 0.0
      %1587 = vmatprep.subr.mxu0 0.0
      %1588 = vmatpush1.msra.mxu0 0.0
      %1589 = vmatprep.subr.mxu0 0.0
      %1590 = vmatpush1.msra.mxu0 0.0
      %1591 = vmatprep.subr.mxu0 0.0
      %1592 = vmatpush1.msra.mxu0 0.0
      %1593 = vmatprep.subr.mxu0 0.0
      %1594 = vmatpush1.msra.mxu0 %v1563
      %1595 = vmatprep.subr.mxu0 0.0
      %1596 = vmatpush1.msra.mxu0 %v1553
      %1597 = vmatprep.subr.mxu0 0.0
      %1598 = vmatpush2.msra.mxu0 0.0
      %1599 = vmatprep.subr.mxu0 0.0
      %1600 = vmatpush2.msra.mxu0 0.0
      %1601 = vmatprep.subr.mxu0 0.0
      %1602 = vmatpush2.msra.mxu0 0.0
      %1603 = vmatprep.subr.mxu0 0.0
      %1604 = vmatpush2.msra.mxu0 0.0
      %1605 = vmatprep.subr.mxu0 0.0
      %1606 = vmatpush2.msra.mxu0 0.0
      %1607 = vmatprep.subr.mxu0 0.0
      %1608 = vmatpush2.msra.mxu0 0.0
      %1609 = vmatprep.subr.mxu0 0.0
      %1610 = vmatpush2.msra.mxu0 0.0
      %1611 = vmatprep.subr.mxu0 0.0
      %1612 = vmatpush2.msra.mxu0 0.0
      %1613 = vmatprep.subr.mxu0 0.0
      %1614 = vmatpush2.msra.mxu0 0.0
      %1615 = vmatprep.subr.mxu0 0.0
      %1616 = vmatpush2.msra.mxu0 0.0
      %1617 = vmatprep.subr.mxu0 0.0
      %1618 = vmatpush2.msra.mxu0 0.0
      %1619 = vmatprep.subr.mxu0 0.0
      %1620 = vmatpush2.msra.mxu0 0.0
      %1621 = vmatprep.subr.mxu0 0.0
      %1622 = vmatpush2.msra.mxu0 0.0
      %1623 = vmatprep.subr.mxu0 0.0
      %1624 = vmatpush2.msra.mxu0 0.0
      %1625 = vmatprep.subr.mxu0 0.0
      %1626 = vmatpush2.msra.mxu0 0.0
      %1627 = vmatprep.subr.mxu0 0.0
      %1628 = vmatpush2.msra.mxu0 0.0
      %1629 = vmatprep.mubr.f32.mxu0 0.0
      %1630 = vmatmul.mubr.f32.gmra.mxu0 %v1558
      %v1631 = vpop.f32.mrf.mxu0
      %v1632 = vadd.f32 0.0, %v1631
      %v1633 = vpop.f32.mrf.mxu0
      %1634 = vmatprep.mubr.f32.mxu0 0.0
      %1635 = vmatmul.mubr.f32.gmra.mxu0 %v1561
      %v1636 = vpop.f32.mrf.mxu0
      %v1637 = vadd.f32 0.0, %v1636
      %v1638 = vpop.f32.mrf.mxu0
      %1639 = vdwg.mxu0
      %1642 = vrot.lane.b32.xlu0 %v1632, 24
      %v1643 = vpop.permute.xlu0 %1642
      %1644 = vrot.lane.b32.xlu0 %v1637, 24
      %v1645 = vpop.permute.xlu0 %1644
      %vm1648 = vcmask 261312
      %1649 = vst.msk [vmem:[#allocation3] sm:$0xff] %vm1648, %v1643
      %vm1650 = vcmask 254144
      %1651 = vst.msk [vmem:[#allocation3 + $0x8] sm:$0x1] %vm1650, %v1645
      %v1652 = vld [vmem:[#allocation3] sm:$0xff]
      %v1653 = vld [vmem:[#allocation3 + $0x8] sm:$0x1]
      %v1654 = vpack.c.bf16 %v1653, %v1652
      %v1655 = vld [vmem:[%s638] sm:$0xf]
      %v1656 = vld [vmem:[%s638 + $0x4] sm:$0xf]
      %v1657 = vld [vmem:[%s638 + $0x8] sm:$0xf]
      %v1658 = vld [vmem:[%s638 + $0xc] sm:$0xf]
      %v1663 = vunpack.c.l.b16 %v1655
      %v1664 = vunpack.c.l.b16 %v1656
      %v1665 = vunpack.c.l.b16 %v1657
      %v1666 = vunpack.c.l.b16 %v1658
      %v1667 = vpack.c.b16 %v1664, %v1663
      %v1668 = vpack.c.b16 %v1666, %v1665
      %v1672 = vsel %vm693, %v1654, 0
      %1674 = vmatprep.subr.bf16.mxu0 0
      %1675 = vmatpush1.bf16.msra.mxu0 0
      %1676 = vmatprep.subr.bf16.mxu0 0
      %1677 = vmatpush1.bf16.msra.mxu0 0
      %1678 = vmatprep.subr.bf16.mxu0 0
      %1679 = vmatpush1.bf16.msra.mxu0 0
      %1680 = vmatprep.subr.bf16.mxu0 0
      %1681 = vmatpush1.bf16.msra.mxu0 0
      %1682 = vmatprep.subr.bf16.mxu0 0
      %1683 = vmatpush1.bf16.msra.mxu0 0
      %1684 = vmatprep.subr.bf16.mxu0 0
      %1685 = vmatpush1.bf16.msra.mxu0 0
      %1686 = vmatprep.subr.bf16.mxu0 0
      %1687 = vmatpush1.bf16.msra.mxu0 %v1668
      %1688 = vmatprep.subr.bf16.mxu0 0
      %1689 = vmatpush1.bf16.msra.mxu0 %v1667
      %1690 = vmatprep.subr.bf16.mxu0 0
      %1691 = vmatpush2.bf16.msra.mxu0 0
      %1692 = vmatprep.subr.bf16.mxu0 0
      %1693 = vmatpush2.bf16.msra.mxu0 0
      %1694 = vmatprep.subr.bf16.mxu0 0
      %1695 = vmatpush2.bf16.msra.mxu0 0
      %1696 = vmatprep.subr.bf16.mxu0 0
      %1697 = vmatpush2.bf16.msra.mxu0 0
      %1698 = vmatprep.subr.bf16.mxu0 0
      %1699 = vmatpush2.bf16.msra.mxu0 0
      %1700 = vmatprep.subr.bf16.mxu0 0
      %1701 = vmatpush2.bf16.msra.mxu0 0
      %1702 = vmatprep.subr.bf16.mxu0 0
      %1703 = vmatpush2.bf16.msra.mxu0 0
      %1704 = vmatprep.subr.bf16.mxu0 0
      %1705 = vmatpush2.bf16.msra.mxu0 0
      %1706 = vmatprep.mubr.bf16.mxu0 0
      %1707 = vmatmul.mubr.bf16.gmra.mxu0 %v1672
      %v1708 = vpop.f32.mrf.mxu0
      %v1709 = vadd.f32 0.0, %v1708
      %v1710 = vpop.f32.mrf.mxu0
      %v1711 = vpop.f32.mrf.mxu0
      %v1712 = vadd.f32 0.0, %v1711
      %v1713 = vpop.f32.mrf.mxu0
      %1714 = vdwg.mxu0
      %v1715 = vadd.f32 %v689, %v1709
      %v1716 = vadd.f32 %v690, %v1712
      %v1717 = vld [vmem:[%s641] sm:$0x1]
      %v1719 = vlaneseq
      %v1720 = vshrl.u32 %v1719, 7
      %v1721 = vsub.s32 0, %v1720
      %v1722 = vrot.slane %v1717, %v1721
      %v1724 = vadd.f32 %v1715, %v1722
      %v1725 = vadd.f32 %v1716, %v1722
      %v1726 = vld [vmem:[%s644] sm:$0x1]
      %v1727 = vld [vmem:[%s647] sm:$0x1]
      %v1728 = vsel %vm693, %v1724, 0.0
      %1729 = vadd.xlane.f32.xlu0 %v1728
      %v1730 = vpop.xlane.xlu0 %1729
      %v1731 = vsel %vm697, %v1725, 0.0
      %1732 = vadd.xlane.f32.xlu0 %v1731
      %v1733 = vpop.xlane.xlu0 %1732
      %v1734 = vmul.f32 %v1730, %v701
      %v1735 = vmul.f32 %v1733, %v701
      %v1736 = vsub.f32 %v1724, %v1734
      %v1737 = vsub.f32 %v1725, %v1735
      %v1738 = vmul.f32 %v1736, %v1736
      %v1739 = vmul.f32 %v1737, %v1737
      %v1740 = vsel %vm693, %v1738, 0.0
      %1741 = vadd.xlane.f32.xlu0 %v1740
      %v1742 = vpop.xlane.xlu0 %1741
      %v1743 = vsel %vm697, %v1739, 0.0
      %1744 = vadd.xlane.f32.xlu0 %v1743
      %v1745 = vpop.xlane.xlu0 %1744
      %v1746 = vmul.f32 %v1742, %v701
      %v1747 = vmul.f32 %v1745, %v701
      %v1748 = vadd.f32 %v1746, 1e-05
      %v1749 = vadd.f32 %v1747, 1e-05
      %v1750 = vrsqrt.pop %v1748
      %v1751 = vrsqrt.pop %v1749
      %v1752 = vmul.f32 %v1736, %v1750
      %v1753 = vmul.f32 %v1737, %v1751
      %v1755 = vlaneseq
      %v1756 = vshrl.u32 %v1755, 7
      %v1757 = vsub.s32 0, %v1756
      %v1758 = vrot.slane %v1726, %v1757
      %v1760 = vmul.f32 %v1752, %v1758
      %v1761 = vmul.f32 %v1753, %v1758
      %v1763 = vlaneseq
      %v1764 = vshrl.u32 %v1763, 7
      %v1765 = vsub.s32 0, %v1764
      %v1766 = vrot.slane %v1727, %v1765
      %v1768 = vadd.f32 %v1760, %v1766
      %v1769 = vadd.f32 %v1761, %v1766
      %v1770 = vpack.c.bf16 %v1769, %v1768
      %v1771 = vld [vmem:[%s652] sm:$0xf]
      %v1772 = vld [vmem:[%s652 + $0x4] sm:$0xf]
      %v1773 = vld [vmem:[%s652 + $0x8] sm:$0xf]
      %v1774 = vld [vmem:[%s652 + $0xc] sm:$0xf]
      %v1775 = vld [vmem:[%s655] sm:$0x1]
      %v1777 = vlaneseq
      %v1778 = vshrl.u32 %v1777, 7
      %v1779 = vsub.s32 0, %v1778
      %v1780 = vrot.slane %v1775, %v1779
      %v1786 = vunpack.c.l.b16 %v1771
      %v1787 = vunpack.c.l.b16 %v1772
      %v1788 = vunpack.c.l.b16 %v1773
      %v1789 = vunpack.c.l.b16 %v1774
      %v1790 = vpack.c.b16 %v1787, %v1786
      %v1791 = vpack.c.b16 %v1789, %v1788
      %v1795 = vsel %vm693, %v1770, 0
      %1797 = vmatprep.subr.bf16.mxu0 0
      %1798 = vmatpush1.bf16.msra.mxu0 0
      %1799 = vmatprep.subr.bf16.mxu0 0
      %1800 = vmatpush1.bf16.msra.mxu0 0
      %1801 = vmatprep.subr.bf16.mxu0 0
      %1802 = vmatpush1.bf16.msra.mxu0 0
      %1803 = vmatprep.subr.bf16.mxu0 0
      %1804 = vmatpush1.bf16.msra.mxu0 0
      %1805 = vmatprep.subr.bf16.mxu0 0
      %1806 = vmatpush1.bf16.msra.mxu0 0
      %1807 = vmatprep.subr.bf16.mxu0 0
      %1808 = vmatpush1.bf16.msra.mxu0 0
      %1809 = vmatprep.subr.bf16.mxu0 0
      %1810 = vmatpush1.bf16.msra.mxu0 %v1791
      %1811 = vmatprep.subr.bf16.mxu0 0
      %1812 = vmatpush1.bf16.msra.mxu0 %v1790
      %1813 = vmatprep.subr.bf16.mxu0 0
      %1814 = vmatpush2.bf16.msra.mxu0 0
      %1815 = vmatprep.subr.bf16.mxu0 0
      %1816 = vmatpush2.bf16.msra.mxu0 0
      %1817 = vmatprep.subr.bf16.mxu0 0
      %1818 = vmatpush2.bf16.msra.mxu0 0
      %1819 = vmatprep.subr.bf16.mxu0 0
      %1820 = vmatpush2.bf16.msra.mxu0 0
      %1821 = vmatprep.subr.bf16.mxu0 0
      %1822 = vmatpush2.bf16.msra.mxu0 0
      %1823 = vmatprep.subr.bf16.mxu0 0
      %1824 = vmatpush2.bf16.msra.mxu0 0
      %1825 = vmatprep.subr.bf16.mxu0 0
      %1826 = vmatpush2.bf16.msra.mxu0 0
      %1827 = vmatprep.subr.bf16.mxu0 0
      %1828 = vmatpush2.bf16.msra.mxu0 0
      %1829 = vmatprep.mubr.bf16.mxu0 0
      %1830 = vmatmul.mubr.bf16.gmra.mxu0 %v1795
      %v1831 = vpop.f32.mrf.mxu0
      %v1832 = vadd.f32 %v1780, %v1831
      %v1833 = vpop.f32.mrf.mxu0
      %v1834 = vpop.f32.mrf.mxu0
      %v1835 = vadd.f32 %v1780, %v1834
      %v1836 = vpop.f32.mrf.mxu0
      %1837 = vdwg.mxu0
      %v1838 = vmul.f32 %v1832, 0.5
      %v1839 = vmul.f32 %v1835, 0.5
      %v1840 = vmul.f32 %v1832, 0.70710677
      %v1841 = vmul.f32 %v1835, 0.70710677
      %v1842 = verf.f32.pop %v1840
      %v1843 = verf.f32.pop %v1841
      %v1844 = vadd.f32 %v1842, 1.0
      %v1845 = vadd.f32 %v1843, 1.0
      %v1846 = vmul.f32 %v1838, %v1844
      %v1847 = vmul.f32 %v1839, %v1845
      %v1848 = vpack.c.bf16 %v1847, %v1846
      %v1849 = vld [vmem:[%s660] sm:$0xf]
      %v1850 = vld [vmem:[%s660 + $0x4] sm:$0xf]
      %v1851 = vld [vmem:[%s660 + $0x8] sm:$0xf]
      %v1852 = vld [vmem:[%s660 + $0xc] sm:$0xf]
      %v1853 = vld [vmem:[%s660 + $0x10] sm:$0xf]
      %v1854 = vld [vmem:[%s660 + $0x14] sm:$0xf]
      %v1855 = vld [vmem:[%s660 + $0x18] sm:$0xf]
      %v1856 = vld [vmem:[%s660 + $0x1c] sm:$0xf]
      %v1857 = vld [vmem:[%s663] sm:$0x1]
      %v1859 = vlaneseq
      %v1860 = vshrl.u32 %v1859, 7
      %v1861 = vsub.s32 0, %v1860
      %v1862 = vrot.slane %v1857, %v1861
      %v1872 = vunpack.c.l.b16 %v1849
      %v1873 = vunpack.c.l.b16 %v1850
      %v1874 = vunpack.c.l.b16 %v1851
      %v1875 = vunpack.c.l.b16 %v1852
      %v1876 = vunpack.c.l.b16 %v1853
      %v1877 = vunpack.c.l.b16 %v1854
      %v1878 = vunpack.c.l.b16 %v1855
      %v1879 = vunpack.c.l.b16 %v1856
      %v1880 = vpack.c.b16 %v1873, %v1872
      %v1881 = vpack.c.b16 %v1875, %v1874
      %v1882 = vpack.c.b16 %v1877, %v1876
      %v1883 = vpack.c.b16 %v1879, %v1878
      %vm1888 = vcmask 523264
      %v1890 = vsel %vm1888, %v1848, 0
      %1892 = vmatprep.subr.bf16.mxu0 0
      %1893 = vmatpush1.bf16.msra.mxu0 0
      %1894 = vmatprep.subr.bf16.mxu0 0
      %1895 = vmatpush1.bf16.msra.mxu0 0
      %1896 = vmatprep.subr.bf16.mxu0 0
      %1897 = vmatpush1.bf16.msra.mxu0 0
      %1898 = vmatprep.subr.bf16.mxu0 0
      %1899 = vmatpush1.bf16.msra.mxu0 0
      %1900 = vmatprep.subr.bf16.mxu0 0
      %1901 = vmatpush1.bf16.msra.mxu0 %v1883
      %1902 = vmatprep.subr.bf16.mxu0 0
      %1903 = vmatpush1.bf16.msra.mxu0 %v1882
      %1904 = vmatprep.subr.bf16.mxu0 0
      %1905 = vmatpush1.bf16.msra.mxu0 %v1881
      %1906 = vmatprep.subr.bf16.mxu0 0
      %1907 = vmatpush1.bf16.msra.mxu0 %v1880
      %1908 = vmatprep.subr.bf16.mxu0 0
      %1909 = vmatpush2.bf16.msra.mxu0 0
      %1910 = vmatprep.subr.bf16.mxu0 0
      %1911 = vmatpush2.bf16.msra.mxu0 0
      %1912 = vmatprep.subr.bf16.mxu0 0
      %1913 = vmatpush2.bf16.msra.mxu0 0
      %1914 = vmatprep.subr.bf16.mxu0 0
      %1915 = vmatpush2.bf16.msra.mxu0 0
      %1916 = vmatprep.subr.bf16.mxu0 0
      %1917 = vmatpush2.bf16.msra.mxu0 0
      %1918 = vmatprep.subr.bf16.mxu0 0
      %1919 = vmatpush2.bf16.msra.mxu0 0
      %1920 = vmatprep.subr.bf16.mxu0 0
      %1921 = vmatpush2.bf16.msra.mxu0 0
      %1922 = vmatprep.subr.bf16.mxu0 0
      %1923 = vmatpush2.bf16.msra.mxu0 0
      %1924 = vmatprep.mubr.bf16.mxu0 0
      %1925 = vmatmul.mubr.bf16.gmra.mxu0 %v1890
      %v1926 = vpop.f32.mrf.mxu0
      %v1927 = vadd.f32 %v1862, %v1926
      %v1928 = vpop.f32.mrf.mxu0
      %v1929 = vpop.f32.mrf.mxu0
      %v1930 = vadd.f32 %v1862, %v1929
      %v1931 = vpop.f32.mrf.mxu0
      %1932 = vdwg.mxu0
      %v1933 = vadd.f32 %v1724, %v1927
      %v1934 = vadd.f32 %v1725, %v1930
      %1935 = vst.msk [vmem:[%s688] sm:$0xff] %vm693, %v1933
      %1936 = vst.msk [vmem:[%s688 + $0x8] sm:$0x1] %vm697, %v1934
      %1937 = vst.msk [vmem:[%s672] sm:$0xff] %vm693, %v1933
      %1938 = vst.msk [vmem:[%s672 + $0x8] sm:$0x1] %vm697, %v1934
      %p1939 = scmp.eq.s32.totalorder %s31, 1
      // Predicated region
      $region81: #{vit_forward.3} parent=75 // pred_check
        %p1940 = pneg %p1939
      $region82: #{vit_forward.3} parent=75 // pred_check_branch
        %1942 = sbr.rel (%p1940) target = $region84
      $region83: #{vit_forward.3} parent=75 // pred_region
        %v1943 = vld [vmem:[%s12] sm:$0x1]
        %v1944 = vld [vmem:[%s13] sm:$0x1]
        %v1945 = vsel %vm693, %v1933, 0.0
        %1946 = vadd.xlane.f32.xlu0 %v1945
        %v1947 = vpop.xlane.xlu0 %1946
        %v1948 = vsel %vm697, %v1934, 0.0
        %1949 = vadd.xlane.f32.xlu0 %v1948
        %v1950 = vpop.xlane.xlu0 %1949
        %v1951 = vmul.f32 %v1947, %v701
        %v1952 = vmul.f32 %v1950, %v701
        %v1953 = vsub.f32 %v1933, %v1951
        %v1954 = vsub.f32 %v1934, %v1952
        %v1955 = vmul.f32 %v1953, %v1953
        %v1956 = vmul.f32 %v1954, %v1954
        %v1957 = vsel %vm693, %v1955, 0.0
        %1958 = vadd.xlane.f32.xlu0 %v1957
        %v1959 = vpop.xlane.xlu0 %1958
        %v1960 = vsel %vm697, %v1956, 0.0
        %1961 = vadd.xlane.f32.xlu0 %v1960
        %v1962 = vpop.xlane.xlu0 %1961
        %v1963 = vmul.f32 %v1959, %v701
        %v1964 = vmul.f32 %v1962, %v701
        %v1965 = vadd.f32 %v1963, 1e-05
        %v1966 = vadd.f32 %v1964, 1e-05
        %v1967 = vrsqrt.pop %v1965
        %v1968 = vrsqrt.pop %v1966
        %v1969 = vmul.f32 %v1953, %v1967
        %v1970 = vmul.f32 %v1954, %v1968
        %v1972 = vlaneseq
        %v1973 = vshrl.u32 %v1972, 7
        %v1974 = vsub.s32 0, %v1973
        %v1975 = vrot.slane %v1943, %v1974
        %v1977 = vmul.f32 %v1969, %v1975
        %v1978 = vmul.f32 %v1970, %v1975
        %v1980 = vlaneseq
        %v1981 = vshrl.u32 %v1980, 7
        %v1982 = vsub.s32 0, %v1981
        %v1983 = vrot.slane %v1944, %v1982
        %v1985 = vadd.f32 %v1977, %v1983
        %v1986 = vadd.f32 %v1978, %v1983
        %s1987 = scalar_lea.vmem %s14, %s687
        %1988 = vst.msk [vmem:[%s1987] sm:$0xff] %vm693, %v1985
        %1989 = vst.msk [vmem:[%s1987 + $0x8] sm:$0x1] %vm697, %v1986
      $region84: #{vit_forward.3} parent=75 // pred_fallthru
        _
      %p1990 = scmp.lt.s32.totalorder %s31, 1
      %s1991 = scalar_select %p1990, %s31, 1
      %p1992 = scmp.lt.s32.totalorder %s32, 1
      %s1993 = scalar_select %p1992, %s32, 1
      %s1994 = smul.addr %s1993, 2
      %s1995 = smul.addr %s1991, 4
      %s1996 = sadd.s32 %s1994, %s1995
      %s1997 = smul.addr %s1996, 8
      %s1998 = scalar_lea.vmem %s15, %s1997
      // Predicated region
      $region85: #{vit_forward.3} parent=75 // pred_check
        %p1999 = pneg %p401
      $region86: #{vit_forward.3} parent=75 // pred_check_branch
        %2001 = sbr.rel (%p1999) target = $region88
      $region87: #{vit_forward.3} parent=75 // pred_region
        _
      $region88: #{vit_forward.3} parent=75 // pred_fallthru
        _
      // Predicated region
      $region89: #{vit_forward.3} parent=75 // pred_check
        %p2002 = pneg %p429
      $region90: #{vit_forward.3} parent=75 // pred_check_branch
        %2004 = sbr.rel (%p2002) target = $region92
      $region91: #{vit_forward.3} parent=75 // pred_region
        _
      $region92: #{vit_forward.3} parent=75 // pred_fallthru
        _
      // Predicated region
      $region93: #{vit_forward.3} parent=75 // pred_check
        %p2005 = pneg %p401
      $region94: #{vit_forward.3} parent=75 // pred_check_branch
        %2007 = sbr.rel (%p2005) target = $region96
      $region95: #{vit_forward.3} parent=75 // pred_region
        _
      $region96: #{vit_forward.3} parent=75 // pred_fallthru
        _
    $region76: #{vit_forward.3} parent=5 // pred_fallthru
      _
    %p2008 = scmp.le.s32.totalorder 2, %s22
    // Predicated region
    $region97: #{vit_forward.3} parent=5 // pred_check
      %p2009 = pneg %p2008
    $region98: #{vit_forward.3} parent=5 // pred_check_branch
      %2011 = sbr.rel (%p2009) target = $region100
    $region99: #{vit_forward.3} parent=5 // pred_region
      %s2012 = ssub.s32 %s22, 2
      // Predicated region
      $region101: #{vit_forward.3} parent=99 // pred_check
        %p2013 = pneg %p435
      $region102: #{vit_forward.3} parent=99 // pred_check_branch
        %2015 = sbr.rel (%p2013) target = $region104
      $region103: #{vit_forward.3} parent=99 // pred_region
        %p2016 = scmp.lt.s32.totalorder %s33, 1
        %s2017 = scalar_select %p2016, %s33, 1
        %p2018 = scmp.lt.s32.totalorder %s34, 1
        %s2019 = scalar_select %p2018, %s34, 1
        %s2020 = smul.addr %s2019, 2
        %s2021 = smul.addr %s2017, 4
        %s2022 = sadd.s32 %s2020, %s2021
        %s2023 = smul.addr %s2022, 8
        %s2024 = scalar_lea.vmem %s15, %s2023
      $region104: #{vit_forward.3} parent=99 // pred_fallthru
        _
    $region100: #{vit_forward.3} parent=5 // pred_fallthru
      _
  $region6: #{vit_forward.3} parent=0 // loop_footer
    %s26 = sadd.s32 1, %s22
  $region7: #{vit_forward.3} parent=0 // loop_footer_branch
    %21 = sbr.rel target = $region3
  $region8: #{vit_forward.3} parent=0 // loop_exit
    _

</llo_original>
